<compile_context>
chip_gen: v7x
topology: tpu7x:2x2x1
jax: 0.10.0
libtpu: 0.0.40
codegen_flags: <defaults>
</compile_context>

<pallas_src>
import functools

import jax
import jax.numpy as jnp
import numpy as np
from jax.experimental import pallas as pl
from jax.experimental.pallas import tpu as pltpu


def _round_up(v, m):
    return (v + m - 1) // m * m


def _build_masks(N, H, W):
    """mult: (25, N*H*W) 0/1 conv-window masks for shifts dh,dw in [-2,2].
       add : (4,  N*H*W) 0/-1e30 maxpool masks for dw=-1, dw=+1, dh=-1, dh=+1."""
    hh = np.arange(H)[:, None]
    ww = np.arange(W)[None, :]

    def valid(dh, dw):
        v = ((hh + dh >= 0) & (hh + dh < H) &
             (ww + dw >= 0) & (ww + dw < W))
        return np.tile(v.reshape(-1), N)                      # tiled per image

    mult = np.stack([valid(dh, dw).astype(np.float32)
                     for dh in range(-2, 3) for dw in range(-2, 3)], axis=0)

    NEG = np.float32(-1e30)                                   # finite (no -inf)
    add = np.stack([np.where(valid(dh, dw), np.float32(0.0), NEG)
                    for (dh, dw) in ((0, -1), (0, 1), (-1, 0), (1, 0))],
                   axis=0).astype(np.float32)
    return jnp.asarray(mult), jnp.asarray(add)


def _inception_kernel(dims,
                      x_ref, mmask_ref, amask_ref,
                      wf_ref, bf_ref,
                      w2_ref, b2_ref,
                      w3_ref, b3_ref,
                      w4_ref, b4_ref,
                      out_ref):
    (W, NHW, c1p, c2ap, c3ap, c2bp, c3bp, c4p) = dims
    bf16 = jnp.bfloat16

    xf = x_ref[...]                                          # (Cin, N*HW), f32

    def shifted(a, dh, dw):
        """a spatially shifted by (dh, dw): out[p] = a[p + dh*W + dw] (cyclic)."""
        s = (-(dh * W + dw)) % NHW
        return a if s == 0 else pltpu.roll(a, s, axis=1)

    def conv_shift_accum(h, w_ref, r):
        """sum_k  W_k @ (mask_k * shift_k(h)) — per-shift MXU accumulation,
        no im2col concatenate, no big VMEM intermediates."""
        acc = None
        k = 0
        for dh in range(-r, r + 1):
            for dw in range(-r, r + 1):
                midx = (dh + 2) * 5 + (dw + 2)
                m = mmask_ref[midx:midx + 1, :]              # (1, NHW) 0/1
                win = (shifted(h, dh, dw) * m).astype(bf16)  # zero padding
                t = jnp.dot(w_ref[k], win,
                            preferred_element_type=jnp.float32)
                acc = t if acc is None else acc + t
                k += 1
        return acc

    # ---- fused 1x1 convs (branch 1 + reduce convs of branches 2/3): one MXU matmul
    xb = xf.astype(bf16)
    hf = jnp.maximum(
        jnp.dot(wf_ref[...], xb, preferred_element_type=jnp.float32)
        + bf_ref[...], 0.0)                                  # (c1p+c2ap+c3ap, NHW)
    y1 = hf[0:c1p, :]                                        # 8-aligned slices
    h2 = hf[c1p:c1p + c2ap, :]
    h3 = hf[c1p + c2ap:c1p + c2ap + c3ap, :]

    # ---- branch 2: 3x3 conv (pad=1), per-shift accumulation
    y2 = jnp.maximum(conv_shift_accum(h2, w2_ref, 1) + b2_ref[...], 0.0)

    # ---- branch 3: 5x5 conv (pad=2), per-shift accumulation
    y3 = jnp.maximum(conv_shift_accum(h3, w3_ref, 2) + b3_ref[...], 0.0)

    # ---- branch 4: separable 3x3 maxpool (stride 1, pad 1) + 1x1 conv
    am = amask_ref[...]                                      # (4, NHW), 0 / -1e30
    row = jnp.maximum(xf, shifted(xf, 0, -1) + am[0:1, :])   # horizontal pass
    row = jnp.maximum(row, shifted(xf, 0, 1) + am[1:2, :])
    mx = jnp.maximum(row, shifted(row, -1, 0) + am[2:3, :])  # vertical pass
    mx = jnp.maximum(mx, shifted(row, 1, 0) + am[3:4, :])
    y4 = jnp.maximum(
        jnp.dot(w4_ref[...], mx.astype(bf16),
                preferred_element_type=jnp.float32)
        + b4_ref[...], 0.0)

    # ---- channel concat: every offset/extent is a multiple of 8 -> unmasked
    #      lane-dense stores straight into the output block (no extra copy).
    dt = out_ref.dtype
    out_ref[0:c1p, :] = y1.astype(dt)
    out_ref[c1p:c1p + c2bp, :] = y2.astype(dt)
    out_ref[c1p + c2bp:c1p + c2bp + c3bp, :] = y3.astype(dt)
    out_ref[c1p + c2bp + c3bp:c1p + c2bp + c3bp + c4p, :] = y4.astype(dt)


def inception_forward(x_nchw, params, c1, c2, c3, c4):
    """x_nchw: (N, Cin, H, W); params in PyTorch OIHW layout."""
    (w1, b1, w2a, b2a, w2b, b2b, w3a, b3a, w3b, b3b, w4, b4) = params
    N, Cin, H, W = x_nchw.shape
    NHW = N * H * W
    c2a, c2b = c2
    c3a, c3b = c3
    f32, bf16 = jnp.float32, jnp.bfloat16

    # Pad every channel segment to a multiple of 8 (f32 sublane) so all
    # in-kernel slices / stores are sublane-aligned.
    c1p, c2ap, c3ap = (_round_up(v, 8) for v in (c1, c2a, c3a))
    c2bp, c3bp, c4p = (_round_up(v, 8) for v in (c2b, c3b, c4))
    Coutp = c1p + c2bp + c3bp + c4p

    def pad_rows(a, rows):
        return jnp.pad(a, ((0, rows - a.shape[0]),) + ((0, 0),) * (a.ndim - 1))

    # Fused 1x1 weights (bf16 matmul LHS), biases stay f32 (added post-dot).
    wf = jnp.concatenate([pad_rows(w1.reshape(c1, Cin), c1p),
                          pad_rows(w2a.reshape(c2a, Cin), c2ap),
                          pad_rows(w3a.reshape(c3a, Cin), c3ap)],
                         axis=0).astype(bf16)
    bf = jnp.concatenate([pad_rows(b1.reshape(c1, 1), c1p),
                          pad_rows(b2a.reshape(c2a, 1), c2ap),
                          pad_rows(b3a.reshape(c3a, 1), c3ap)],
                         axis=0).astype(f32)

    # Per-shift conv weights: OIHW -> (K*K, Cout_p, Cin_p), (kh, kw)-major.
    def per_shift(w, coutp, cinp):
        co, ci, kh, kw = w.shape
        w = jnp.transpose(w, (2, 3, 0, 1)).reshape(kh * kw, co, ci)
        return jnp.pad(w, ((0, 0), (0, coutp - co), (0, cinp - ci))).astype(bf16)

    w2m = per_shift(w2b, c2bp, c2ap)                       # (9,  c2bp, c2ap)
    w3m = per_shift(w3b, c3bp, c3ap)                       # (25, c3bp, c3ap)
    w4m = pad_rows(w4.reshape(c4, Cin), c4p).astype(bf16)  # (c4p, Cin)
    b2m = pad_rows(b2b.reshape(c2b, 1), c2bp).astype(f32)
    b3m = pad_rows(b3b.reshape(c3b, 1), c3bp).astype(f32)
    b4m = pad_rows(b4.reshape(c4, 1), c4p).astype(f32)

    mmask, amask = _build_masks(N, H, W)

    # Fold the batch into the lane axis: (N,Cin,H,W) -> (Cin, N*H*W).
    xf = jnp.transpose(x_nchw, (1, 0, 2, 3)).reshape(Cin, NHW).astype(f32)

    args = (xf, mmask, amask, wf, bf, w2m, b2m, w3m, b3m, w4m, b4m)
    dims = (W, NHW, c1p, c2ap, c3ap, c2bp, c3bp, c4p)
    kernel = functools.partial(_inception_kernel, dims)

    def fullspec(a):
        nd = a.ndim
        return pl.BlockSpec(a.shape, lambda i, _nd=nd: (0,) * _nd)

    out = pl.pallas_call(
        kernel,
        out_shape=jax.ShapeDtypeStruct((Coutp, NHW), f32),
        grid_spec=pltpu.PrefetchScalarGridSpec(
            num_scalar_prefetch=0,
            grid=(1,),                                     # single fat step at toy sizes
            in_specs=[fullspec(a) for a in args],
            out_specs=pl.BlockSpec((Coutp, NHW), lambda i: (0, 0))),
        compiler_params=pltpu.CompilerParams(
            dimension_semantics=("arbitrary",)),
    )(*args)

    # (Coutp, N*HW) -> (N, Coutp, H, W), then drop the per-branch pad channels.
    out4 = jnp.transpose(out.reshape(Coutp, N, H, W), (1, 0, 2, 3))
    if (c1p, c2bp, c3bp, c4p) == (c1, c2b, c3b, c4):
        return out4
    o1 = c1p
    o2 = o1 + c2bp
    o3 = o2 + c3bp
    return jnp.concatenate([out4[:, 0:c1],
                            out4[:, o1:o1 + c2b],
                            out4[:, o2:o2 + c3b],
                            out4[:, o3:o3 + c4]], axis=1)


def ref_inception(x, params, c1, c2, c3, c4):
    """Pure-JAX NCHW/OIHW reference (matches PyTorch semantics)."""
    (w1, b1, w2a, b2a, w2b, b2b, w3a, b3a, w3b, b3b, w4, b4) = params

    def conv(xx, w, b, pad):
        y = jax.lax.conv_general_dilated(
            xx, w, (1, 1), [(pad, pad), (pad, pad)],
            dimension_numbers=("NCHW", "OIHW", "NCHW"),
            precision=jax.lax.Precision.HIGHEST)
        return jax.nn.relu(y + b.reshape(1, -1, 1, 1))

    y1 = conv(x, w1, b1, 0)
    y2 = conv(conv(x, w2a, b2a, 0), w2b, b2b, 1)
    y3 = conv(conv(x, w3a, b3a, 0), w3b, b3b, 2)
    mx = jax.lax.reduce_window(x, -jnp.inf, jax.lax.max,
                               (1, 1, 3, 3), (1, 1, 1, 1),
                               [(0, 0), (0, 0), (1, 1), (1, 1)])
    y4 = conv(mx, w4, b4, 0)
    return jnp.concatenate([y1, y2, y3, y4], axis=1)


if __name__ == "__main__":
    N, Cin, H, W = 2, 4, 16, 16
    c1, c2, c3, c4 = 4, (4, 8), (2, 4), 4

    key = jax.random.PRNGKey(0)
    ks = jax.random.split(key, 13)

    def rnd(k, shape, scale=0.1):
        return jax.random.normal(k, shape, jnp.float32) * scale

    # PyTorch-style OIHW conv weights / per-channel biases.
    w1 = rnd(ks[0], (c1, Cin, 1, 1));        b1 = rnd(ks[1], (c1,))
    w2a = rnd(ks[2], (c2[0], Cin, 1, 1));    b2a = rnd(ks[3], (c2[0],))
    w2b = rnd(ks[4], (c2[1], c2[0], 3, 3));  b2b = rnd(ks[5], (c2[1],))
    w3a = rnd(ks[6], (c3[0], Cin, 1, 1));    b3a = rnd(ks[7], (c3[0],))
    w3b = rnd(ks[8], (c3[1], c3[0], 5, 5));  b3b = rnd(ks[9], (c3[1],))
    w4 = rnd(ks[10], (c4, Cin, 1, 1));       b4 = rnd(ks[11], (c4,))
    params = (w1, b1, w2a, b2a, w2b, b2b, w3a, b3a, w3b, b3b, w4, b4)

    x = jax.random.normal(ks[12], (N, Cin, H, W), jnp.float32)

    y = inception_forward(x, params, c1, c2, c3, c4)
    jax.block_until_ready(y)

    assert y.shape == (N, c1 + c2[1] + c3[1] + c4, H, W)
    y_ref = ref_inception(x, params, c1, c2, c3, c4)
    # bf16 MXU inputs (f32 accumulation) -> slightly looser tolerance vs f32 ref.
    np.testing.assert_allclose(np.asarray(y), np.asarray(y_ref),
                               atol=2e-2, rtol=2e-2)
    print("KERNEL_OK")
</pallas_src>

<mosaic_0001>
module attributes {stable_mosaic.version = 11 : i64} {
  func.func @_inception_kernel(%arg0: i32, %arg1: memref<4x512xf32, #tpu.memory_space<vmem>>, %arg2: memref<25x512xf32, #tpu.memory_space<vmem>>, %arg3: memref<4x512xf32, #tpu.memory_space<vmem>>, %arg4: memref<24x4xbf16, #tpu.memory_space<vmem>>, %arg5: memref<24x1xf32, #tpu.memory_space<vmem>>, %arg6: memref<9x8x8xbf16, #tpu.memory_space<vmem>>, %arg7: memref<8x1xf32, #tpu.memory_space<vmem>>, %arg8: memref<25x8x8xbf16, #tpu.memory_space<vmem>>, %arg9: memref<8x1xf32, #tpu.memory_space<vmem>>, %arg10: memref<8x4xbf16, #tpu.memory_space<vmem>>, %arg11: memref<8x1xf32, #tpu.memory_space<vmem>>, %arg12: memref<32x512xf32, #tpu.memory_space<vmem>>) attributes {dimension_semantics = [#tpu.dimension_semantics<arbitrary>], iteration_bounds = array<i64: 1>, scalar_prefetch = 0 : i64, scratch_operands = 0 : i64, tpu.core_type = #tpu.core_type<tc>, window_params = [{pipeline_mode = #tpu.pipeline_mode<synchronous>, transform_indices = @transform_0, window_bounds = array<i64: 4, 512>}, {pipeline_mode = #tpu.pipeline_mode<synchronous>, transform_indices = @transform_1, window_bounds = array<i64: 25, 512>}, {pipeline_mode = #tpu.pipeline_mode<synchronous>, transform_indices = @transform_2, window_bounds = array<i64: 4, 512>}, {pipeline_mode = #tpu.pipeline_mode<synchronous>, transform_indices = @transform_3, window_bounds = array<i64: 24, 4>}, {pipeline_mode = #tpu.pipeline_mode<synchronous>, transform_indices = @transform_4, window_bounds = array<i64: 24, 1>}, {pipeline_mode = #tpu.pipeline_mode<synchronous>, transform_indices = @transform_5, window_bounds = array<i64: 9, 8, 8>}, {pipeline_mode = #tpu.pipeline_mode<synchronous>, transform_indices = @transform_6, window_bounds = array<i64: 8, 1>}, {pipeline_mode = #tpu.pipeline_mode<synchronous>, transform_indices = @transform_7, window_bounds = array<i64: 25, 8, 8>}, {pipeline_mode = #tpu.pipeline_mode<synchronous>, transform_indices = @transform_8, window_bounds = array<i64: 8, 1>}, {pipeline_mode = #tpu.pipeline_mode<synchronous>, transform_indices = @transform_9, window_bounds = array<i64: 8, 4>}, {pipeline_mode = #tpu.pipeline_mode<synchronous>, transform_indices = @transform_10, window_bounds = array<i64: 8, 1>}, {pipeline_mode = #tpu.pipeline_mode<synchronous>, transform_indices = @transform_11, window_bounds = array<i64: 32, 512>}]} {
    %c0 = arith.constant 0 : index
    %c0_0 = arith.constant 0 : index
    %0 = vector.load %arg1[%c0, %c0_0] : memref<4x512xf32, #tpu.memory_space<vmem>>, vector<4x512xf32>
    %1 = arith.truncf %0 : vector<4x512xf32> to vector<4x512xbf16>
    %c0_1 = arith.constant 0 : index
    %c0_2 = arith.constant 0 : index
    %2 = vector.load %arg4[%c0_1, %c0_2] : memref<24x4xbf16, #tpu.memory_space<vmem>>, vector<24x4xbf16>
    %cst = arith.constant dense<0.000000e+00> : vector<24x512xf32>
    %3 = tpu.matmul %2, %1, %cst {dimension_numbers = #tpu.dot_dimension_numbers<[1], [0], [0], [1], [0, 0, 1, 1], [], []>} : vector<24x4xbf16>, vector<4x512xbf16>, vector<24x512xf32> -> vector<24x512xf32>
    %c0_3 = arith.constant 0 : index
    %c0_4 = arith.constant 0 : index
    %4 = vector.load %arg5[%c0_3, %c0_4] : memref<24x1xf32, #tpu.memory_space<vmem>>, vector<24x1xf32>
    %5 = vector.broadcast %4 : vector<24x1xf32> to vector<24x512xf32>
    %6 = arith.addf %3, %5 : vector<24x512xf32>
    %cst_5 = arith.constant 0.000000e+00 : f32
    %7 = vector.broadcast %cst_5 : f32 to vector<24x512xf32>
    %8 = arith.maximumf %6, %7 : vector<24x512xf32>
    %9 = vector.extract_strided_slice %8 {offsets = [0, 0], sizes = [8, 512], strides = [1, 1]} : vector<24x512xf32> to vector<8x512xf32>
    %10 = vector.extract_strided_slice %8 {offsets = [8, 0], sizes = [8, 512], strides = [1, 1]} : vector<24x512xf32> to vector<8x512xf32>
    %11 = vector.extract_strided_slice %8 {offsets = [16, 0], sizes = [8, 512], strides = [1, 1]} : vector<24x512xf32> to vector<8x512xf32>
    %c6 = arith.constant 6 : index
    %c0_6 = arith.constant 0 : index
    %12 = vector.load %arg2[%c6, %c0_6] : memref<25x512xf32, #tpu.memory_space<vmem>>, vector<1x512xf32>
    %c17_i32 = arith.constant 17 : i32
    %13 = tpu.dynamic_rotate %10 by %c17_i32 dim 1 : vector<8x512xf32>, i32 -> vector<8x512xf32>
    %14 = vector.broadcast %12 : vector<1x512xf32> to vector<8x512xf32>
    %15 = arith.mulf %13, %14 : vector<8x512xf32>
    %16 = arith.truncf %15 : vector<8x512xf32> to vector<8x512xbf16>
    %c0_7 = arith.constant 0 : index
    %c0_8 = arith.constant 0 : index
    %c0_9 = arith.constant 0 : index
    %17 = vector.load %arg6[%c0_7, %c0_8, %c0_9] : memref<9x8x8xbf16, #tpu.memory_space<vmem>>, vector<1x8x8xbf16>
    %18 = vector.shape_cast %17 : vector<1x8x8xbf16> to vector<8x8xbf16>
    %cst_10 = arith.constant dense<0.000000e+00> : vector<8x512xf32>
    %19 = tpu.matmul %18, %16, %cst_10 {dimension_numbers = #tpu.dot_dimension_numbers<[1], [0], [0], [1], [0, 0, 1, 1], [], []>} : vector<8x8xbf16>, vector<8x512xbf16>, vector<8x512xf32> -> vector<8x512xf32>
    %c7 = arith.constant 7 : index
    %c0_11 = arith.constant 0 : index
    %20 = vector.load %arg2[%c7, %c0_11] : memref<25x512xf32, #tpu.memory_space<vmem>>, vector<1x512xf32>
    %c16_i32 = arith.constant 16 : i32
    %21 = tpu.dynamic_rotate %10 by %c16_i32 dim 1 : vector<8x512xf32>, i32 -> vector<8x512xf32>
    %22 = vector.broadcast %20 : vector<1x512xf32> to vector<8x512xf32>
    %23 = arith.mulf %21, %22 : vector<8x512xf32>
    %24 = arith.truncf %23 : vector<8x512xf32> to vector<8x512xbf16>
    %c1 = arith.constant 1 : index
    %c0_12 = arith.constant 0 : index
    %c0_13 = arith.constant 0 : index
    %25 = vector.load %arg6[%c1, %c0_12, %c0_13] : memref<9x8x8xbf16, #tpu.memory_space<vmem>>, vector<1x8x8xbf16>
    %26 = vector.shape_cast %25 : vector<1x8x8xbf16> to vector<8x8xbf16>
    %cst_14 = arith.constant dense<0.000000e+00> : vector<8x512xf32>
    %27 = tpu.matmul %26, %24, %cst_14 {dimension_numbers = #tpu.dot_dimension_numbers<[1], [0], [0], [1], [0, 0, 1, 1], [], []>} : vector<8x8xbf16>, vector<8x512xbf16>, vector<8x512xf32> -> vector<8x512xf32>
    %28 = arith.addf %19, %27 : vector<8x512xf32>
    %c8 = arith.constant 8 : index
    %c0_15 = arith.constant 0 : index
    %29 = vector.load %arg2[%c8, %c0_15] : memref<25x512xf32, #tpu.memory_space<vmem>>, vector<1x512xf32>
    %c15_i32 = arith.constant 15 : i32
    %30 = tpu.dynamic_rotate %10 by %c15_i32 dim 1 : vector<8x512xf32>, i32 -> vector<8x512xf32>
    %31 = vector.broadcast %29 : vector<1x512xf32> to vector<8x512xf32>
    %32 = arith.mulf %30, %31 : vector<8x512xf32>
    %33 = arith.truncf %32 : vector<8x512xf32> to vector<8x512xbf16>
    %c2 = arith.constant 2 : index
    %c0_16 = arith.constant 0 : index
    %c0_17 = arith.constant 0 : index
    %34 = vector.load %arg6[%c2, %c0_16, %c0_17] : memref<9x8x8xbf16, #tpu.memory_space<vmem>>, vector<1x8x8xbf16>
    %35 = vector.shape_cast %34 : vector<1x8x8xbf16> to vector<8x8xbf16>
    %cst_18 = arith.constant dense<0.000000e+00> : vector<8x512xf32>
    %36 = tpu.matmul %35, %33, %cst_18 {dimension_numbers = #tpu.dot_dimension_numbers<[1], [0], [0], [1], [0, 0, 1, 1], [], []>} : vector<8x8xbf16>, vector<8x512xbf16>, vector<8x512xf32> -> vector<8x512xf32>
    %37 = arith.addf %28, %36 : vector<8x512xf32>
    %c11 = arith.constant 11 : index
    %c0_19 = arith.constant 0 : index
    %38 = vector.load %arg2[%c11, %c0_19] : memref<25x512xf32, #tpu.memory_space<vmem>>, vector<1x512xf32>
    %c1_i32 = arith.constant 1 : i32
    %39 = tpu.dynamic_rotate %10 by %c1_i32 dim 1 : vector<8x512xf32>, i32 -> vector<8x512xf32>
    %40 = vector.broadcast %38 : vector<1x512xf32> to vector<8x512xf32>
    %41 = arith.mulf %39, %40 : vector<8x512xf32>
    %42 = arith.truncf %41 : vector<8x512xf32> to vector<8x512xbf16>
    %c3 = arith.constant 3 : index
    %c0_20 = arith.constant 0 : index
    %c0_21 = arith.constant 0 : index
    %43 = vector.load %arg6[%c3, %c0_20, %c0_21] : memref<9x8x8xbf16, #tpu.memory_space<vmem>>, vector<1x8x8xbf16>
    %44 = vector.shape_cast %43 : vector<1x8x8xbf16> to vector<8x8xbf16>
    %cst_22 = arith.constant dense<0.000000e+00> : vector<8x512xf32>
    %45 = tpu.matmul %44, %42, %cst_22 {dimension_numbers = #tpu.dot_dimension_numbers<[1], [0], [0], [1], [0, 0, 1, 1], [], []>} : vector<8x8xbf16>, vector<8x512xbf16>, vector<8x512xf32> -> vector<8x512xf32>
    %46 = arith.addf %37, %45 : vector<8x512xf32>
    %c12 = arith.constant 12 : index
    %c0_23 = arith.constant 0 : index
    %47 = vector.load %arg2[%c12, %c0_23] : memref<25x512xf32, #tpu.memory_space<vmem>>, vector<1x512xf32>
    %48 = vector.broadcast %47 : vector<1x512xf32> to vector<8x512xf32>
    %49 = arith.mulf %10, %48 : vector<8x512xf32>
    %50 = arith.truncf %49 : vector<8x512xf32> to vector<8x512xbf16>
    %c4 = arith.constant 4 : index
    %c0_24 = arith.constant 0 : index
    %c0_25 = arith.constant 0 : index
    %51 = vector.load %arg6[%c4, %c0_24, %c0_25] : memref<9x8x8xbf16, #tpu.memory_space<vmem>>, vector<1x8x8xbf16>
    %52 = vector.shape_cast %51 : vector<1x8x8xbf16> to vector<8x8xbf16>
    %cst_26 = arith.constant dense<0.000000e+00> : vector<8x512xf32>
    %53 = tpu.matmul %52, %50, %cst_26 {dimension_numbers = #tpu.dot_dimension_numbers<[1], [0], [0], [1], [0, 0, 1, 1], [], []>} : vector<8x8xbf16>, vector<8x512xbf16>, vector<8x512xf32> -> vector<8x512xf32>
    %54 = arith.addf %46, %53 : vector<8x512xf32>
    %c13 = arith.constant 13 : index
    %c0_27 = arith.constant 0 : index
    %55 = vector.load %arg2[%c13, %c0_27] : memref<25x512xf32, #tpu.memory_space<vmem>>, vector<1x512xf32>
    %c511_i32 = arith.constant 511 : i32
    %56 = tpu.dynamic_rotate %10 by %c511_i32 dim 1 : vector<8x512xf32>, i32 -> vector<8x512xf32>
    %57 = vector.broadcast %55 : vector<1x512xf32> to vector<8x512xf32>
    %58 = arith.mulf %56, %57 : vector<8x512xf32>
    %59 = arith.truncf %58 : vector<8x512xf32> to vector<8x512xbf16>
    %c5 = arith.constant 5 : index
    %c0_28 = arith.constant 0 : index
    %c0_29 = arith.constant 0 : index
    %60 = vector.load %arg6[%c5, %c0_28, %c0_29] : memref<9x8x8xbf16, #tpu.memory_space<vmem>>, vector<1x8x8xbf16>
    %61 = vector.shape_cast %60 : vector<1x8x8xbf16> to vector<8x8xbf16>
    %cst_30 = arith.constant dense<0.000000e+00> : vector<8x512xf32>
    %62 = tpu.matmul %61, %59, %cst_30 {dimension_numbers = #tpu.dot_dimension_numbers<[1], [0], [0], [1], [0, 0, 1, 1], [], []>} : vector<8x8xbf16>, vector<8x512xbf16>, vector<8x512xf32> -> vector<8x512xf32>
    %63 = arith.addf %54, %62 : vector<8x512xf32>
    %c16 = arith.constant 16 : index
    %c0_31 = arith.constant 0 : index
    %64 = vector.load %arg2[%c16, %c0_31] : memref<25x512xf32, #tpu.memory_space<vmem>>, vector<1x512xf32>
    %c497_i32 = arith.constant 497 : i32
    %65 = tpu.dynamic_rotate %10 by %c497_i32 dim 1 : vector<8x512xf32>, i32 -> vector<8x512xf32>
    %66 = vector.broadcast %64 : vector<1x512xf32> to vector<8x512xf32>
    %67 = arith.mulf %65, %66 : vector<8x512xf32>
    %68 = arith.truncf %67 : vector<8x512xf32> to vector<8x512xbf16>
    %c6_32 = arith.constant 6 : index
    %c0_33 = arith.constant 0 : index
    %c0_34 = arith.constant 0 : index
    %69 = vector.load %arg6[%c6_32, %c0_33, %c0_34] : memref<9x8x8xbf16, #tpu.memory_space<vmem>>, vector<1x8x8xbf16>
    %70 = vector.shape_cast %69 : vector<1x8x8xbf16> to vector<8x8xbf16>
    %cst_35 = arith.constant dense<0.000000e+00> : vector<8x512xf32>
    %71 = tpu.matmul %70, %68, %cst_35 {dimension_numbers = #tpu.dot_dimension_numbers<[1], [0], [0], [1], [0, 0, 1, 1], [], []>} : vector<8x8xbf16>, vector<8x512xbf16>, vector<8x512xf32> -> vector<8x512xf32>
    %72 = arith.addf %63, %71 : vector<8x512xf32>
    %c17 = arith.constant 17 : index
    %c0_36 = arith.constant 0 : index
    %73 = vector.load %arg2[%c17, %c0_36] : memref<25x512xf32, #tpu.memory_space<vmem>>, vector<1x512xf32>
    %c496_i32 = arith.constant 496 : i32
    %74 = tpu.dynamic_rotate %10 by %c496_i32 dim 1 : vector<8x512xf32>, i32 -> vector<8x512xf32>
    %75 = vector.broadcast %73 : vector<1x512xf32> to vector<8x512xf32>
    %76 = arith.mulf %74, %75 : vector<8x512xf32>
    %77 = arith.truncf %76 : vector<8x512xf32> to vector<8x512xbf16>
    %c7_37 = arith.constant 7 : index
    %c0_38 = arith.constant 0 : index
    %c0_39 = arith.constant 0 : index
    %78 = vector.load %arg6[%c7_37, %c0_38, %c0_39] : memref<9x8x8xbf16, #tpu.memory_space<vmem>>, vector<1x8x8xbf16>
    %79 = vector.shape_cast %78 : vector<1x8x8xbf16> to vector<8x8xbf16>
    %cst_40 = arith.constant dense<0.000000e+00> : vector<8x512xf32>
    %80 = tpu.matmul %79, %77, %cst_40 {dimension_numbers = #tpu.dot_dimension_numbers<[1], [0], [0], [1], [0, 0, 1, 1], [], []>} : vector<8x8xbf16>, vector<8x512xbf16>, vector<8x512xf32> -> vector<8x512xf32>
    %81 = arith.addf %72, %80 : vector<8x512xf32>
    %c18 = arith.constant 18 : index
    %c0_41 = arith.constant 0 : index
    %82 = vector.load %arg2[%c18, %c0_41] : memref<25x512xf32, #tpu.memory_space<vmem>>, vector<1x512xf32>
    %c495_i32 = arith.constant 495 : i32
    %83 = tpu.dynamic_rotate %10 by %c495_i32 dim 1 : vector<8x512xf32>, i32 -> vector<8x512xf32>
    %84 = vector.broadcast %82 : vector<1x512xf32> to vector<8x512xf32>
    %85 = arith.mulf %83, %84 : vector<8x512xf32>
    %86 = arith.truncf %85 : vector<8x512xf32> to vector<8x512xbf16>
    %c8_42 = arith.constant 8 : index
    %c0_43 = arith.constant 0 : index
    %c0_44 = arith.constant 0 : index
    %87 = vector.load %arg6[%c8_42, %c0_43, %c0_44] : memref<9x8x8xbf16, #tpu.memory_space<vmem>>, vector<1x8x8xbf16>
    %88 = vector.shape_cast %87 : vector<1x8x8xbf16> to vector<8x8xbf16>
    %cst_45 = arith.constant dense<0.000000e+00> : vector<8x512xf32>
    %89 = tpu.matmul %88, %86, %cst_45 {dimension_numbers = #tpu.dot_dimension_numbers<[1], [0], [0], [1], [0, 0, 1, 1], [], []>} : vector<8x8xbf16>, vector<8x512xbf16>, vector<8x512xf32> -> vector<8x512xf32>
    %90 = arith.addf %81, %89 : vector<8x512xf32>
    %c0_46 = arith.constant 0 : index
    %c0_47 = arith.constant 0 : index
    %91 = vector.load %arg7[%c0_46, %c0_47] : memref<8x1xf32, #tpu.memory_space<vmem>>, vector<8x1xf32>
    %92 = vector.broadcast %91 : vector<8x1xf32> to vector<8x512xf32>
    %93 = arith.addf %90, %92 : vector<8x512xf32>
    %cst_48 = arith.constant 0.000000e+00 : f32
    %94 = vector.broadcast %cst_48 : f32 to vector<8x512xf32>
    %95 = arith.maximumf %93, %94 : vector<8x512xf32>
    %c0_49 = arith.constant 0 : index
    %c0_50 = arith.constant 0 : index
    %96 = vector.load %arg2[%c0_49, %c0_50] : memref<25x512xf32, #tpu.memory_space<vmem>>, vector<1x512xf32>
    %c34_i32 = arith.constant 34 : i32
    %97 = tpu.dynamic_rotate %11 by %c34_i32 dim 1 : vector<8x512xf32>, i32 -> vector<8x512xf32>
    %98 = vector.broadcast %96 : vector<1x512xf32> to vector<8x512xf32>
    %99 = arith.mulf %97, %98 : vector<8x512xf32>
    %100 = arith.truncf %99 : vector<8x512xf32> to vector<8x512xbf16>
    %c0_51 = arith.constant 0 : index
    %c0_52 = arith.constant 0 : index
    %c0_53 = arith.constant 0 : index
    %101 = vector.load %arg8[%c0_51, %c0_52, %c0_53] : memref<25x8x8xbf16, #tpu.memory_space<vmem>>, vector<1x8x8xbf16>
    %102 = vector.shape_cast %101 : vector<1x8x8xbf16> to vector<8x8xbf16>
    %cst_54 = arith.constant dense<0.000000e+00> : vector<8x512xf32>
    %103 = tpu.matmul %102, %100, %cst_54 {dimension_numbers = #tpu.dot_dimension_numbers<[1], [0], [0], [1], [0, 0, 1, 1], [], []>} : vector<8x8xbf16>, vector<8x512xbf16>, vector<8x512xf32> -> vector<8x512xf32>
    %c1_55 = arith.constant 1 : index
    %c0_56 = arith.constant 0 : index
    %104 = vector.load %arg2[%c1_55, %c0_56] : memref<25x512xf32, #tpu.memory_space<vmem>>, vector<1x512xf32>
    %c33_i32 = arith.constant 33 : i32
    %105 = tpu.dynamic_rotate %11 by %c33_i32 dim 1 : vector<8x512xf32>, i32 -> vector<8x512xf32>
    %106 = vector.broadcast %104 : vector<1x512xf32> to vector<8x512xf32>
    %107 = arith.mulf %105, %106 : vector<8x512xf32>
    %108 = arith.truncf %107 : vector<8x512xf32> to vector<8x512xbf16>
    %c1_57 = arith.constant 1 : index
    %c0_58 = arith.constant 0 : index
    %c0_59 = arith.constant 0 : index
    %109 = vector.load %arg8[%c1_57, %c0_58, %c0_59] : memref<25x8x8xbf16, #tpu.memory_space<vmem>>, vector<1x8x8xbf16>
    %110 = vector.shape_cast %109 : vector<1x8x8xbf16> to vector<8x8xbf16>
    %cst_60 = arith.constant dense<0.000000e+00> : vector<8x512xf32>
    %111 = tpu.matmul %110, %108, %cst_60 {dimension_numbers = #tpu.dot_dimension_numbers<[1], [0], [0], [1], [0, 0, 1, 1], [], []>} : vector<8x8xbf16>, vector<8x512xbf16>, vector<8x512xf32> -> vector<8x512xf32>
    %112 = arith.addf %103, %111 : vector<8x512xf32>
    %c2_61 = arith.constant 2 : index
    %c0_62 = arith.constant 0 : index
    %113 = vector.load %arg2[%c2_61, %c0_62] : memref<25x512xf32, #tpu.memory_space<vmem>>, vector<1x512xf32>
    %c32_i32 = arith.constant 32 : i32
    %114 = tpu.dynamic_rotate %11 by %c32_i32 dim 1 : vector<8x512xf32>, i32 -> vector<8x512xf32>
    %115 = vector.broadcast %113 : vector<1x512xf32> to vector<8x512xf32>
    %116 = arith.mulf %114, %115 : vector<8x512xf32>
    %117 = arith.truncf %116 : vector<8x512xf32> to vector<8x512xbf16>
    %c2_63 = arith.constant 2 : index
    %c0_64 = arith.constant 0 : index
    %c0_65 = arith.constant 0 : index
    %118 = vector.load %arg8[%c2_63, %c0_64, %c0_65] : memref<25x8x8xbf16, #tpu.memory_space<vmem>>, vector<1x8x8xbf16>
    %119 = vector.shape_cast %118 : vector<1x8x8xbf16> to vector<8x8xbf16>
    %cst_66 = arith.constant dense<0.000000e+00> : vector<8x512xf32>
    %120 = tpu.matmul %119, %117, %cst_66 {dimension_numbers = #tpu.dot_dimension_numbers<[1], [0], [0], [1], [0, 0, 1, 1], [], []>} : vector<8x8xbf16>, vector<8x512xbf16>, vector<8x512xf32> -> vector<8x512xf32>
    %121 = arith.addf %112, %120 : vector<8x512xf32>
    %c3_67 = arith.constant 3 : index
    %c0_68 = arith.constant 0 : index
    %122 = vector.load %arg2[%c3_67, %c0_68] : memref<25x512xf32, #tpu.memory_space<vmem>>, vector<1x512xf32>
    %c31_i32 = arith.constant 31 : i32
    %123 = tpu.dynamic_rotate %11 by %c31_i32 dim 1 : vector<8x512xf32>, i32 -> vector<8x512xf32>
    %124 = vector.broadcast %122 : vector<1x512xf32> to vector<8x512xf32>
    %125 = arith.mulf %123, %124 : vector<8x512xf32>
    %126 = arith.truncf %125 : vector<8x512xf32> to vector<8x512xbf16>
    %c3_69 = arith.constant 3 : index
    %c0_70 = arith.constant 0 : index
    %c0_71 = arith.constant 0 : index
    %127 = vector.load %arg8[%c3_69, %c0_70, %c0_71] : memref<25x8x8xbf16, #tpu.memory_space<vmem>>, vector<1x8x8xbf16>
    %128 = vector.shape_cast %127 : vector<1x8x8xbf16> to vector<8x8xbf16>
    %cst_72 = arith.constant dense<0.000000e+00> : vector<8x512xf32>
    %129 = tpu.matmul %128, %126, %cst_72 {dimension_numbers = #tpu.dot_dimension_numbers<[1], [0], [0], [1], [0, 0, 1, 1], [], []>} : vector<8x8xbf16>, vector<8x512xbf16>, vector<8x512xf32> -> vector<8x512xf32>
    %130 = arith.addf %121, %129 : vector<8x512xf32>
    %c4_73 = arith.constant 4 : index
    %c0_74 = arith.constant 0 : index
    %131 = vector.load %arg2[%c4_73, %c0_74] : memref<25x512xf32, #tpu.memory_space<vmem>>, vector<1x512xf32>
    %c30_i32 = arith.constant 30 : i32
    %132 = tpu.dynamic_rotate %11 by %c30_i32 dim 1 : vector<8x512xf32>, i32 -> vector<8x512xf32>
    %133 = vector.broadcast %131 : vector<1x512xf32> to vector<8x512xf32>
    %134 = arith.mulf %132, %133 : vector<8x512xf32>
    %135 = arith.truncf %134 : vector<8x512xf32> to vector<8x512xbf16>
    %c4_75 = arith.constant 4 : index
    %c0_76 = arith.constant 0 : index
    %c0_77 = arith.constant 0 : index
    %136 = vector.load %arg8[%c4_75, %c0_76, %c0_77] : memref<25x8x8xbf16, #tpu.memory_space<vmem>>, vector<1x8x8xbf16>
    %137 = vector.shape_cast %136 : vector<1x8x8xbf16> to vector<8x8xbf16>
    %cst_78 = arith.constant dense<0.000000e+00> : vector<8x512xf32>
    %138 = tpu.matmul %137, %135, %cst_78 {dimension_numbers = #tpu.dot_dimension_numbers<[1], [0], [0], [1], [0, 0, 1, 1], [], []>} : vector<8x8xbf16>, vector<8x512xbf16>, vector<8x512xf32> -> vector<8x512xf32>
    %139 = arith.addf %130, %138 : vector<8x512xf32>
    %c5_79 = arith.constant 5 : index
    %c0_80 = arith.constant 0 : index
    %140 = vector.load %arg2[%c5_79, %c0_80] : memref<25x512xf32, #tpu.memory_space<vmem>>, vector<1x512xf32>
    %c18_i32 = arith.constant 18 : i32
    %141 = tpu.dynamic_rotate %11 by %c18_i32 dim 1 : vector<8x512xf32>, i32 -> vector<8x512xf32>
    %142 = vector.broadcast %140 : vector<1x512xf32> to vector<8x512xf32>
    %143 = arith.mulf %141, %142 : vector<8x512xf32>
    %144 = arith.truncf %143 : vector<8x512xf32> to vector<8x512xbf16>
    %c5_81 = arith.constant 5 : index
    %c0_82 = arith.constant 0 : index
    %c0_83 = arith.constant 0 : index
    %145 = vector.load %arg8[%c5_81, %c0_82, %c0_83] : memref<25x8x8xbf16, #tpu.memory_space<vmem>>, vector<1x8x8xbf16>
    %146 = vector.shape_cast %145 : vector<1x8x8xbf16> to vector<8x8xbf16>
    %cst_84 = arith.constant dense<0.000000e+00> : vector<8x512xf32>
    %147 = tpu.matmul %146, %144, %cst_84 {dimension_numbers = #tpu.dot_dimension_numbers<[1], [0], [0], [1], [0, 0, 1, 1], [], []>} : vector<8x8xbf16>, vector<8x512xbf16>, vector<8x512xf32> -> vector<8x512xf32>
    %148 = arith.addf %139, %147 : vector<8x512xf32>
    %c6_85 = arith.constant 6 : index
    %c0_86 = arith.constant 0 : index
    %149 = vector.load %arg2[%c6_85, %c0_86] : memref<25x512xf32, #tpu.memory_space<vmem>>, vector<1x512xf32>
    %c17_i32_87 = arith.constant 17 : i32
    %150 = tpu.dynamic_rotate %11 by %c17_i32_87 dim 1 : vector<8x512xf32>, i32 -> vector<8x512xf32>
    %151 = vector.broadcast %149 : vector<1x512xf32> to vector<8x512xf32>
    %152 = arith.mulf %150, %151 : vector<8x512xf32>
    %153 = arith.truncf %152 : vector<8x512xf32> to vector<8x512xbf16>
    %c6_88 = arith.constant 6 : index
    %c0_89 = arith.constant 0 : index
    %c0_90 = arith.constant 0 : index
    %154 = vector.load %arg8[%c6_88, %c0_89, %c0_90] : memref<25x8x8xbf16, #tpu.memory_space<vmem>>, vector<1x8x8xbf16>
    %155 = vector.shape_cast %154 : vector<1x8x8xbf16> to vector<8x8xbf16>
    %cst_91 = arith.constant dense<0.000000e+00> : vector<8x512xf32>
    %156 = tpu.matmul %155, %153, %cst_91 {dimension_numbers = #tpu.dot_dimension_numbers<[1], [0], [0], [1], [0, 0, 1, 1], [], []>} : vector<8x8xbf16>, vector<8x512xbf16>, vector<8x512xf32> -> vector<8x512xf32>
    %157 = arith.addf %148, %156 : vector<8x512xf32>
    %c7_92 = arith.constant 7 : index
    %c0_93 = arith.constant 0 : index
    %158 = vector.load %arg2[%c7_92, %c0_93] : memref<25x512xf32, #tpu.memory_space<vmem>>, vector<1x512xf32>
    %c16_i32_94 = arith.constant 16 : i32
    %159 = tpu.dynamic_rotate %11 by %c16_i32_94 dim 1 : vector<8x512xf32>, i32 -> vector<8x512xf32>
    %160 = vector.broadcast %158 : vector<1x512xf32> to vector<8x512xf32>
    %161 = arith.mulf %159, %160 : vector<8x512xf32>
    %162 = arith.truncf %161 : vector<8x512xf32> to vector<8x512xbf16>
    %c7_95 = arith.constant 7 : index
    %c0_96 = arith.constant 0 : index
    %c0_97 = arith.constant 0 : index
    %163 = vector.load %arg8[%c7_95, %c0_96, %c0_97] : memref<25x8x8xbf16, #tpu.memory_space<vmem>>, vector<1x8x8xbf16>
    %164 = vector.shape_cast %163 : vector<1x8x8xbf16> to vector<8x8xbf16>
    %cst_98 = arith.constant dense<0.000000e+00> : vector<8x512xf32>
    %165 = tpu.matmul %164, %162, %cst_98 {dimension_numbers = #tpu.dot_dimension_numbers<[1], [0], [0], [1], [0, 0, 1, 1], [], []>} : vector<8x8xbf16>, vector<8x512xbf16>, vector<8x512xf32> -> vector<8x512xf32>
    %166 = arith.addf %157, %165 : vector<8x512xf32>
    %c8_99 = arith.constant 8 : index
    %c0_100 = arith.constant 0 : index
    %167 = vector.load %arg2[%c8_99, %c0_100] : memref<25x512xf32, #tpu.memory_space<vmem>>, vector<1x512xf32>
    %c15_i32_101 = arith.constant 15 : i32
    %168 = tpu.dynamic_rotate %11 by %c15_i32_101 dim 1 : vector<8x512xf32>, i32 -> vector<8x512xf32>
    %169 = vector.broadcast %167 : vector<1x512xf32> to vector<8x512xf32>
    %170 = arith.mulf %168, %169 : vector<8x512xf32>
    %171 = arith.truncf %170 : vector<8x512xf32> to vector<8x512xbf16>
    %c8_102 = arith.constant 8 : index
    %c0_103 = arith.constant 0 : index
    %c0_104 = arith.constant 0 : index
    %172 = vector.load %arg8[%c8_102, %c0_103, %c0_104] : memref<25x8x8xbf16, #tpu.memory_space<vmem>>, vector<1x8x8xbf16>
    %173 = vector.shape_cast %172 : vector<1x8x8xbf16> to vector<8x8xbf16>
    %cst_105 = arith.constant dense<0.000000e+00> : vector<8x512xf32>
    %174 = tpu.matmul %173, %171, %cst_105 {dimension_numbers = #tpu.dot_dimension_numbers<[1], [0], [0], [1], [0, 0, 1, 1], [], []>} : vector<8x8xbf16>, vector<8x512xbf16>, vector<8x512xf32> -> vector<8x512xf32>
    %175 = arith.addf %166, %174 : vector<8x512xf32>
    %c9 = arith.constant 9 : index
    %c0_106 = arith.constant 0 : index
    %176 = vector.load %arg2[%c9, %c0_106] : memref<25x512xf32, #tpu.memory_space<vmem>>, vector<1x512xf32>
    %c14_i32 = arith.constant 14 : i32
    %177 = tpu.dynamic_rotate %11 by %c14_i32 dim 1 : vector<8x512xf32>, i32 -> vector<8x512xf32>
    %178 = vector.broadcast %176 : vector<1x512xf32> to vector<8x512xf32>
    %179 = arith.mulf %177, %178 : vector<8x512xf32>
    %180 = arith.truncf %179 : vector<8x512xf32> to vector<8x512xbf16>
    %c9_107 = arith.constant 9 : index
    %c0_108 = arith.constant 0 : index
    %c0_109 = arith.constant 0 : index
    %181 = vector.load %arg8[%c9_107, %c0_108, %c0_109] : memref<25x8x8xbf16, #tpu.memory_space<vmem>>, vector<1x8x8xbf16>
    %182 = vector.shape_cast %181 : vector<1x8x8xbf16> to vector<8x8xbf16>
    %cst_110 = arith.constant dense<0.000000e+00> : vector<8x512xf32>
    %183 = tpu.matmul %182, %180, %cst_110 {dimension_numbers = #tpu.dot_dimension_numbers<[1], [0], [0], [1], [0, 0, 1, 1], [], []>} : vector<8x8xbf16>, vector<8x512xbf16>, vector<8x512xf32> -> vector<8x512xf32>
    %184 = arith.addf %175, %183 : vector<8x512xf32>
    %c10 = arith.constant 10 : index
    %c0_111 = arith.constant 0 : index
    %185 = vector.load %arg2[%c10, %c0_111] : memref<25x512xf32, #tpu.memory_space<vmem>>, vector<1x512xf32>
    %c2_i32 = arith.constant 2 : i32
    %186 = tpu.dynamic_rotate %11 by %c2_i32 dim 1 : vector<8x512xf32>, i32 -> vector<8x512xf32>
    %187 = vector.broadcast %185 : vector<1x512xf32> to vector<8x512xf32>
    %188 = arith.mulf %186, %187 : vector<8x512xf32>
    %189 = arith.truncf %188 : vector<8x512xf32> to vector<8x512xbf16>
    %c10_112 = arith.constant 10 : index
    %c0_113 = arith.constant 0 : index
    %c0_114 = arith.constant 0 : index
    %190 = vector.load %arg8[%c10_112, %c0_113, %c0_114] : memref<25x8x8xbf16, #tpu.memory_space<vmem>>, vector<1x8x8xbf16>
    %191 = vector.shape_cast %190 : vector<1x8x8xbf16> to vector<8x8xbf16>
    %cst_115 = arith.constant dense<0.000000e+00> : vector<8x512xf32>
    %192 = tpu.matmul %191, %189, %cst_115 {dimension_numbers = #tpu.dot_dimension_numbers<[1], [0], [0], [1], [0, 0, 1, 1], [], []>} : vector<8x8xbf16>, vector<8x512xbf16>, vector<8x512xf32> -> vector<8x512xf32>
    %193 = arith.addf %184, %192 : vector<8x512xf32>
    %c11_116 = arith.constant 11 : index
    %c0_117 = arith.constant 0 : index
    %194 = vector.load %arg2[%c11_116, %c0_117] : memref<25x512xf32, #tpu.memory_space<vmem>>, vector<1x512xf32>
    %c1_i32_118 = arith.constant 1 : i32
    %195 = tpu.dynamic_rotate %11 by %c1_i32_118 dim 1 : vector<8x512xf32>, i32 -> vector<8x512xf32>
    %196 = vector.broadcast %194 : vector<1x512xf32> to vector<8x512xf32>
    %197 = arith.mulf %195, %196 : vector<8x512xf32>
    %198 = arith.truncf %197 : vector<8x512xf32> to vector<8x512xbf16>
    %c11_119 = arith.constant 11 : index
    %c0_120 = arith.constant 0 : index
    %c0_121 = arith.constant 0 : index
    %199 = vector.load %arg8[%c11_119, %c0_120, %c0_121] : memref<25x8x8xbf16, #tpu.memory_space<vmem>>, vector<1x8x8xbf16>
    %200 = vector.shape_cast %199 : vector<1x8x8xbf16> to vector<8x8xbf16>
    %cst_122 = arith.constant dense<0.000000e+00> : vector<8x512xf32>
    %201 = tpu.matmul %200, %198, %cst_122 {dimension_numbers = #tpu.dot_dimension_numbers<[1], [0], [0], [1], [0, 0, 1, 1], [], []>} : vector<8x8xbf16>, vector<8x512xbf16>, vector<8x512xf32> -> vector<8x512xf32>
    %202 = arith.addf %193, %201 : vector<8x512xf32>
    %c12_123 = arith.constant 12 : index
    %c0_124 = arith.constant 0 : index
    %203 = vector.load %arg2[%c12_123, %c0_124] : memref<25x512xf32, #tpu.memory_space<vmem>>, vector<1x512xf32>
    %204 = vector.broadcast %203 : vector<1x512xf32> to vector<8x512xf32>
    %205 = arith.mulf %11, %204 : vector<8x512xf32>
    %206 = arith.truncf %205 : vector<8x512xf32> to vector<8x512xbf16>
    %c12_125 = arith.constant 12 : index
    %c0_126 = arith.constant 0 : index
    %c0_127 = arith.constant 0 : index
    %207 = vector.load %arg8[%c12_125, %c0_126, %c0_127] : memref<25x8x8xbf16, #tpu.memory_space<vmem>>, vector<1x8x8xbf16>
    %208 = vector.shape_cast %207 : vector<1x8x8xbf16> to vector<8x8xbf16>
    %cst_128 = arith.constant dense<0.000000e+00> : vector<8x512xf32>
    %209 = tpu.matmul %208, %206, %cst_128 {dimension_numbers = #tpu.dot_dimension_numbers<[1], [0], [0], [1], [0, 0, 1, 1], [], []>} : vector<8x8xbf16>, vector<8x512xbf16>, vector<8x512xf32> -> vector<8x512xf32>
    %210 = arith.addf %202, %209 : vector<8x512xf32>
    %c13_129 = arith.constant 13 : index
    %c0_130 = arith.constant 0 : index
    %211 = vector.load %arg2[%c13_129, %c0_130] : memref<25x512xf32, #tpu.memory_space<vmem>>, vector<1x512xf32>
    %c511_i32_131 = arith.constant 511 : i32
    %212 = tpu.dynamic_rotate %11 by %c511_i32_131 dim 1 : vector<8x512xf32>, i32 -> vector<8x512xf32>
    %213 = vector.broadcast %211 : vector<1x512xf32> to vector<8x512xf32>
    %214 = arith.mulf %212, %213 : vector<8x512xf32>
    %215 = arith.truncf %214 : vector<8x512xf32> to vector<8x512xbf16>
    %c13_132 = arith.constant 13 : index
    %c0_133 = arith.constant 0 : index
    %c0_134 = arith.constant 0 : index
    %216 = vector.load %arg8[%c13_132, %c0_133, %c0_134] : memref<25x8x8xbf16, #tpu.memory_space<vmem>>, vector<1x8x8xbf16>
    %217 = vector.shape_cast %216 : vector<1x8x8xbf16> to vector<8x8xbf16>
    %cst_135 = arith.constant dense<0.000000e+00> : vector<8x512xf32>
    %218 = tpu.matmul %217, %215, %cst_135 {dimension_numbers = #tpu.dot_dimension_numbers<[1], [0], [0], [1], [0, 0, 1, 1], [], []>} : vector<8x8xbf16>, vector<8x512xbf16>, vector<8x512xf32> -> vector<8x512xf32>
    %219 = arith.addf %210, %218 : vector<8x512xf32>
    %c14 = arith.constant 14 : index
    %c0_136 = arith.constant 0 : index
    %220 = vector.load %arg2[%c14, %c0_136] : memref<25x512xf32, #tpu.memory_space<vmem>>, vector<1x512xf32>
    %c510_i32 = arith.constant 510 : i32
    %221 = tpu.dynamic_rotate %11 by %c510_i32 dim 1 : vector<8x512xf32>, i32 -> vector<8x512xf32>
    %222 = vector.broadcast %220 : vector<1x512xf32> to vector<8x512xf32>
    %223 = arith.mulf %221, %222 : vector<8x512xf32>
    %224 = arith.truncf %223 : vector<8x512xf32> to vector<8x512xbf16>
    %c14_137 = arith.constant 14 : index
    %c0_138 = arith.constant 0 : index
    %c0_139 = arith.constant 0 : index
    %225 = vector.load %arg8[%c14_137, %c0_138, %c0_139] : memref<25x8x8xbf16, #tpu.memory_space<vmem>>, vector<1x8x8xbf16>
    %226 = vector.shape_cast %225 : vector<1x8x8xbf16> to vector<8x8xbf16>
    %cst_140 = arith.constant dense<0.000000e+00> : vector<8x512xf32>
    %227 = tpu.matmul %226, %224, %cst_140 {dimension_numbers = #tpu.dot_dimension_numbers<[1], [0], [0], [1], [0, 0, 1, 1], [], []>} : vector<8x8xbf16>, vector<8x512xbf16>, vector<8x512xf32> -> vector<8x512xf32>
    %228 = arith.addf %219, %227 : vector<8x512xf32>
    %c15 = arith.constant 15 : index
    %c0_141 = arith.constant 0 : index
    %229 = vector.load %arg2[%c15, %c0_141] : memref<25x512xf32, #tpu.memory_space<vmem>>, vector<1x512xf32>
    %c498_i32 = arith.constant 498 : i32
    %230 = tpu.dynamic_rotate %11 by %c498_i32 dim 1 : vector<8x512xf32>, i32 -> vector<8x512xf32>
    %231 = vector.broadcast %229 : vector<1x512xf32> to vector<8x512xf32>
    %232 = arith.mulf %230, %231 : vector<8x512xf32>
    %233 = arith.truncf %232 : vector<8x512xf32> to vector<8x512xbf16>
    %c15_142 = arith.constant 15 : index
    %c0_143 = arith.constant 0 : index
    %c0_144 = arith.constant 0 : index
    %234 = vector.load %arg8[%c15_142, %c0_143, %c0_144] : memref<25x8x8xbf16, #tpu.memory_space<vmem>>, vector<1x8x8xbf16>
    %235 = vector.shape_cast %234 : vector<1x8x8xbf16> to vector<8x8xbf16>
    %cst_145 = arith.constant dense<0.000000e+00> : vector<8x512xf32>
    %236 = tpu.matmul %235, %233, %cst_145 {dimension_numbers = #tpu.dot_dimension_numbers<[1], [0], [0], [1], [0, 0, 1, 1], [], []>} : vector<8x8xbf16>, vector<8x512xbf16>, vector<8x512xf32> -> vector<8x512xf32>
    %237 = arith.addf %228, %236 : vector<8x512xf32>
    %c16_146 = arith.constant 16 : index
    %c0_147 = arith.constant 0 : index
    %238 = vector.load %arg2[%c16_146, %c0_147] : memref<25x512xf32, #tpu.memory_space<vmem>>, vector<1x512xf32>
    %c497_i32_148 = arith.constant 497 : i32
    %239 = tpu.dynamic_rotate %11 by %c497_i32_148 dim 1 : vector<8x512xf32>, i32 -> vector<8x512xf32>
    %240 = vector.broadcast %238 : vector<1x512xf32> to vector<8x512xf32>
    %241 = arith.mulf %239, %240 : vector<8x512xf32>
    %242 = arith.truncf %241 : vector<8x512xf32> to vector<8x512xbf16>
    %c16_149 = arith.constant 16 : index
    %c0_150 = arith.constant 0 : index
    %c0_151 = arith.constant 0 : index
    %243 = vector.load %arg8[%c16_149, %c0_150, %c0_151] : memref<25x8x8xbf16, #tpu.memory_space<vmem>>, vector<1x8x8xbf16>
    %244 = vector.shape_cast %243 : vector<1x8x8xbf16> to vector<8x8xbf16>
    %cst_152 = arith.constant dense<0.000000e+00> : vector<8x512xf32>
    %245 = tpu.matmul %244, %242, %cst_152 {dimension_numbers = #tpu.dot_dimension_numbers<[1], [0], [0], [1], [0, 0, 1, 1], [], []>} : vector<8x8xbf16>, vector<8x512xbf16>, vector<8x512xf32> -> vector<8x512xf32>
    %246 = arith.addf %237, %245 : vector<8x512xf32>
    %c17_153 = arith.constant 17 : index
    %c0_154 = arith.constant 0 : index
    %247 = vector.load %arg2[%c17_153, %c0_154] : memref<25x512xf32, #tpu.memory_space<vmem>>, vector<1x512xf32>
    %c496_i32_155 = arith.constant 496 : i32
    %248 = tpu.dynamic_rotate %11 by %c496_i32_155 dim 1 : vector<8x512xf32>, i32 -> vector<8x512xf32>
    %249 = vector.broadcast %247 : vector<1x512xf32> to vector<8x512xf32>
    %250 = arith.mulf %248, %249 : vector<8x512xf32>
    %251 = arith.truncf %250 : vector<8x512xf32> to vector<8x512xbf16>
    %c17_156 = arith.constant 17 : index
    %c0_157 = arith.constant 0 : index
    %c0_158 = arith.constant 0 : index
    %252 = vector.load %arg8[%c17_156, %c0_157, %c0_158] : memref<25x8x8xbf16, #tpu.memory_space<vmem>>, vector<1x8x8xbf16>
    %253 = vector.shape_cast %252 : vector<1x8x8xbf16> to vector<8x8xbf16>
    %cst_159 = arith.constant dense<0.000000e+00> : vector<8x512xf32>
    %254 = tpu.matmul %253, %251, %cst_159 {dimension_numbers = #tpu.dot_dimension_numbers<[1], [0], [0], [1], [0, 0, 1, 1], [], []>} : vector<8x8xbf16>, vector<8x512xbf16>, vector<8x512xf32> -> vector<8x512xf32>
    %255 = arith.addf %246, %254 : vector<8x512xf32>
    %c18_160 = arith.constant 18 : index
    %c0_161 = arith.constant 0 : index
    %256 = vector.load %arg2[%c18_160, %c0_161] : memref<25x512xf32, #tpu.memory_space<vmem>>, vector<1x512xf32>
    %c495_i32_162 = arith.constant 495 : i32
    %257 = tpu.dynamic_rotate %11 by %c495_i32_162 dim 1 : vector<8x512xf32>, i32 -> vector<8x512xf32>
    %258 = vector.broadcast %256 : vector<1x512xf32> to vector<8x512xf32>
    %259 = arith.mulf %257, %258 : vector<8x512xf32>
    %260 = arith.truncf %259 : vector<8x512xf32> to vector<8x512xbf16>
    %c18_163 = arith.constant 18 : index
    %c0_164 = arith.constant 0 : index
    %c0_165 = arith.constant 0 : index
    %261 = vector.load %arg8[%c18_163, %c0_164, %c0_165] : memref<25x8x8xbf16, #tpu.memory_space<vmem>>, vector<1x8x8xbf16>
    %262 = vector.shape_cast %261 : vector<1x8x8xbf16> to vector<8x8xbf16>
    %cst_166 = arith.constant dense<0.000000e+00> : vector<8x512xf32>
    %263 = tpu.matmul %262, %260, %cst_166 {dimension_numbers = #tpu.dot_dimension_numbers<[1], [0], [0], [1], [0, 0, 1, 1], [], []>} : vector<8x8xbf16>, vector<8x512xbf16>, vector<8x512xf32> -> vector<8x512xf32>
    %264 = arith.addf %255, %263 : vector<8x512xf32>
    %c19 = arith.constant 19 : index
    %c0_167 = arith.constant 0 : index
    %265 = vector.load %arg2[%c19, %c0_167] : memref<25x512xf32, #tpu.memory_space<vmem>>, vector<1x512xf32>
    %c494_i32 = arith.constant 494 : i32
    %266 = tpu.dynamic_rotate %11 by %c494_i32 dim 1 : vector<8x512xf32>, i32 -> vector<8x512xf32>
    %267 = vector.broadcast %265 : vector<1x512xf32> to vector<8x512xf32>
    %268 = arith.mulf %266, %267 : vector<8x512xf32>
    %269 = arith.truncf %268 : vector<8x512xf32> to vector<8x512xbf16>
    %c19_168 = arith.constant 19 : index
    %c0_169 = arith.constant 0 : index
    %c0_170 = arith.constant 0 : index
    %270 = vector.load %arg8[%c19_168, %c0_169, %c0_170] : memref<25x8x8xbf16, #tpu.memory_space<vmem>>, vector<1x8x8xbf16>
    %271 = vector.shape_cast %270 : vector<1x8x8xbf16> to vector<8x8xbf16>
    %cst_171 = arith.constant dense<0.000000e+00> : vector<8x512xf32>
    %272 = tpu.matmul %271, %269, %cst_171 {dimension_numbers = #tpu.dot_dimension_numbers<[1], [0], [0], [1], [0, 0, 1, 1], [], []>} : vector<8x8xbf16>, vector<8x512xbf16>, vector<8x512xf32> -> vector<8x512xf32>
    %273 = arith.addf %264, %272 : vector<8x512xf32>
    %c20 = arith.constant 20 : index
    %c0_172 = arith.constant 0 : index
    %274 = vector.load %arg2[%c20, %c0_172] : memref<25x512xf32, #tpu.memory_space<vmem>>, vector<1x512xf32>
    %c482_i32 = arith.constant 482 : i32
    %275 = tpu.dynamic_rotate %11 by %c482_i32 dim 1 : vector<8x512xf32>, i32 -> vector<8x512xf32>
    %276 = vector.broadcast %274 : vector<1x512xf32> to vector<8x512xf32>
    %277 = arith.mulf %275, %276 : vector<8x512xf32>
    %278 = arith.truncf %277 : vector<8x512xf32> to vector<8x512xbf16>
    %c20_173 = arith.constant 20 : index
    %c0_174 = arith.constant 0 : index
    %c0_175 = arith.constant 0 : index
    %279 = vector.load %arg8[%c20_173, %c0_174, %c0_175] : memref<25x8x8xbf16, #tpu.memory_space<vmem>>, vector<1x8x8xbf16>
    %280 = vector.shape_cast %279 : vector<1x8x8xbf16> to vector<8x8xbf16>
    %cst_176 = arith.constant dense<0.000000e+00> : vector<8x512xf32>
    %281 = tpu.matmul %280, %278, %cst_176 {dimension_numbers = #tpu.dot_dimension_numbers<[1], [0], [0], [1], [0, 0, 1, 1], [], []>} : vector<8x8xbf16>, vector<8x512xbf16>, vector<8x512xf32> -> vector<8x512xf32>
    %282 = arith.addf %273, %281 : vector<8x512xf32>
    %c21 = arith.constant 21 : index
    %c0_177 = arith.constant 0 : index
    %283 = vector.load %arg2[%c21, %c0_177] : memref<25x512xf32, #tpu.memory_space<vmem>>, vector<1x512xf32>
    %c481_i32 = arith.constant 481 : i32
    %284 = tpu.dynamic_rotate %11 by %c481_i32 dim 1 : vector<8x512xf32>, i32 -> vector<8x512xf32>
    %285 = vector.broadcast %283 : vector<1x512xf32> to vector<8x512xf32>
    %286 = arith.mulf %284, %285 : vector<8x512xf32>
    %287 = arith.truncf %286 : vector<8x512xf32> to vector<8x512xbf16>
    %c21_178 = arith.constant 21 : index
    %c0_179 = arith.constant 0 : index
    %c0_180 = arith.constant 0 : index
    %288 = vector.load %arg8[%c21_178, %c0_179, %c0_180] : memref<25x8x8xbf16, #tpu.memory_space<vmem>>, vector<1x8x8xbf16>
    %289 = vector.shape_cast %288 : vector<1x8x8xbf16> to vector<8x8xbf16>
    %cst_181 = arith.constant dense<0.000000e+00> : vector<8x512xf32>
    %290 = tpu.matmul %289, %287, %cst_181 {dimension_numbers = #tpu.dot_dimension_numbers<[1], [0], [0], [1], [0, 0, 1, 1], [], []>} : vector<8x8xbf16>, vector<8x512xbf16>, vector<8x512xf32> -> vector<8x512xf32>
    %291 = arith.addf %282, %290 : vector<8x512xf32>
    %c22 = arith.constant 22 : index
    %c0_182 = arith.constant 0 : index
    %292 = vector.load %arg2[%c22, %c0_182] : memref<25x512xf32, #tpu.memory_space<vmem>>, vector<1x512xf32>
    %c480_i32 = arith.constant 480 : i32
    %293 = tpu.dynamic_rotate %11 by %c480_i32 dim 1 : vector<8x512xf32>, i32 -> vector<8x512xf32>
    %294 = vector.broadcast %292 : vector<1x512xf32> to vector<8x512xf32>
    %295 = arith.mulf %293, %294 : vector<8x512xf32>
    %296 = arith.truncf %295 : vector<8x512xf32> to vector<8x512xbf16>
    %c22_183 = arith.constant 22 : index
    %c0_184 = arith.constant 0 : index
    %c0_185 = arith.constant 0 : index
    %297 = vector.load %arg8[%c22_183, %c0_184, %c0_185] : memref<25x8x8xbf16, #tpu.memory_space<vmem>>, vector<1x8x8xbf16>
    %298 = vector.shape_cast %297 : vector<1x8x8xbf16> to vector<8x8xbf16>
    %cst_186 = arith.constant dense<0.000000e+00> : vector<8x512xf32>
    %299 = tpu.matmul %298, %296, %cst_186 {dimension_numbers = #tpu.dot_dimension_numbers<[1], [0], [0], [1], [0, 0, 1, 1], [], []>} : vector<8x8xbf16>, vector<8x512xbf16>, vector<8x512xf32> -> vector<8x512xf32>
    %300 = arith.addf %291, %299 : vector<8x512xf32>
    %c23 = arith.constant 23 : index
    %c0_187 = arith.constant 0 : index
    %301 = vector.load %arg2[%c23, %c0_187] : memref<25x512xf32, #tpu.memory_space<vmem>>, vector<1x512xf32>
    %c479_i32 = arith.constant 479 : i32
    %302 = tpu.dynamic_rotate %11 by %c479_i32 dim 1 : vector<8x512xf32>, i32 -> vector<8x512xf32>
    %303 = vector.broadcast %301 : vector<1x512xf32> to vector<8x512xf32>
    %304 = arith.mulf %302, %303 : vector<8x512xf32>
    %305 = arith.truncf %304 : vector<8x512xf32> to vector<8x512xbf16>
    %c23_188 = arith.constant 23 : index
    %c0_189 = arith.constant 0 : index
    %c0_190 = arith.constant 0 : index
    %306 = vector.load %arg8[%c23_188, %c0_189, %c0_190] : memref<25x8x8xbf16, #tpu.memory_space<vmem>>, vector<1x8x8xbf16>
    %307 = vector.shape_cast %306 : vector<1x8x8xbf16> to vector<8x8xbf16>
    %cst_191 = arith.constant dense<0.000000e+00> : vector<8x512xf32>
    %308 = tpu.matmul %307, %305, %cst_191 {dimension_numbers = #tpu.dot_dimension_numbers<[1], [0], [0], [1], [0, 0, 1, 1], [], []>} : vector<8x8xbf16>, vector<8x512xbf16>, vector<8x512xf32> -> vector<8x512xf32>
    %309 = arith.addf %300, %308 : vector<8x512xf32>
    %c24 = arith.constant 24 : index
    %c0_192 = arith.constant 0 : index
    %310 = vector.load %arg2[%c24, %c0_192] : memref<25x512xf32, #tpu.memory_space<vmem>>, vector<1x512xf32>
    %c478_i32 = arith.constant 478 : i32
    %311 = tpu.dynamic_rotate %11 by %c478_i32 dim 1 : vector<8x512xf32>, i32 -> vector<8x512xf32>
    %312 = vector.broadcast %310 : vector<1x512xf32> to vector<8x512xf32>
    %313 = arith.mulf %311, %312 : vector<8x512xf32>
    %314 = arith.truncf %313 : vector<8x512xf32> to vector<8x512xbf16>
    %c24_193 = arith.constant 24 : index
    %c0_194 = arith.constant 0 : index
    %c0_195 = arith.constant 0 : index
    %315 = vector.load %arg8[%c24_193, %c0_194, %c0_195] : memref<25x8x8xbf16, #tpu.memory_space<vmem>>, vector<1x8x8xbf16>
    %316 = vector.shape_cast %315 : vector<1x8x8xbf16> to vector<8x8xbf16>
    %cst_196 = arith.constant dense<0.000000e+00> : vector<8x512xf32>
    %317 = tpu.matmul %316, %314, %cst_196 {dimension_numbers = #tpu.dot_dimension_numbers<[1], [0], [0], [1], [0, 0, 1, 1], [], []>} : vector<8x8xbf16>, vector<8x512xbf16>, vector<8x512xf32> -> vector<8x512xf32>
    %318 = arith.addf %309, %317 : vector<8x512xf32>
    %c0_197 = arith.constant 0 : index
    %c0_198 = arith.constant 0 : index
    %319 = vector.load %arg9[%c0_197, %c0_198] : memref<8x1xf32, #tpu.memory_space<vmem>>, vector<8x1xf32>
    %320 = vector.broadcast %319 : vector<8x1xf32> to vector<8x512xf32>
    %321 = arith.addf %318, %320 : vector<8x512xf32>
    %cst_199 = arith.constant 0.000000e+00 : f32
    %322 = vector.broadcast %cst_199 : f32 to vector<8x512xf32>
    %323 = arith.maximumf %321, %322 : vector<8x512xf32>
    %c0_200 = arith.constant 0 : index
    %c0_201 = arith.constant 0 : index
    %324 = vector.load %arg3[%c0_200, %c0_201] : memref<4x512xf32, #tpu.memory_space<vmem>>, vector<4x512xf32>
    %c1_i32_202 = arith.constant 1 : i32
    %325 = tpu.dynamic_rotate %0 by %c1_i32_202 dim 1 : vector<4x512xf32>, i32 -> vector<4x512xf32>
    %326 = vector.extract_strided_slice %324 {offsets = [0, 0], sizes = [1, 512], strides = [1, 1]} : vector<4x512xf32> to vector<1x512xf32>
    %327 = vector.broadcast %326 : vector<1x512xf32> to vector<4x512xf32>
    %328 = arith.addf %325, %327 : vector<4x512xf32>
    %329 = arith.maximumf %0, %328 : vector<4x512xf32>
    %c511_i32_203 = arith.constant 511 : i32
    %330 = tpu.dynamic_rotate %0 by %c511_i32_203 dim 1 : vector<4x512xf32>, i32 -> vector<4x512xf32>
    %331 = vector.extract_strided_slice %324 {offsets = [1, 0], sizes = [1, 512], strides = [1, 1]} : vector<4x512xf32> to vector<1x512xf32>
    %332 = vector.broadcast %331 : vector<1x512xf32> to vector<4x512xf32>
    %333 = arith.addf %330, %332 : vector<4x512xf32>
    %334 = arith.maximumf %329, %333 : vector<4x512xf32>
    %c16_i32_204 = arith.constant 16 : i32
    %335 = tpu.dynamic_rotate %334 by %c16_i32_204 dim 1 : vector<4x512xf32>, i32 -> vector<4x512xf32>
    %336 = vector.extract_strided_slice %324 {offsets = [2, 0], sizes = [1, 512], strides = [1, 1]} : vector<4x512xf32> to vector<1x512xf32>
    %337 = vector.broadcast %336 : vector<1x512xf32> to vector<4x512xf32>
    %338 = arith.addf %335, %337 : vector<4x512xf32>
    %339 = arith.maximumf %334, %338 : vector<4x512xf32>
    %c496_i32_205 = arith.constant 496 : i32
    %340 = tpu.dynamic_rotate %334 by %c496_i32_205 dim 1 : vector<4x512xf32>, i32 -> vector<4x512xf32>
    %341 = vector.extract_strided_slice %324 {offsets = [3, 0], sizes = [1, 512], strides = [1, 1]} : vector<4x512xf32> to vector<1x512xf32>
    %342 = vector.broadcast %341 : vector<1x512xf32> to vector<4x512xf32>
    %343 = arith.addf %340, %342 : vector<4x512xf32>
    %344 = arith.maximumf %339, %343 : vector<4x512xf32>
    %c0_206 = arith.constant 0 : index
    %c0_207 = arith.constant 0 : index
    %345 = vector.load %arg10[%c0_206, %c0_207] : memref<8x4xbf16, #tpu.memory_space<vmem>>, vector<8x4xbf16>
    %346 = arith.truncf %344 : vector<4x512xf32> to vector<4x512xbf16>
    %cst_208 = arith.constant dense<0.000000e+00> : vector<8x512xf32>
    %347 = tpu.matmul %345, %346, %cst_208 {dimension_numbers = #tpu.dot_dimension_numbers<[1], [0], [0], [1], [0, 0, 1, 1], [], []>} : vector<8x4xbf16>, vector<4x512xbf16>, vector<8x512xf32> -> vector<8x512xf32>
    %c0_209 = arith.constant 0 : index
    %c0_210 = arith.constant 0 : index
    %348 = vector.load %arg11[%c0_209, %c0_210] : memref<8x1xf32, #tpu.memory_space<vmem>>, vector<8x1xf32>
    %349 = vector.broadcast %348 : vector<8x1xf32> to vector<8x512xf32>
    %350 = arith.addf %347, %349 : vector<8x512xf32>
    %cst_211 = arith.constant 0.000000e+00 : f32
    %351 = vector.broadcast %cst_211 : f32 to vector<8x512xf32>
    %352 = arith.maximumf %350, %351 : vector<8x512xf32>
    %c0_212 = arith.constant 0 : index
    %c0_213 = arith.constant 0 : index
    %353 = vector.load %arg12[%c0_212, %c0_213] : memref<32x512xf32, #tpu.memory_space<vmem>>, vector<8x512xf32>
    tpu.vector_store %arg12[%c0_212, %c0_213], %9 {strides = array<i32>} : memref<32x512xf32, #tpu.memory_space<vmem>>, vector<8x512xf32>,
    %c8_214 = arith.constant 8 : index
    %c0_215 = arith.constant 0 : index
    %354 = vector.load %arg12[%c8_214, %c0_215] : memref<32x512xf32, #tpu.memory_space<vmem>>, vector<8x512xf32>
    tpu.vector_store %arg12[%c8_214, %c0_215], %95 {strides = array<i32>} : memref<32x512xf32, #tpu.memory_space<vmem>>, vector<8x512xf32>,
    %c16_216 = arith.constant 16 : index
    %c0_217 = arith.constant 0 : index
    %355 = vector.load %arg12[%c16_216, %c0_217] : memref<32x512xf32, #tpu.memory_space<vmem>>, vector<8x512xf32>
    tpu.vector_store %arg12[%c16_216, %c0_217], %323 {strides = array<i32>} : memref<32x512xf32, #tpu.memory_space<vmem>>, vector<8x512xf32>,
    %c24_218 = arith.constant 24 : index
    %c0_219 = arith.constant 0 : index
    %356 = vector.load %arg12[%c24_218, %c0_219] : memref<32x512xf32, #tpu.memory_space<vmem>>, vector<8x512xf32>
    tpu.vector_store %arg12[%c24_218, %c0_219], %352 {strides = array<i32>} : memref<32x512xf32, #tpu.memory_space<vmem>>, vector<8x512xf32>,
    return
  }
  func.func @transform_0(%arg0: i32) -> (i32, i32) {
    %c0_i32 = arith.constant 0 : i32
    %c0_i32_0 = arith.constant 0 : i32
    %c0_i32_1 = arith.constant 0 : i32
    return %c0_i32, %c0_i32_0 : i32, i32
  }
  func.func @transform_1(%arg0: i32) -> (i32, i32) {
    %c0_i32 = arith.constant 0 : i32
    %c0_i32_0 = arith.constant 0 : i32
    %c0_i32_1 = arith.constant 0 : i32
    return %c0_i32, %c0_i32_0 : i32, i32
  }
  func.func @transform_2(%arg0: i32) -> (i32, i32) {
    %c0_i32 = arith.constant 0 : i32
    %c0_i32_0 = arith.constant 0 : i32
    %c0_i32_1 = arith.constant 0 : i32
    return %c0_i32, %c0_i32_0 : i32, i32
  }
  func.func @transform_3(%arg0: i32) -> (i32, i32) {
    %c0_i32 = arith.constant 0 : i32
    %c0_i32_0 = arith.constant 0 : i32
    %c0_i32_1 = arith.constant 0 : i32
    return %c0_i32, %c0_i32_0 : i32, i32
  }
  func.func @transform_4(%arg0: i32) -> (i32, i32) {
    %c0_i32 = arith.constant 0 : i32
    %c0_i32_0 = arith.constant 0 : i32
    %c0_i32_1 = arith.constant 0 : i32
    return %c0_i32, %c0_i32_0 : i32, i32
  }
  func.func @transform_5(%arg0: i32) -> (i32, i32, i32) {
    %c0_i32 = arith.constant 0 : i32
    %c0_i32_0 = arith.constant 0 : i32
    %c0_i32_1 = arith.constant 0 : i32
    %c0_i32_2 = arith.constant 0 : i32
    return %c0_i32, %c0_i32_0, %c0_i32_1 : i32, i32, i32
  }
  func.func @transform_6(%arg0: i32) -> (i32, i32) {
    %c0_i32 = arith.constant 0 : i32
    %c0_i32_0 = arith.constant 0 : i32
    %c0_i32_1 = arith.constant 0 : i32
    return %c0_i32, %c0_i32_0 : i32, i32
  }
  func.func @transform_7(%arg0: i32) -> (i32, i32, i32) {
    %c0_i32 = arith.constant 0 : i32
    %c0_i32_0 = arith.constant 0 : i32
    %c0_i32_1 = arith.constant 0 : i32
    %c0_i32_2 = arith.constant 0 : i32
    return %c0_i32, %c0_i32_0, %c0_i32_1 : i32, i32, i32
  }
  func.func @transform_8(%arg0: i32) -> (i32, i32) {
    %c0_i32 = arith.constant 0 : i32
    %c0_i32_0 = arith.constant 0 : i32
    %c0_i32_1 = arith.constant 0 : i32
    return %c0_i32, %c0_i32_0 : i32, i32
  }
  func.func @transform_9(%arg0: i32) -> (i32, i32) {
    %c0_i32 = arith.constant 0 : i32
    %c0_i32_0 = arith.constant 0 : i32
    %c0_i32_1 = arith.constant 0 : i32
    return %c0_i32, %c0_i32_0 : i32, i32
  }
  func.func @transform_10(%arg0: i32) -> (i32, i32) {
    %c0_i32 = arith.constant 0 : i32
    %c0_i32_0 = arith.constant 0 : i32
    %c0_i32_1 = arith.constant 0 : i32
    return %c0_i32, %c0_i32_0 : i32, i32
  }
  func.func @transform_11(%arg0: i32) -> (i32, i32) {
    %c0_i32 = arith.constant 0 : i32
    %c0_i32_0 = arith.constant 0 : i32
    %c0_i32_1 = arith.constant 0 : i32
    return %c0_i32, %c0_i32_0 : i32, i32
  }
}

</mosaic_0001>

<llo_original>
// kernel: tpu_custom_call.1
$region0: #{tpu_custom_call.1}
  #allocation0 [shape = 'u32[]', space=smem, size = 0x4, offset = 0x4, fixed_abs, tag = 'smem constant byte address 0x4 - core index']
  #allocation1 [shape = 'u32[144,128]{1,0:T(1,128)}', space=vmem, size = 0x12000, scoped, tag = 'internal scratch']
  %s0 = inlined_call_operand.vmem [shape: f32[4,512], index: 0, kind: input, shape index: {}]
  %s1 = inlined_call_operand.vmem [shape: f32[25,512], index: 1, kind: input, shape index: {}]
  %s2 = inlined_call_operand.vmem [shape: f32[4,512], index: 2, kind: input, shape index: {}]
  %s3 = inlined_call_operand.vmem [shape: bf16[24,4], index: 3, kind: input, shape index: {}]
  %s4 = inlined_call_operand.vmem [shape: f32[24,1], index: 4, kind: input, shape index: {}]
  %s5 = inlined_call_operand.vmem [shape: bf16[9,8,8], index: 5, kind: input, shape index: {}]
  %s6 = inlined_call_operand.vmem [shape: f32[8,1], index: 6, kind: input, shape index: {}]
  %s7 = inlined_call_operand.vmem [shape: bf16[25,8,8], index: 7, kind: input, shape index: {}]
  %s8 = inlined_call_operand.vmem [shape: f32[8,1], index: 8, kind: input, shape index: {}]
  %s9 = inlined_call_operand.vmem [shape: bf16[8,4], index: 9, kind: input, shape index: {}]
  %s10 = inlined_call_operand.vmem [shape: f32[8,1], index: 10, kind: input, shape index: {}]
  %s11 = inlined_call_operand.hbm [shape: f32[32,512], index: 11, kind: output, shape index: {}]
  %s12 = sld [smem:[#allocation0]]
  $region54: #{tpu_custom_call.1} parent=0
    _
  %s14 = ssub.s32 1, %s12
  %s15 = scalar_select 0, %s14, %s12
  $region1: #{tpu_custom_call.1} parent=0
    #allocation2 [shape = 'u8[65536]{0}', space=vmem, size = 0x10000, scoped, tag = 'output window, operand 0, single buffered']
    #allocation3 [shape = 's32[1]{0}', space=sflag, size = 0x4, scoped, tag = 'scoped memory for tpu_custom_call.1']
    %16 = vsyncpa [#allocation3], 0
    // Predicated region
    $region2: #{tpu_custom_call.1} parent=1 // pred_check
      _
    $region3: #{tpu_custom_call.1} parent=1 // pred_check_branch
      %18 = sbr.rel (0) target = $region5
    $region4: #{tpu_custom_call.1} parent=1 // pred_region
      _
    $region5: #{tpu_custom_call.1} parent=1 // pred_fallthru
      _
    // Predicated region
    $region6: #{tpu_custom_call.1} parent=1 // pred_check
      _
    $region7: #{tpu_custom_call.1} parent=1 // pred_check_branch
      %20 = sbr.rel (0) target = $region9
    $region8: #{tpu_custom_call.1} parent=1 // pred_region
      _
    $region9: #{tpu_custom_call.1} parent=1 // pred_fallthru
      _
    // Predicated region
    $region10: #{tpu_custom_call.1} parent=1 // pred_check
      _
    $region11: #{tpu_custom_call.1} parent=1 // pred_check_branch
      %22 = sbr.rel (0) target = $region13
    $region12: #{tpu_custom_call.1} parent=1 // pred_region
      _
    $region13: #{tpu_custom_call.1} parent=1 // pred_fallthru
      _
    // Predicated region
    $region14: #{tpu_custom_call.1} parent=1 // pred_check
      _
    $region15: #{tpu_custom_call.1} parent=1 // pred_check_branch
      %24 = sbr.rel (0) target = $region17
    $region16: #{tpu_custom_call.1} parent=1 // pred_region
      _
    $region17: #{tpu_custom_call.1} parent=1 // pred_fallthru
      _
    // Predicated region
    $region18: #{tpu_custom_call.1} parent=1 // pred_check
      _
    $region19: #{tpu_custom_call.1} parent=1 // pred_check_branch
      %26 = sbr.rel (0) target = $region21
    $region20: #{tpu_custom_call.1} parent=1 // pred_region
      _
    $region21: #{tpu_custom_call.1} parent=1 // pred_fallthru
      _
    // Predicated region
    $region22: #{tpu_custom_call.1} parent=1 // pred_check
      _
    $region23: #{tpu_custom_call.1} parent=1 // pred_check_branch
      %28 = sbr.rel (0) target = $region25
    $region24: #{tpu_custom_call.1} parent=1 // pred_region
      _
    $region25: #{tpu_custom_call.1} parent=1 // pred_fallthru
      _
    // Predicated region
    $region26: #{tpu_custom_call.1} parent=1 // pred_check
      _
    $region27: #{tpu_custom_call.1} parent=1 // pred_check_branch
      %30 = sbr.rel (0) target = $region29
    $region28: #{tpu_custom_call.1} parent=1 // pred_region
      _
    $region29: #{tpu_custom_call.1} parent=1 // pred_fallthru
      _
    // Predicated region
    $region30: #{tpu_custom_call.1} parent=1 // pred_check
      _
    $region31: #{tpu_custom_call.1} parent=1 // pred_check_branch
      %32 = sbr.rel (0) target = $region33
    $region32: #{tpu_custom_call.1} parent=1 // pred_region
      _
    $region33: #{tpu_custom_call.1} parent=1 // pred_fallthru
      _
    // Predicated region
    $region34: #{tpu_custom_call.1} parent=1 // pred_check
      _
    $region35: #{tpu_custom_call.1} parent=1 // pred_check_branch
      %34 = sbr.rel (0) target = $region37
    $region36: #{tpu_custom_call.1} parent=1 // pred_region
      _
    $region37: #{tpu_custom_call.1} parent=1 // pred_fallthru
      _
    // Predicated region
    $region38: #{tpu_custom_call.1} parent=1 // pred_check
      _
    $region39: #{tpu_custom_call.1} parent=1 // pred_check_branch
      %36 = sbr.rel (0) target = $region41
    $region40: #{tpu_custom_call.1} parent=1 // pred_region
      _
    $region41: #{tpu_custom_call.1} parent=1 // pred_fallthru
      _
    // Predicated region
    $region42: #{tpu_custom_call.1} parent=1 // pred_check
      _
    $region43: #{tpu_custom_call.1} parent=1 // pred_check_branch
      %38 = sbr.rel (0) target = $region45
    $region44: #{tpu_custom_call.1} parent=1 // pred_region
      _
    $region45: #{tpu_custom_call.1} parent=1 // pred_fallthru
      _
    %v40 = vld [vmem:[%s0] sm:$0xff]
    %v41 = vld [vmem:[%s0 + $0x8] sm:$0xff]
    %v44 = vcombine.high %v40, %v40
    %v45 = vcombine.high %v41, %v41
    %v48 = vpack.c.bf16 %v40, %v40
    %v49 = vpack.c.bf16 %v44, %v44
    %v50 = vpack.c.bf16 %v41, %v41
    %v51 = vpack.c.bf16 %v45, %v45
    %v52 = vld [vmem:[%s3] sm:$0xf]
    %v53 = vld [vmem:[%s3 + $0x4] sm:$0xf]
    %v54 = vld [vmem:[%s3 + $0x8] sm:$0xf]
    %v55 = vld [vmem:[%s4] sm:$0xff]
    %v56 = vld [vmem:[%s4 + $0x8] sm:$0xff]
    %v57 = vld [vmem:[%s4 + $0x10] sm:$0xff]
    %59 = vset.pattern.permute.xlu0 0
    %60 = vperm.xlu0 %59, %v55
    %v61 = vpop.permute.xlu0 %60
    %64 = vset.pattern.permute.xlu0 0
    %65 = vperm.xlu0 %64, %v56
    %v66 = vpop.permute.xlu0 %65
    %69 = vset.pattern.permute.xlu0 0
    %70 = vperm.xlu0 %69, %v57
    %v71 = vpop.permute.xlu0 %70
    %v76 = vunpack.c.l.b16 %v52
    %v77 = vunpack.c.l.b16 %v53
    %v78 = vunpack.c.l.b16 %v54
    %v79 = vpack.c.b16 %v77, %v76
    %v80 = vpack.c.b16 %v78, %v78
    %vm81 = vcmask 31744
    %v83 = vsel %vm81, %v79, 0
    %v86 = vsel %vm81, %v80, 0
    %vm88 = vcmask 1041408
    %v90 = vsel %vm88, %v48, 0
    %v93 = vsel %vm88, %v49, 0
    %v96 = vsel %vm88, %v50, 0
    %v99 = vsel %vm88, %v51, 0
    %101 = vmatprep.subr.bf16.mxu0 %v93
    %102 = vmatpush1.bf16.msra.mxu0 %v90
    %103 = vmatprep.subr.bf16.mxu0 0
    %104 = vmatpush1.bf16.msra.mxu0 0
    %105 = vmatprep.subr.bf16.mxu0 0
    %106 = vmatpush1.bf16.msra.mxu0 0
    %107 = vmatprep.subr.bf16.mxu0 0
    %108 = vmatpush1.bf16.msra.mxu0 0
    %109 = vmatprep.subr.bf16.mxu0 0
    %110 = vmatpush1.bf16.msra.mxu0 0
    %111 = vmatprep.subr.bf16.mxu0 0
    %112 = vmatpush1.bf16.msra.mxu0 0
    %113 = vmatprep.subr.bf16.mxu0 0
    %114 = vmatpush1.bf16.msra.mxu0 0
    %115 = vmatprep.subr.bf16.mxu0 0
    %116 = vmatpush1.bf16.msra.mxu0 0
    %117 = vmatprep.subr.bf16.mxu0 0
    %118 = vmatpush1.bf16.msra.mxu0 0
    %119 = vmatprep.subr.bf16.mxu0 0
    %120 = vmatpush1.bf16.msra.mxu0 0
    %121 = vmatprep.subr.bf16.mxu0 0
    %122 = vmatpush1.bf16.msra.mxu0 0
    %123 = vmatprep.subr.bf16.mxu0 0
    %124 = vmatpush1.bf16.msra.mxu0 0
    %125 = vmatprep.subr.bf16.mxu0 0
    %126 = vmatpush1.bf16.msra.mxu0 0
    %127 = vmatprep.subr.bf16.mxu0 0
    %128 = vmatpush1.bf16.msra.mxu0 0
    %129 = vmatprep.subr.bf16.mxu0 0
    %130 = vmatpush1.bf16.msra.mxu0 0
    %131 = vmatprep.subr.bf16.mxu0 0
    %132 = vmatpush1.bf16.msra.mxu0 0
    %133 = vmatprep.mubr.bf16.mxu0 0
    %134 = vmatmul.mubr.bf16.gmra.mrb[0].mxu0 %v83
    %v135 = vpop.f32.mrb[0].mxu0
    %v136 = vadd.f32 %v61, %v135
    %v137 = vpop.f32.mrb[0].mxu0
    %v138 = vadd.f32 %v61, %v137
    %v139 = vpop.f32.mrb[0].mxu0
    %v140 = vadd.f32 %v66, %v139
    %v141 = vpop.f32.mrb[0].mxu0
    %v142 = vadd.f32 %v66, %v141
    %143 = vmatprep.mubr.bf16.mxu0 0
    %144 = vmatmul.mubr.bf16.gmra.mrb[0].mxu0 %v86
    %v145 = vpop.f32.mrb[0].mxu0
    %v146 = vadd.f32 %v71, %v145
    %v147 = vpop.f32.mrb[0].mxu0
    %v148 = vadd.f32 %v71, %v147
    %v149 = vpop.f32.mrb[0].mxu0
    %v150 = vpop.f32.mrb[0].mxu0
    %151 = vdwg.mxu0
    %152 = vmatprep.subr.bf16.mxu0 %v99
    %153 = vmatpush1.bf16.msra.mxu0 %v96
    %154 = vmatprep.subr.bf16.mxu0 0
    %155 = vmatpush1.bf16.msra.mxu0 0
    %156 = vmatprep.subr.bf16.mxu0 0
    %157 = vmatpush1.bf16.msra.mxu0 0
    %158 = vmatprep.subr.bf16.mxu0 0
    %159 = vmatpush1.bf16.msra.mxu0 0
    %160 = vmatprep.subr.bf16.mxu0 0
    %161 = vmatpush1.bf16.msra.mxu0 0
    %162 = vmatprep.subr.bf16.mxu0 0
    %163 = vmatpush1.bf16.msra.mxu0 0
    %164 = vmatprep.subr.bf16.mxu0 0
    %165 = vmatpush1.bf16.msra.mxu0 0
    %166 = vmatprep.subr.bf16.mxu0 0
    %167 = vmatpush1.bf16.msra.mxu0 0
    %168 = vmatprep.subr.bf16.mxu0 0
    %169 = vmatpush1.bf16.msra.mxu0 0
    %170 = vmatprep.subr.bf16.mxu0 0
    %171 = vmatpush1.bf16.msra.mxu0 0
    %172 = vmatprep.subr.bf16.mxu0 0
    %173 = vmatpush1.bf16.msra.mxu0 0
    %174 = vmatprep.subr.bf16.mxu0 0
    %175 = vmatpush1.bf16.msra.mxu0 0
    %176 = vmatprep.subr.bf16.mxu0 0
    %177 = vmatpush1.bf16.msra.mxu0 0
    %178 = vmatprep.subr.bf16.mxu0 0
    %179 = vmatpush1.bf16.msra.mxu0 0
    %180 = vmatprep.subr.bf16.mxu0 0
    %181 = vmatpush1.bf16.msra.mxu0 0
    %182 = vmatprep.subr.bf16.mxu0 0
    %183 = vmatpush1.bf16.msra.mxu0 0
    %184 = vmatprep.mubr.bf16.mxu0 0
    %185 = vmatmul.mubr.bf16.gmra.mrb[0].mxu0 %v83
    %v186 = vpop.f32.mrb[0].mxu0
    %v187 = vadd.f32 %v61, %v186
    %v188 = vpop.f32.mrb[0].mxu0
    %v189 = vadd.f32 %v61, %v188
    %v190 = vpop.f32.mrb[0].mxu0
    %v191 = vadd.f32 %v66, %v190
    %v192 = vpop.f32.mrb[0].mxu0
    %v193 = vadd.f32 %v66, %v192
    %194 = vmatprep.mubr.bf16.mxu0 0
    %195 = vmatmul.mubr.bf16.gmra.mrb[0].mxu0 %v86
    %v196 = vpop.f32.mrb[0].mxu0
    %v197 = vadd.f32 %v71, %v196
    %v198 = vpop.f32.mrb[0].mxu0
    %v199 = vadd.f32 %v71, %v198
    %v200 = vpop.f32.mrb[0].mxu0
    %v201 = vpop.f32.mrb[0].mxu0
    %202 = vdwg.mxu0
    %v203 = vmax.f32 %v136, 0.0
    %v204 = vmax.f32 %v138, 0.0
    %v205 = vmax.f32 %v187, 0.0
    %v206 = vmax.f32 %v189, 0.0
    %v207 = vmax.f32 %v140, 0.0
    %v208 = vmax.f32 %v142, 0.0
    %v209 = vmax.f32 %v191, 0.0
    %v210 = vmax.f32 %v193, 0.0
    %v211 = vmax.f32 %v146, 0.0
    %v212 = vmax.f32 %v148, 0.0
    %v213 = vmax.f32 %v197, 0.0
    %v214 = vmax.f32 %v199, 0.0
    %s215 = scalar_lea.vmem %s1, 6
    %v216 = vld [vmem:[%s215] ss:$8 sm:$0xf]
    %217 = vrot.lane.b32.xlu0 %v207, 17
    %v218 = vpop.permute.xlu0 %217
    %219 = vrot.lane.b32.xlu0 %v208, 17
    %v220 = vpop.permute.xlu0 %219
    %221 = vrot.lane.b32.xlu0 %v209, 17
    %v222 = vpop.permute.xlu0 %221
    %223 = vrot.lane.b32.xlu0 %v210, 17
    %v224 = vpop.permute.xlu0 %223
    %v225 = vlaneseq
    %v226 = vand.u32 %v225, 127
    %vm227 = vcmp.lt.s32.totalorder %v226, 17
    %v228 = vsel %vm227, %v222, %v224
    %v229 = vsel %vm227, %v220, %v222
    %v230 = vsel %vm227, %v218, %v220
    %v231 = vsel %vm227, %v224, %v218
    %v233 = vlaneseq
    %v234 = vshrl.u32 %v233, 7
    %v235 = vsub.s32 0, %v234
    %v236 = vrot.slane %v216, %v235
    %v237 = vlaneseq
    %v238 = vshrl.u32 %v237, 7
    %v239 = vsub.s32 1, %v238
    %v240 = vrot.slane %v216, %v239
    %v241 = vlaneseq
    %v242 = vshrl.u32 %v241, 7
    %v243 = vsub.s32 2, %v242
    %v244 = vrot.slane %v216, %v243
    %v245 = vlaneseq
    %v246 = vshrl.u32 %v245, 7
    %v247 = vsub.s32 3, %v246
    %v248 = vrot.slane %v216, %v247
    %v253 = vmul.f32 %v231, %v236
    %v254 = vmul.f32 %v230, %v240
    %v255 = vmul.f32 %v229, %v244
    %v256 = vmul.f32 %v228, %v248
    %v257 = vpack.c.bf16 %v253, %v253
    %v258 = vpack.c.bf16 %v254, %v254
    %v259 = vpack.c.bf16 %v255, %v255
    %v260 = vpack.c.bf16 %v256, %v256
    %v261 = vld [vmem:[%s5] sm:$0xf]
    %s262 = scalar_lea.vmem %s1, 7
    %v263 = vld [vmem:[%s262] ss:$8 sm:$0xf]
    %264 = vrot.lane.b32.xlu0 %v207, 16
    %v265 = vpop.permute.xlu0 %264
    %266 = vrot.lane.b32.xlu0 %v208, 16
    %v267 = vpop.permute.xlu0 %266
    %268 = vrot.lane.b32.xlu0 %v209, 16
    %v269 = vpop.permute.xlu0 %268
    %270 = vrot.lane.b32.xlu0 %v210, 16
    %v271 = vpop.permute.xlu0 %270
    %vm272 = vcmp.lt.s32.totalorder %v226, 16
    %v273 = vsel %vm272, %v269, %v271
    %v274 = vsel %vm272, %v267, %v269
    %v275 = vsel %vm272, %v265, %v267
    %v276 = vsel %vm272, %v271, %v265
    %v278 = vlaneseq
    %v279 = vshrl.u32 %v278, 7
    %v280 = vsub.s32 0, %v279
    %v281 = vrot.slane %v263, %v280
    %v282 = vlaneseq
    %v283 = vshrl.u32 %v282, 7
    %v284 = vsub.s32 1, %v283
    %v285 = vrot.slane %v263, %v284
    %v286 = vlaneseq
    %v287 = vshrl.u32 %v286, 7
    %v288 = vsub.s32 2, %v287
    %v289 = vrot.slane %v263, %v288
    %v290 = vlaneseq
    %v291 = vshrl.u32 %v290, 7
    %v292 = vsub.s32 3, %v291
    %v293 = vrot.slane %v263, %v292
    %v298 = vmul.f32 %v276, %v281
    %v299 = vmul.f32 %v275, %v285
    %v300 = vmul.f32 %v274, %v289
    %v301 = vmul.f32 %v273, %v293
    %v302 = vpack.c.bf16 %v298, %v298
    %v303 = vpack.c.bf16 %v299, %v299
    %v304 = vpack.c.bf16 %v300, %v300
    %v305 = vpack.c.bf16 %v301, %v301
    %s306 = scalar_lea.vmem %s5, 4
    %v307 = vld [vmem:[%s306] sm:$0xf]
    %vm308 = vcmask 64512
    %v310 = vsel %vm308, %v307, 0
    %vm312 = vcmask 1043456
    %v314 = vsel %vm312, %v302, 0
    %v317 = vsel %vm312, %v303, 0
    %v320 = vsel %vm312, %v304, 0
    %v323 = vsel %vm312, %v305, 0
    %325 = vmatprep.subr.bf16.mxu0 %v317
    %326 = vmatpush1.bf16.msra.mxu0 %v314
    %327 = vmatprep.subr.bf16.mxu0 0
    %328 = vmatpush1.bf16.msra.mxu0 0
    %329 = vmatprep.subr.bf16.mxu0 0
    %330 = vmatpush1.bf16.msra.mxu0 0
    %331 = vmatprep.subr.bf16.mxu0 0
    %332 = vmatpush1.bf16.msra.mxu0 0
    %333 = vmatprep.subr.bf16.mxu0 0
    %334 = vmatpush1.bf16.msra.mxu0 0
    %335 = vmatprep.subr.bf16.mxu0 0
    %336 = vmatpush1.bf16.msra.mxu0 0
    %337 = vmatprep.subr.bf16.mxu0 0
    %338 = vmatpush1.bf16.msra.mxu0 0
    %339 = vmatprep.subr.bf16.mxu0 0
    %340 = vmatpush1.bf16.msra.mxu0 0
    %341 = vmatprep.subr.bf16.mxu0 0
    %342 = vmatpush1.bf16.msra.mxu0 0
    %343 = vmatprep.subr.bf16.mxu0 0
    %344 = vmatpush1.bf16.msra.mxu0 0
    %345 = vmatprep.subr.bf16.mxu0 0
    %346 = vmatpush1.bf16.msra.mxu0 0
    %347 = vmatprep.subr.bf16.mxu0 0
    %348 = vmatpush1.bf16.msra.mxu0 0
    %349 = vmatprep.subr.bf16.mxu0 0
    %350 = vmatpush1.bf16.msra.mxu0 0
    %351 = vmatprep.subr.bf16.mxu0 0
    %352 = vmatpush1.bf16.msra.mxu0 0
    %353 = vmatprep.subr.bf16.mxu0 0
    %354 = vmatpush1.bf16.msra.mxu0 0
    %355 = vmatprep.subr.bf16.mxu0 0
    %356 = vmatpush1.bf16.msra.mxu0 0
    %357 = vmatprep.mubr.bf16.mxu0 0
    %358 = vmatmul.mubr.bf16.gmra.mrb[0].mxu0 %v310
    %v359 = vpop.f32.mrb[0].mxu0
    %v360 = vadd.f32 0.0, %v359
    %v361 = vpop.f32.mrb[0].mxu0
    %v362 = vadd.f32 0.0, %v361
    %v363 = vpop.f32.mrb[0].mxu0
    %v364 = vpop.f32.mrb[0].mxu0
    %365 = vdwg.mxu0
    %366 = vmatprep.subr.bf16.mxu0 %v323
    %367 = vmatpush1.bf16.msra.mxu0 %v320
    %368 = vmatprep.subr.bf16.mxu0 0
    %369 = vmatpush1.bf16.msra.mxu0 0
    %370 = vmatprep.subr.bf16.mxu0 0
    %371 = vmatpush1.bf16.msra.mxu0 0
    %372 = vmatprep.subr.bf16.mxu0 0
    %373 = vmatpush1.bf16.msra.mxu0 0
    %374 = vmatprep.subr.bf16.mxu0 0
    %375 = vmatpush1.bf16.msra.mxu0 0
    %376 = vmatprep.subr.bf16.mxu0 0
    %377 = vmatpush1.bf16.msra.mxu0 0
    %378 = vmatprep.subr.bf16.mxu0 0
    %379 = vmatpush1.bf16.msra.mxu0 0
    %380 = vmatprep.subr.bf16.mxu0 0
    %381 = vmatpush1.bf16.msra.mxu0 0
    %382 = vmatprep.subr.bf16.mxu0 0
    %383 = vmatpush1.bf16.msra.mxu0 0
    %384 = vmatprep.subr.bf16.mxu0 0
    %385 = vmatpush1.bf16.msra.mxu0 0
    %386 = vmatprep.subr.bf16.mxu0 0
    %387 = vmatpush1.bf16.msra.mxu0 0
    %388 = vmatprep.subr.bf16.mxu0 0
    %389 = vmatpush1.bf16.msra.mxu0 0
    %390 = vmatprep.subr.bf16.mxu0 0
    %391 = vmatpush1.bf16.msra.mxu0 0
    %392 = vmatprep.subr.bf16.mxu0 0
    %393 = vmatpush1.bf16.msra.mxu0 0
    %394 = vmatprep.subr.bf16.mxu0 0
    %395 = vmatpush1.bf16.msra.mxu0 0
    %396 = vmatprep.subr.bf16.mxu0 0
    %397 = vmatpush1.bf16.msra.mxu0 0
    %398 = vmatprep.mubr.bf16.mxu0 0
    %399 = vmatmul.mubr.bf16.gmra.mrb[0].mxu0 %v310
    %v400 = vpop.f32.mrb[0].mxu0
    %v401 = vadd.f32 0.0, %v400
    %v402 = vpop.f32.mrb[0].mxu0
    %v403 = vadd.f32 0.0, %v402
    %v404 = vpop.f32.mrb[0].mxu0
    %v405 = vpop.f32.mrb[0].mxu0
    %406 = vdwg.mxu0
    %v408 = vsel %vm308, %v261, 0
    %v411 = vsel %vm312, %v257, 0
    %v414 = vsel %vm312, %v258, 0
    %v417 = vsel %vm312, %v259, 0
    %v420 = vsel %vm312, %v260, 0
    %422 = vmatprep.subr.bf16.mxu0 %v414
    %423 = vmatpush1.bf16.msra.mxu0 %v411
    %424 = vmatprep.subr.bf16.mxu0 0
    %425 = vmatpush1.bf16.msra.mxu0 0
    %426 = vmatprep.subr.bf16.mxu0 0
    %427 = vmatpush1.bf16.msra.mxu0 0
    %428 = vmatprep.subr.bf16.mxu0 0
    %429 = vmatpush1.bf16.msra.mxu0 0
    %430 = vmatprep.subr.bf16.mxu0 0
    %431 = vmatpush1.bf16.msra.mxu0 0
    %432 = vmatprep.subr.bf16.mxu0 0
    %433 = vmatpush1.bf16.msra.mxu0 0
    %434 = vmatprep.subr.bf16.mxu0 0
    %435 = vmatpush1.bf16.msra.mxu0 0
    %436 = vmatprep.subr.bf16.mxu0 0
    %437 = vmatpush1.bf16.msra.mxu0 0
    %438 = vmatprep.subr.bf16.mxu0 0
    %439 = vmatpush1.bf16.msra.mxu0 0
    %440 = vmatprep.subr.bf16.mxu0 0
    %441 = vmatpush1.bf16.msra.mxu0 0
    %442 = vmatprep.subr.bf16.mxu0 0
    %443 = vmatpush1.bf16.msra.mxu0 0
    %444 = vmatprep.subr.bf16.mxu0 0
    %445 = vmatpush1.bf16.msra.mxu0 0
    %446 = vmatprep.subr.bf16.mxu0 0
    %447 = vmatpush1.bf16.msra.mxu0 0
    %448 = vmatprep.subr.bf16.mxu0 0
    %449 = vmatpush1.bf16.msra.mxu0 0
    %450 = vmatprep.subr.bf16.mxu0 0
    %451 = vmatpush1.bf16.msra.mxu0 0
    %452 = vmatprep.subr.bf16.mxu0 0
    %453 = vmatpush1.bf16.msra.mxu0 0
    %454 = vmatprep.mubr.bf16.mxu0 0
    %455 = vmatmul.mubr.bf16.gmra.mrb[0].mxu0 %v408
    %v456 = vpop.f32.mrb[0].mxu0
    %v457 = vadd.f32 %v360, %v456
    %v458 = vpop.f32.mrb[0].mxu0
    %v459 = vadd.f32 %v362, %v458
    %v460 = vpop.f32.mrb[0].mxu0
    %v461 = vpop.f32.mrb[0].mxu0
    %462 = vdwg.mxu0
    %463 = vmatprep.subr.bf16.mxu0 %v420
    %464 = vmatpush1.bf16.msra.mxu0 %v417
    %465 = vmatprep.subr.bf16.mxu0 0
    %466 = vmatpush1.bf16.msra.mxu0 0
    %467 = vmatprep.subr.bf16.mxu0 0
    %468 = vmatpush1.bf16.msra.mxu0 0
    %469 = vmatprep.subr.bf16.mxu0 0
    %470 = vmatpush1.bf16.msra.mxu0 0
    %471 = vmatprep.subr.bf16.mxu0 0
    %472 = vmatpush1.bf16.msra.mxu0 0
    %473 = vmatprep.subr.bf16.mxu0 0
    %474 = vmatpush1.bf16.msra.mxu0 0
    %475 = vmatprep.subr.bf16.mxu0 0
    %476 = vmatpush1.bf16.msra.mxu0 0
    %477 = vmatprep.subr.bf16.mxu0 0
    %478 = vmatpush1.bf16.msra.mxu0 0
    %479 = vmatprep.subr.bf16.mxu0 0
    %480 = vmatpush1.bf16.msra.mxu0 0
    %481 = vmatprep.subr.bf16.mxu0 0
    %482 = vmatpush1.bf16.msra.mxu0 0
    %483 = vmatprep.subr.bf16.mxu0 0
    %484 = vmatpush1.bf16.msra.mxu0 0
    %485 = vmatprep.subr.bf16.mxu0 0
    %486 = vmatpush1.bf16.msra.mxu0 0
    %487 = vmatprep.subr.bf16.mxu0 0
    %488 = vmatpush1.bf16.msra.mxu0 0
    %489 = vmatprep.subr.bf16.mxu0 0
    %490 = vmatpush1.bf16.msra.mxu0 0
    %491 = vmatprep.subr.bf16.mxu0 0
    %492 = vmatpush1.bf16.msra.mxu0 0
    %493 = vmatprep.subr.bf16.mxu0 0
    %494 = vmatpush1.bf16.msra.mxu0 0
    %495 = vmatprep.mubr.bf16.mxu0 0
    %496 = vmatmul.mubr.bf16.gmra.mrb[0].mxu0 %v408
    %v497 = vpop.f32.mrb[0].mxu0
    %v498 = vadd.f32 %v401, %v497
    %v499 = vpop.f32.mrb[0].mxu0
    %v500 = vadd.f32 %v403, %v499
    %v501 = vpop.f32.mrb[0].mxu0
    %v502 = vpop.f32.mrb[0].mxu0
    %503 = vdwg.mxu0
    %s504 = scalar_lea.vmem %s1, 32
    %v505 = vld [vmem:[%s504] ss:$8 sm:$0xf]
    %506 = vrot.lane.b32.xlu0 %v207, 15
    %v507 = vpop.permute.xlu0 %506
    %508 = vrot.lane.b32.xlu0 %v208, 15
    %v509 = vpop.permute.xlu0 %508
    %510 = vrot.lane.b32.xlu0 %v209, 15
    %v511 = vpop.permute.xlu0 %510
    %512 = vrot.lane.b32.xlu0 %v210, 15
    %v513 = vpop.permute.xlu0 %512
    %vm514 = vcmp.lt.s32.totalorder %v226, 15
    %v515 = vsel %vm514, %v511, %v513
    %v516 = vsel %vm514, %v509, %v511
    %v517 = vsel %vm514, %v507, %v509
    %v518 = vsel %vm514, %v513, %v507
    %v520 = vlaneseq
    %v521 = vshrl.u32 %v520, 7
    %v522 = vsub.s32 0, %v521
    %v523 = vrot.slane %v505, %v522
    %v524 = vlaneseq
    %v525 = vshrl.u32 %v524, 7
    %v526 = vsub.s32 1, %v525
    %v527 = vrot.slane %v505, %v526
    %v528 = vlaneseq
    %v529 = vshrl.u32 %v528, 7
    %v530 = vsub.s32 2, %v529
    %v531 = vrot.slane %v505, %v530
    %v532 = vlaneseq
    %v533 = vshrl.u32 %v532, 7
    %v534 = vsub.s32 3, %v533
    %v535 = vrot.slane %v505, %v534
    %v540 = vmul.f32 %v518, %v523
    %v541 = vmul.f32 %v517, %v527
    %v542 = vmul.f32 %v516, %v531
    %v543 = vmul.f32 %v515, %v535
    %v544 = vpack.c.bf16 %v540, %v540
    %v545 = vpack.c.bf16 %v541, %v541
    %v546 = vpack.c.bf16 %v542, %v542
    %v547 = vpack.c.bf16 %v543, %v543
    %s548 = scalar_lea.vmem %s5, 8
    %v549 = vld [vmem:[%s548] sm:$0xf]
    %v551 = vsel %vm308, %v549, 0
    %v554 = vsel %vm312, %v544, 0
    %v557 = vsel %vm312, %v545, 0
    %v560 = vsel %vm312, %v546, 0
    %v563 = vsel %vm312, %v547, 0
    %565 = vmatprep.subr.bf16.mxu0 %v557
    %566 = vmatpush1.bf16.msra.mxu0 %v554
    %567 = vmatprep.subr.bf16.mxu0 0
    %568 = vmatpush1.bf16.msra.mxu0 0
    %569 = vmatprep.subr.bf16.mxu0 0
    %570 = vmatpush1.bf16.msra.mxu0 0
    %571 = vmatprep.subr.bf16.mxu0 0
    %572 = vmatpush1.bf16.msra.mxu0 0
    %573 = vmatprep.subr.bf16.mxu0 0
    %574 = vmatpush1.bf16.msra.mxu0 0
    %575 = vmatprep.subr.bf16.mxu0 0
    %576 = vmatpush1.bf16.msra.mxu0 0
    %577 = vmatprep.subr.bf16.mxu0 0
    %578 = vmatpush1.bf16.msra.mxu0 0
    %579 = vmatprep.subr.bf16.mxu0 0
    %580 = vmatpush1.bf16.msra.mxu0 0
    %581 = vmatprep.subr.bf16.mxu0 0
    %582 = vmatpush1.bf16.msra.mxu0 0
    %583 = vmatprep.subr.bf16.mxu0 0
    %584 = vmatpush1.bf16.msra.mxu0 0
    %585 = vmatprep.subr.bf16.mxu0 0
    %586 = vmatpush1.bf16.msra.mxu0 0
    %587 = vmatprep.subr.bf16.mxu0 0
    %588 = vmatpush1.bf16.msra.mxu0 0
    %589 = vmatprep.subr.bf16.mxu0 0
    %590 = vmatpush1.bf16.msra.mxu0 0
    %591 = vmatprep.subr.bf16.mxu0 0
    %592 = vmatpush1.bf16.msra.mxu0 0
    %593 = vmatprep.subr.bf16.mxu0 0
    %594 = vmatpush1.bf16.msra.mxu0 0
    %595 = vmatprep.subr.bf16.mxu0 0
    %596 = vmatpush1.bf16.msra.mxu0 0
    %597 = vmatprep.mubr.bf16.mxu0 0
    %598 = vmatmul.mubr.bf16.gmra.mrb[0].mxu0 %v551
    %v599 = vpop.f32.mrb[0].mxu0
    %v600 = vadd.f32 0.0, %v599
    %v601 = vpop.f32.mrb[0].mxu0
    %v602 = vadd.f32 0.0, %v601
    %v603 = vpop.f32.mrb[0].mxu0
    %v604 = vpop.f32.mrb[0].mxu0
    %605 = vdwg.mxu0
    %606 = vmatprep.subr.bf16.mxu0 %v563
    %607 = vmatpush1.bf16.msra.mxu0 %v560
    %608 = vmatprep.subr.bf16.mxu0 0
    %609 = vmatpush1.bf16.msra.mxu0 0
    %610 = vmatprep.subr.bf16.mxu0 0
    %611 = vmatpush1.bf16.msra.mxu0 0
    %612 = vmatprep.subr.bf16.mxu0 0
    %613 = vmatpush1.bf16.msra.mxu0 0
    %614 = vmatprep.subr.bf16.mxu0 0
    %615 = vmatpush1.bf16.msra.mxu0 0
    %616 = vmatprep.subr.bf16.mxu0 0
    %617 = vmatpush1.bf16.msra.mxu0 0
    %618 = vmatprep.subr.bf16.mxu0 0
    %619 = vmatpush1.bf16.msra.mxu0 0
    %620 = vmatprep.subr.bf16.mxu0 0
    %621 = vmatpush1.bf16.msra.mxu0 0
    %622 = vmatprep.subr.bf16.mxu0 0
    %623 = vmatpush1.bf16.msra.mxu0 0
    %624 = vmatprep.subr.bf16.mxu0 0
    %625 = vmatpush1.bf16.msra.mxu0 0
    %626 = vmatprep.subr.bf16.mxu0 0
    %627 = vmatpush1.bf16.msra.mxu0 0
    %628 = vmatprep.subr.bf16.mxu0 0
    %629 = vmatpush1.bf16.msra.mxu0 0
    %630 = vmatprep.subr.bf16.mxu0 0
    %631 = vmatpush1.bf16.msra.mxu0 0
    %632 = vmatprep.subr.bf16.mxu0 0
    %633 = vmatpush1.bf16.msra.mxu0 0
    %634 = vmatprep.subr.bf16.mxu0 0
    %635 = vmatpush1.bf16.msra.mxu0 0
    %636 = vmatprep.subr.bf16.mxu0 0
    %637 = vmatpush1.bf16.msra.mxu0 0
    %638 = vmatprep.mubr.bf16.mxu0 0
    %639 = vmatmul.mubr.bf16.gmra.mrb[0].mxu0 %v551
    %v640 = vpop.f32.mrb[0].mxu0
    %v641 = vadd.f32 0.0, %v640
    %v642 = vpop.f32.mrb[0].mxu0
    %v643 = vadd.f32 0.0, %v642
    %v644 = vpop.f32.mrb[0].mxu0
    %v645 = vpop.f32.mrb[0].mxu0
    %646 = vdwg.mxu0
    %v647 = vadd.f32 %v457, %v600
    %v648 = vadd.f32 %v459, %v602
    %v649 = vadd.f32 %v498, %v641
    %v650 = vadd.f32 %v500, %v643
    %s651 = scalar_lea.vmem %s1, 35
    %v652 = vld [vmem:[%s651] ss:$8 sm:$0xf]
    %653 = vrot.lane.b32.xlu0 %v207, 1
    %v654 = vpop.permute.xlu0 %653
    %655 = vrot.lane.b32.xlu0 %v208, 1
    %v656 = vpop.permute.xlu0 %655
    %657 = vrot.lane.b32.xlu0 %v209, 1
    %v658 = vpop.permute.xlu0 %657
    %659 = vrot.lane.b32.xlu0 %v210, 1
    %v660 = vpop.permute.xlu0 %659
    %vm661 = vcmp.lt.s32.totalorder %v226, 1
    %v662 = vsel %vm661, %v658, %v660
    %v663 = vsel %vm661, %v656, %v658
    %v664 = vsel %vm661, %v654, %v656
    %v665 = vsel %vm661, %v660, %v654
    %v667 = vlaneseq
    %v668 = vshrl.u32 %v667, 7
    %v669 = vsub.s32 0, %v668
    %v670 = vrot.slane %v652, %v669
    %v671 = vlaneseq
    %v672 = vshrl.u32 %v671, 7
    %v673 = vsub.s32 1, %v672
    %v674 = vrot.slane %v652, %v673
    %v675 = vlaneseq
    %v676 = vshrl.u32 %v675, 7
    %v677 = vsub.s32 2, %v676
    %v678 = vrot.slane %v652, %v677
    %v679 = vlaneseq
    %v680 = vshrl.u32 %v679, 7
    %v681 = vsub.s32 3, %v680
    %v682 = vrot.slane %v652, %v681
    %v687 = vmul.f32 %v665, %v670
    %v688 = vmul.f32 %v664, %v674
    %v689 = vmul.f32 %v663, %v678
    %v690 = vmul.f32 %v662, %v682
    %v691 = vpack.c.bf16 %v687, %v687
    %v692 = vpack.c.bf16 %v688, %v688
    %v693 = vpack.c.bf16 %v689, %v689
    %v694 = vpack.c.bf16 %v690, %v690
    %s695 = scalar_lea.vmem %s5, 12
    %v696 = vld [vmem:[%s695] sm:$0xf]
    %v698 = vsel %vm308, %v696, 0
    %v701 = vsel %vm312, %v691, 0
    %v704 = vsel %vm312, %v692, 0
    %v707 = vsel %vm312, %v693, 0
    %v710 = vsel %vm312, %v694, 0
    %712 = vmatprep.subr.bf16.mxu0 %v704
    %713 = vmatpush1.bf16.msra.mxu0 %v701
    %714 = vmatprep.subr.bf16.mxu0 0
    %715 = vmatpush1.bf16.msra.mxu0 0
    %716 = vmatprep.subr.bf16.mxu0 0
    %717 = vmatpush1.bf16.msra.mxu0 0
    %718 = vmatprep.subr.bf16.mxu0 0
    %719 = vmatpush1.bf16.msra.mxu0 0
    %720 = vmatprep.subr.bf16.mxu0 0
    %721 = vmatpush1.bf16.msra.mxu0 0
    %722 = vmatprep.subr.bf16.mxu0 0
    %723 = vmatpush1.bf16.msra.mxu0 0
    %724 = vmatprep.subr.bf16.mxu0 0
    %725 = vmatpush1.bf16.msra.mxu0 0
    %726 = vmatprep.subr.bf16.mxu0 0
    %727 = vmatpush1.bf16.msra.mxu0 0
    %728 = vmatprep.subr.bf16.mxu0 0
    %729 = vmatpush1.bf16.msra.mxu0 0
    %730 = vmatprep.subr.bf16.mxu0 0
    %731 = vmatpush1.bf16.msra.mxu0 0
    %732 = vmatprep.subr.bf16.mxu0 0
    %733 = vmatpush1.bf16.msra.mxu0 0
    %734 = vmatprep.subr.bf16.mxu0 0
    %735 = vmatpush1.bf16.msra.mxu0 0
    %736 = vmatprep.subr.bf16.mxu0 0
    %737 = vmatpush1.bf16.msra.mxu0 0
    %738 = vmatprep.subr.bf16.mxu0 0
    %739 = vmatpush1.bf16.msra.mxu0 0
    %740 = vmatprep.subr.bf16.mxu0 0
    %741 = vmatpush1.bf16.msra.mxu0 0
    %742 = vmatprep.subr.bf16.mxu0 0
    %743 = vmatpush1.bf16.msra.mxu0 0
    %744 = vmatprep.mubr.bf16.mxu0 0
    %745 = vmatmul.mubr.bf16.gmra.mrb[0].mxu0 %v698
    %v746 = vpop.f32.mrb[0].mxu0
    %v747 = vadd.f32 0.0, %v746
    %v748 = vpop.f32.mrb[0].mxu0
    %v749 = vadd.f32 0.0, %v748
    %v750 = vpop.f32.mrb[0].mxu0
    %v751 = vpop.f32.mrb[0].mxu0
    %752 = vdwg.mxu0
    %753 = vmatprep.subr.bf16.mxu0 %v710
    %754 = vmatpush1.bf16.msra.mxu0 %v707
    %755 = vmatprep.subr.bf16.mxu0 0
    %756 = vmatpush1.bf16.msra.mxu0 0
    %757 = vmatprep.subr.bf16.mxu0 0
    %758 = vmatpush1.bf16.msra.mxu0 0
    %759 = vmatprep.subr.bf16.mxu0 0
    %760 = vmatpush1.bf16.msra.mxu0 0
    %761 = vmatprep.subr.bf16.mxu0 0
    %762 = vmatpush1.bf16.msra.mxu0 0
    %763 = vmatprep.subr.bf16.mxu0 0
    %764 = vmatpush1.bf16.msra.mxu0 0
    %765 = vmatprep.subr.bf16.mxu0 0
    %766 = vmatpush1.bf16.msra.mxu0 0
    %767 = vmatprep.subr.bf16.mxu0 0
    %768 = vmatpush1.bf16.msra.mxu0 0
    %769 = vmatprep.subr.bf16.mxu0 0
    %770 = vmatpush1.bf16.msra.mxu0 0
    %771 = vmatprep.subr.bf16.mxu0 0
    %772 = vmatpush1.bf16.msra.mxu0 0
    %773 = vmatprep.subr.bf16.mxu0 0
    %774 = vmatpush1.bf16.msra.mxu0 0
    %775 = vmatprep.subr.bf16.mxu0 0
    %776 = vmatpush1.bf16.msra.mxu0 0
    %777 = vmatprep.subr.bf16.mxu0 0
    %778 = vmatpush1.bf16.msra.mxu0 0
    %779 = vmatprep.subr.bf16.mxu0 0
    %780 = vmatpush1.bf16.msra.mxu0 0
    %781 = vmatprep.subr.bf16.mxu0 0
    %782 = vmatpush1.bf16.msra.mxu0 0
    %783 = vmatprep.subr.bf16.mxu0 0
    %784 = vmatpush1.bf16.msra.mxu0 0
    %785 = vmatprep.mubr.bf16.mxu0 0
    %786 = vmatmul.mubr.bf16.gmra.mrb[0].mxu0 %v698
    %v787 = vpop.f32.mrb[0].mxu0
    %v788 = vadd.f32 0.0, %v787
    %v789 = vpop.f32.mrb[0].mxu0
    %v790 = vadd.f32 0.0, %v789
    %v791 = vpop.f32.mrb[0].mxu0
    %v792 = vpop.f32.mrb[0].mxu0
    %793 = vdwg.mxu0
    %v794 = vadd.f32 %v647, %v747
    %v795 = vadd.f32 %v648, %v749
    %v796 = vadd.f32 %v649, %v788
    %v797 = vadd.f32 %v650, %v790
    %s798 = scalar_lea.vmem %s1, 36
    %v799 = vld [vmem:[%s798] ss:$8 sm:$0xf]
    %v801 = vlaneseq
    %v802 = vshrl.u32 %v801, 7
    %v803 = vsub.s32 0, %v802
    %v804 = vrot.slane %v799, %v803
    %v805 = vlaneseq
    %v806 = vshrl.u32 %v805, 7
    %v807 = vsub.s32 1, %v806
    %v808 = vrot.slane %v799, %v807
    %v809 = vlaneseq
    %v810 = vshrl.u32 %v809, 7
    %v811 = vsub.s32 2, %v810
    %v812 = vrot.slane %v799, %v811
    %v813 = vlaneseq
    %v814 = vshrl.u32 %v813, 7
    %v815 = vsub.s32 3, %v814
    %v816 = vrot.slane %v799, %v815
    %v821 = vmul.f32 %v207, %v804
    %v822 = vmul.f32 %v208, %v808
    %v823 = vmul.f32 %v209, %v812
    %v824 = vmul.f32 %v210, %v816
    %v825 = vpack.c.bf16 %v821, %v821
    %v826 = vpack.c.bf16 %v822, %v822
    %v827 = vpack.c.bf16 %v823, %v823
    %v828 = vpack.c.bf16 %v824, %v824
    %s829 = scalar_lea.vmem %s5, 16
    %v830 = vld [vmem:[%s829] sm:$0xf]
    %v832 = vsel %vm308, %v830, 0
    %v835 = vsel %vm312, %v825, 0
    %v838 = vsel %vm312, %v826, 0
    %v841 = vsel %vm312, %v827, 0
    %v844 = vsel %vm312, %v828, 0
    %846 = vmatprep.subr.bf16.mxu0 %v838
    %847 = vmatpush1.bf16.msra.mxu0 %v835
    %848 = vmatprep.subr.bf16.mxu0 0
    %849 = vmatpush1.bf16.msra.mxu0 0
    %850 = vmatprep.subr.bf16.mxu0 0
    %851 = vmatpush1.bf16.msra.mxu0 0
    %852 = vmatprep.subr.bf16.mxu0 0
    %853 = vmatpush1.bf16.msra.mxu0 0
    %854 = vmatprep.subr.bf16.mxu0 0
    %855 = vmatpush1.bf16.msra.mxu0 0
    %856 = vmatprep.subr.bf16.mxu0 0
    %857 = vmatpush1.bf16.msra.mxu0 0
    %858 = vmatprep.subr.bf16.mxu0 0
    %859 = vmatpush1.bf16.msra.mxu0 0
    %860 = vmatprep.subr.bf16.mxu0 0
    %861 = vmatpush1.bf16.msra.mxu0 0
    %862 = vmatprep.subr.bf16.mxu0 0
    %863 = vmatpush1.bf16.msra.mxu0 0
    %864 = vmatprep.subr.bf16.mxu0 0
    %865 = vmatpush1.bf16.msra.mxu0 0
    %866 = vmatprep.subr.bf16.mxu0 0
    %867 = vmatpush1.bf16.msra.mxu0 0
    %868 = vmatprep.subr.bf16.mxu0 0
    %869 = vmatpush1.bf16.msra.mxu0 0
    %870 = vmatprep.subr.bf16.mxu0 0
    %871 = vmatpush1.bf16.msra.mxu0 0
    %872 = vmatprep.subr.bf16.mxu0 0
    %873 = vmatpush1.bf16.msra.mxu0 0
    %874 = vmatprep.subr.bf16.mxu0 0
    %875 = vmatpush1.bf16.msra.mxu0 0
    %876 = vmatprep.subr.bf16.mxu0 0
    %877 = vmatpush1.bf16.msra.mxu0 0
    %878 = vmatprep.mubr.bf16.mxu0 0
    %879 = vmatmul.mubr.bf16.gmra.mrb[0].mxu0 %v832
    %v880 = vpop.f32.mrb[0].mxu0
    %v881 = vadd.f32 0.0, %v880
    %v882 = vpop.f32.mrb[0].mxu0
    %v883 = vadd.f32 0.0, %v882
    %v884 = vpop.f32.mrb[0].mxu0
    %v885 = vpop.f32.mrb[0].mxu0
    %886 = vdwg.mxu0
    %887 = vmatprep.subr.bf16.mxu0 %v844
    %888 = vmatpush1.bf16.msra.mxu0 %v841
    %889 = vmatprep.subr.bf16.mxu0 0
    %890 = vmatpush1.bf16.msra.mxu0 0
    %891 = vmatprep.subr.bf16.mxu0 0
    %892 = vmatpush1.bf16.msra.mxu0 0
    %893 = vmatprep.subr.bf16.mxu0 0
    %894 = vmatpush1.bf16.msra.mxu0 0
    %895 = vmatprep.subr.bf16.mxu0 0
    %896 = vmatpush1.bf16.msra.mxu0 0
    %897 = vmatprep.subr.bf16.mxu0 0
    %898 = vmatpush1.bf16.msra.mxu0 0
    %899 = vmatprep.subr.bf16.mxu0 0
    %900 = vmatpush1.bf16.msra.mxu0 0
    %901 = vmatprep.subr.bf16.mxu0 0
    %902 = vmatpush1.bf16.msra.mxu0 0
    %903 = vmatprep.subr.bf16.mxu0 0
    %904 = vmatpush1.bf16.msra.mxu0 0
    %905 = vmatprep.subr.bf16.mxu0 0
    %906 = vmatpush1.bf16.msra.mxu0 0
    %907 = vmatprep.subr.bf16.mxu0 0
    %908 = vmatpush1.bf16.msra.mxu0 0
    %909 = vmatprep.subr.bf16.mxu0 0
    %910 = vmatpush1.bf16.msra.mxu0 0
    %911 = vmatprep.subr.bf16.mxu0 0
    %912 = vmatpush1.bf16.msra.mxu0 0
    %913 = vmatprep.subr.bf16.mxu0 0
    %914 = vmatpush1.bf16.msra.mxu0 0
    %915 = vmatprep.subr.bf16.mxu0 0
    %916 = vmatpush1.bf16.msra.mxu0 0
    %917 = vmatprep.subr.bf16.mxu0 0
    %918 = vmatpush1.bf16.msra.mxu0 0
    %919 = vmatprep.mubr.bf16.mxu0 0
    %920 = vmatmul.mubr.bf16.gmra.mrb[0].mxu0 %v832
    %v921 = vpop.f32.mrb[0].mxu0
    %v922 = vadd.f32 0.0, %v921
    %v923 = vpop.f32.mrb[0].mxu0
    %v924 = vadd.f32 0.0, %v923
    %v925 = vpop.f32.mrb[0].mxu0
    %v926 = vpop.f32.mrb[0].mxu0
    %927 = vdwg.mxu0
    %v928 = vadd.f32 %v794, %v881
    %v929 = vadd.f32 %v795, %v883
    %v930 = vadd.f32 %v796, %v922
    %v931 = vadd.f32 %v797, %v924
    %s932 = scalar_lea.vmem %s1, 37
    %v933 = vld [vmem:[%s932] ss:$8 sm:$0xf]
    %934 = vrot.lane.b32.xlu0 %v207, 127
    %v935 = vpop.permute.xlu0 %934
    %936 = vrot.lane.b32.xlu0 %v208, 127
    %v937 = vpop.permute.xlu0 %936
    %938 = vrot.lane.b32.xlu0 %v209, 127
    %v939 = vpop.permute.xlu0 %938
    %940 = vrot.lane.b32.xlu0 %v210, 127
    %v941 = vpop.permute.xlu0 %940
    %vm942 = vcmp.lt.s32.totalorder %v226, 127
    %v943 = vsel %vm942, %v939, %v941
    %v944 = vsel %vm942, %v937, %v939
    %v945 = vsel %vm942, %v935, %v937
    %v946 = vsel %vm942, %v941, %v935
    %v948 = vlaneseq
    %v949 = vshrl.u32 %v948, 7
    %v950 = vsub.s32 0, %v949
    %v951 = vrot.slane %v933, %v950
    %v952 = vlaneseq
    %v953 = vshrl.u32 %v952, 7
    %v954 = vsub.s32 1, %v953
    %v955 = vrot.slane %v933, %v954
    %v956 = vlaneseq
    %v957 = vshrl.u32 %v956, 7
    %v958 = vsub.s32 2, %v957
    %v959 = vrot.slane %v933, %v958
    %v960 = vlaneseq
    %v961 = vshrl.u32 %v960, 7
    %v962 = vsub.s32 3, %v961
    %v963 = vrot.slane %v933, %v962
    %v968 = vmul.f32 %v945, %v951
    %v969 = vmul.f32 %v944, %v955
    %v970 = vmul.f32 %v943, %v959
    %v971 = vmul.f32 %v946, %v963
    %v972 = vpack.c.bf16 %v968, %v968
    %v973 = vpack.c.bf16 %v969, %v969
    %v974 = vpack.c.bf16 %v970, %v970
    %v975 = vpack.c.bf16 %v971, %v971
    %s976 = scalar_lea.vmem %s5, 20
    %v977 = vld [vmem:[%s976] sm:$0xf]
    %v979 = vsel %vm308, %v977, 0
    %v982 = vsel %vm312, %v972, 0
    %v985 = vsel %vm312, %v973, 0
    %v988 = vsel %vm312, %v974, 0
    %v991 = vsel %vm312, %v975, 0
    %993 = vmatprep.subr.bf16.mxu0 %v985
    %994 = vmatpush1.bf16.msra.mxu0 %v982
    %995 = vmatprep.subr.bf16.mxu0 0
    %996 = vmatpush1.bf16.msra.mxu0 0
    %997 = vmatprep.subr.bf16.mxu0 0
    %998 = vmatpush1.bf16.msra.mxu0 0
    %999 = vmatprep.subr.bf16.mxu0 0
    %1000 = vmatpush1.bf16.msra.mxu0 0
    %1001 = vmatprep.subr.bf16.mxu0 0
    %1002 = vmatpush1.bf16.msra.mxu0 0
    %1003 = vmatprep.subr.bf16.mxu0 0
    %1004 = vmatpush1.bf16.msra.mxu0 0
    %1005 = vmatprep.subr.bf16.mxu0 0
    %1006 = vmatpush1.bf16.msra.mxu0 0
    %1007 = vmatprep.subr.bf16.mxu0 0
    %1008 = vmatpush1.bf16.msra.mxu0 0
    %1009 = vmatprep.subr.bf16.mxu0 0
    %1010 = vmatpush1.bf16.msra.mxu0 0
    %1011 = vmatprep.subr.bf16.mxu0 0
    %1012 = vmatpush1.bf16.msra.mxu0 0
    %1013 = vmatprep.subr.bf16.mxu0 0
    %1014 = vmatpush1.bf16.msra.mxu0 0
    %1015 = vmatprep.subr.bf16.mxu0 0
    %1016 = vmatpush1.bf16.msra.mxu0 0
    %1017 = vmatprep.subr.bf16.mxu0 0
    %1018 = vmatpush1.bf16.msra.mxu0 0
    %1019 = vmatprep.subr.bf16.mxu0 0
    %1020 = vmatpush1.bf16.msra.mxu0 0
    %1021 = vmatprep.subr.bf16.mxu0 0
    %1022 = vmatpush1.bf16.msra.mxu0 0
    %1023 = vmatprep.subr.bf16.mxu0 0
    %1024 = vmatpush1.bf16.msra.mxu0 0
    %1025 = vmatprep.mubr.bf16.mxu0 0
    %1026 = vmatmul.mubr.bf16.gmra.mrb[0].mxu0 %v979
    %v1027 = vpop.f32.mrb[0].mxu0
    %v1028 = vadd.f32 0.0, %v1027
    %v1029 = vpop.f32.mrb[0].mxu0
    %v1030 = vadd.f32 0.0, %v1029
    %v1031 = vpop.f32.mrb[0].mxu0
    %v1032 = vpop.f32.mrb[0].mxu0
    %1033 = vdwg.mxu0
    %1034 = vmatprep.subr.bf16.mxu0 %v991
    %1035 = vmatpush1.bf16.msra.mxu0 %v988
    %1036 = vmatprep.subr.bf16.mxu0 0
    %1037 = vmatpush1.bf16.msra.mxu0 0
    %1038 = vmatprep.subr.bf16.mxu0 0
    %1039 = vmatpush1.bf16.msra.mxu0 0
    %1040 = vmatprep.subr.bf16.mxu0 0
    %1041 = vmatpush1.bf16.msra.mxu0 0
    %1042 = vmatprep.subr.bf16.mxu0 0
    %1043 = vmatpush1.bf16.msra.mxu0 0
    %1044 = vmatprep.subr.bf16.mxu0 0
    %1045 = vmatpush1.bf16.msra.mxu0 0
    %1046 = vmatprep.subr.bf16.mxu0 0
    %1047 = vmatpush1.bf16.msra.mxu0 0
    %1048 = vmatprep.subr.bf16.mxu0 0
    %1049 = vmatpush1.bf16.msra.mxu0 0
    %1050 = vmatprep.subr.bf16.mxu0 0
    %1051 = vmatpush1.bf16.msra.mxu0 0
    %1052 = vmatprep.subr.bf16.mxu0 0
    %1053 = vmatpush1.bf16.msra.mxu0 0
    %1054 = vmatprep.subr.bf16.mxu0 0
    %1055 = vmatpush1.bf16.msra.mxu0 0
    %1056 = vmatprep.subr.bf16.mxu0 0
    %1057 = vmatpush1.bf16.msra.mxu0 0
    %1058 = vmatprep.subr.bf16.mxu0 0
    %1059 = vmatpush1.bf16.msra.mxu0 0
    %1060 = vmatprep.subr.bf16.mxu0 0
    %1061 = vmatpush1.bf16.msra.mxu0 0
    %1062 = vmatprep.subr.bf16.mxu0 0
    %1063 = vmatpush1.bf16.msra.mxu0 0
    %1064 = vmatprep.subr.bf16.mxu0 0
    %1065 = vmatpush1.bf16.msra.mxu0 0
    %1066 = vmatprep.mubr.bf16.mxu0 0
    %1067 = vmatmul.mubr.bf16.gmra.mrb[0].mxu0 %v979
    %v1068 = vpop.f32.mrb[0].mxu0
    %v1069 = vadd.f32 0.0, %v1068
    %v1070 = vpop.f32.mrb[0].mxu0
    %v1071 = vadd.f32 0.0, %v1070
    %v1072 = vpop.f32.mrb[0].mxu0
    %v1073 = vpop.f32.mrb[0].mxu0
    %1074 = vdwg.mxu0
    %v1075 = vadd.f32 %v928, %v1028
    %v1076 = vadd.f32 %v929, %v1030
    %v1077 = vadd.f32 %v930, %v1069
    %v1078 = vadd.f32 %v931, %v1071
    %s1079 = scalar_lea.vmem %s1, 64
    %v1080 = vld [vmem:[%s1079] ss:$8 sm:$0xf]
    %1081 = vrot.lane.b32.xlu0 %v207, 113
    %v1082 = vpop.permute.xlu0 %1081
    %1083 = vrot.lane.b32.xlu0 %v208, 113
    %v1084 = vpop.permute.xlu0 %1083
    %1085 = vrot.lane.b32.xlu0 %v209, 113
    %v1086 = vpop.permute.xlu0 %1085
    %1087 = vrot.lane.b32.xlu0 %v210, 113
    %v1088 = vpop.permute.xlu0 %1087
    %vm1089 = vcmp.lt.s32.totalorder %v226, 113
    %v1090 = vsel %vm1089, %v1086, %v1088
    %v1091 = vsel %vm1089, %v1084, %v1086
    %v1092 = vsel %vm1089, %v1082, %v1084
    %v1093 = vsel %vm1089, %v1088, %v1082
    %v1095 = vlaneseq
    %v1096 = vshrl.u32 %v1095, 7
    %v1097 = vsub.s32 0, %v1096
    %v1098 = vrot.slane %v1080, %v1097
    %v1099 = vlaneseq
    %v1100 = vshrl.u32 %v1099, 7
    %v1101 = vsub.s32 1, %v1100
    %v1102 = vrot.slane %v1080, %v1101
    %v1103 = vlaneseq
    %v1104 = vshrl.u32 %v1103, 7
    %v1105 = vsub.s32 2, %v1104
    %v1106 = vrot.slane %v1080, %v1105
    %v1107 = vlaneseq
    %v1108 = vshrl.u32 %v1107, 7
    %v1109 = vsub.s32 3, %v1108
    %v1110 = vrot.slane %v1080, %v1109
    %v1115 = vmul.f32 %v1092, %v1098
    %v1116 = vmul.f32 %v1091, %v1102
    %v1117 = vmul.f32 %v1090, %v1106
    %v1118 = vmul.f32 %v1093, %v1110
    %v1119 = vpack.c.bf16 %v1115, %v1115
    %v1120 = vpack.c.bf16 %v1116, %v1116
    %v1121 = vpack.c.bf16 %v1117, %v1117
    %v1122 = vpack.c.bf16 %v1118, %v1118
    %s1123 = scalar_lea.vmem %s5, 24
    %v1124 = vld [vmem:[%s1123] sm:$0xf]
    %v1126 = vsel %vm308, %v1124, 0
    %v1129 = vsel %vm312, %v1119, 0
    %v1132 = vsel %vm312, %v1120, 0
    %v1135 = vsel %vm312, %v1121, 0
    %v1138 = vsel %vm312, %v1122, 0
    %1140 = vmatprep.subr.bf16.mxu0 %v1132
    %1141 = vmatpush1.bf16.msra.mxu0 %v1129
    %1142 = vmatprep.subr.bf16.mxu0 0
    %1143 = vmatpush1.bf16.msra.mxu0 0
    %1144 = vmatprep.subr.bf16.mxu0 0
    %1145 = vmatpush1.bf16.msra.mxu0 0
    %1146 = vmatprep.subr.bf16.mxu0 0
    %1147 = vmatpush1.bf16.msra.mxu0 0
    %1148 = vmatprep.subr.bf16.mxu0 0
    %1149 = vmatpush1.bf16.msra.mxu0 0
    %1150 = vmatprep.subr.bf16.mxu0 0
    %1151 = vmatpush1.bf16.msra.mxu0 0
    %1152 = vmatprep.subr.bf16.mxu0 0
    %1153 = vmatpush1.bf16.msra.mxu0 0
    %1154 = vmatprep.subr.bf16.mxu0 0
    %1155 = vmatpush1.bf16.msra.mxu0 0
    %1156 = vmatprep.subr.bf16.mxu0 0
    %1157 = vmatpush1.bf16.msra.mxu0 0
    %1158 = vmatprep.subr.bf16.mxu0 0
    %1159 = vmatpush1.bf16.msra.mxu0 0
    %1160 = vmatprep.subr.bf16.mxu0 0
    %1161 = vmatpush1.bf16.msra.mxu0 0
    %1162 = vmatprep.subr.bf16.mxu0 0
    %1163 = vmatpush1.bf16.msra.mxu0 0
    %1164 = vmatprep.subr.bf16.mxu0 0
    %1165 = vmatpush1.bf16.msra.mxu0 0
    %1166 = vmatprep.subr.bf16.mxu0 0
    %1167 = vmatpush1.bf16.msra.mxu0 0
    %1168 = vmatprep.subr.bf16.mxu0 0
    %1169 = vmatpush1.bf16.msra.mxu0 0
    %1170 = vmatprep.subr.bf16.mxu0 0
    %1171 = vmatpush1.bf16.msra.mxu0 0
    %1172 = vmatprep.mubr.bf16.mxu0 0
    %1173 = vmatmul.mubr.bf16.gmra.mrb[0].mxu0 %v1126
    %v1174 = vpop.f32.mrb[0].mxu0
    %v1175 = vadd.f32 0.0, %v1174
    %v1176 = vpop.f32.mrb[0].mxu0
    %v1177 = vadd.f32 0.0, %v1176
    %v1178 = vpop.f32.mrb[0].mxu0
    %v1179 = vpop.f32.mrb[0].mxu0
    %1180 = vdwg.mxu0
    %1181 = vmatprep.subr.bf16.mxu0 %v1138
    %1182 = vmatpush1.bf16.msra.mxu0 %v1135
    %1183 = vmatprep.subr.bf16.mxu0 0
    %1184 = vmatpush1.bf16.msra.mxu0 0
    %1185 = vmatprep.subr.bf16.mxu0 0
    %1186 = vmatpush1.bf16.msra.mxu0 0
    %1187 = vmatprep.subr.bf16.mxu0 0
    %1188 = vmatpush1.bf16.msra.mxu0 0
    %1189 = vmatprep.subr.bf16.mxu0 0
    %1190 = vmatpush1.bf16.msra.mxu0 0
    %1191 = vmatprep.subr.bf16.mxu0 0
    %1192 = vmatpush1.bf16.msra.mxu0 0
    %1193 = vmatprep.subr.bf16.mxu0 0
    %1194 = vmatpush1.bf16.msra.mxu0 0
    %1195 = vmatprep.subr.bf16.mxu0 0
    %1196 = vmatpush1.bf16.msra.mxu0 0
    %1197 = vmatprep.subr.bf16.mxu0 0
    %1198 = vmatpush1.bf16.msra.mxu0 0
    %1199 = vmatprep.subr.bf16.mxu0 0
    %1200 = vmatpush1.bf16.msra.mxu0 0
    %1201 = vmatprep.subr.bf16.mxu0 0
    %1202 = vmatpush1.bf16.msra.mxu0 0
    %1203 = vmatprep.subr.bf16.mxu0 0
    %1204 = vmatpush1.bf16.msra.mxu0 0
    %1205 = vmatprep.subr.bf16.mxu0 0
    %1206 = vmatpush1.bf16.msra.mxu0 0
    %1207 = vmatprep.subr.bf16.mxu0 0
    %1208 = vmatpush1.bf16.msra.mxu0 0
    %1209 = vmatprep.subr.bf16.mxu0 0
    %1210 = vmatpush1.bf16.msra.mxu0 0
    %1211 = vmatprep.subr.bf16.mxu0 0
    %1212 = vmatpush1.bf16.msra.mxu0 0
    %1213 = vmatprep.mubr.bf16.mxu0 0
    %1214 = vmatmul.mubr.bf16.gmra.mrb[0].mxu0 %v1126
    %v1215 = vpop.f32.mrb[0].mxu0
    %v1216 = vadd.f32 0.0, %v1215
    %v1217 = vpop.f32.mrb[0].mxu0
    %v1218 = vadd.f32 0.0, %v1217
    %v1219 = vpop.f32.mrb[0].mxu0
    %v1220 = vpop.f32.mrb[0].mxu0
    %1221 = vdwg.mxu0
    %v1222 = vadd.f32 %v1075, %v1175
    %v1223 = vadd.f32 %v1076, %v1177
    %v1224 = vadd.f32 %v1077, %v1216
    %v1225 = vadd.f32 %v1078, %v1218
    %s1226 = scalar_lea.vmem %s1, 65
    %v1227 = vld [vmem:[%s1226] ss:$8 sm:$0xf]
    %1228 = vrot.lane.b32.xlu0 %v207, 112
    %v1229 = vpop.permute.xlu0 %1228
    %1230 = vrot.lane.b32.xlu0 %v208, 112
    %v1231 = vpop.permute.xlu0 %1230
    %1232 = vrot.lane.b32.xlu0 %v209, 112
    %v1233 = vpop.permute.xlu0 %1232
    %1234 = vrot.lane.b32.xlu0 %v210, 112
    %v1235 = vpop.permute.xlu0 %1234
    %vm1236 = vcmp.lt.s32.totalorder %v226, 112
    %v1237 = vsel %vm1236, %v1233, %v1235
    %v1238 = vsel %vm1236, %v1231, %v1233
    %v1239 = vsel %vm1236, %v1229, %v1231
    %v1240 = vsel %vm1236, %v1235, %v1229
    %v1242 = vlaneseq
    %v1243 = vshrl.u32 %v1242, 7
    %v1244 = vsub.s32 0, %v1243
    %v1245 = vrot.slane %v1227, %v1244
    %v1246 = vlaneseq
    %v1247 = vshrl.u32 %v1246, 7
    %v1248 = vsub.s32 1, %v1247
    %v1249 = vrot.slane %v1227, %v1248
    %v1250 = vlaneseq
    %v1251 = vshrl.u32 %v1250, 7
    %v1252 = vsub.s32 2, %v1251
    %v1253 = vrot.slane %v1227, %v1252
    %v1254 = vlaneseq
    %v1255 = vshrl.u32 %v1254, 7
    %v1256 = vsub.s32 3, %v1255
    %v1257 = vrot.slane %v1227, %v1256
    %v1262 = vmul.f32 %v1239, %v1245
    %v1263 = vmul.f32 %v1238, %v1249
    %v1264 = vmul.f32 %v1237, %v1253
    %v1265 = vmul.f32 %v1240, %v1257
    %v1266 = vpack.c.bf16 %v1262, %v1262
    %v1267 = vpack.c.bf16 %v1263, %v1263
    %v1268 = vpack.c.bf16 %v1264, %v1264
    %v1269 = vpack.c.bf16 %v1265, %v1265
    %s1270 = scalar_lea.vmem %s5, 28
    %v1271 = vld [vmem:[%s1270] sm:$0xf]
    %v1273 = vsel %vm308, %v1271, 0
    %v1276 = vsel %vm312, %v1266, 0
    %v1279 = vsel %vm312, %v1267, 0
    %v1282 = vsel %vm312, %v1268, 0
    %v1285 = vsel %vm312, %v1269, 0
    %1287 = vmatprep.subr.bf16.mxu0 %v1279
    %1288 = vmatpush1.bf16.msra.mxu0 %v1276
    %1289 = vmatprep.subr.bf16.mxu0 0
    %1290 = vmatpush1.bf16.msra.mxu0 0
    %1291 = vmatprep.subr.bf16.mxu0 0
    %1292 = vmatpush1.bf16.msra.mxu0 0
    %1293 = vmatprep.subr.bf16.mxu0 0
    %1294 = vmatpush1.bf16.msra.mxu0 0
    %1295 = vmatprep.subr.bf16.mxu0 0
    %1296 = vmatpush1.bf16.msra.mxu0 0
    %1297 = vmatprep.subr.bf16.mxu0 0
    %1298 = vmatpush1.bf16.msra.mxu0 0
    %1299 = vmatprep.subr.bf16.mxu0 0
    %1300 = vmatpush1.bf16.msra.mxu0 0
    %1301 = vmatprep.subr.bf16.mxu0 0
    %1302 = vmatpush1.bf16.msra.mxu0 0
    %1303 = vmatprep.subr.bf16.mxu0 0
    %1304 = vmatpush1.bf16.msra.mxu0 0
    %1305 = vmatprep.subr.bf16.mxu0 0
    %1306 = vmatpush1.bf16.msra.mxu0 0
    %1307 = vmatprep.subr.bf16.mxu0 0
    %1308 = vmatpush1.bf16.msra.mxu0 0
    %1309 = vmatprep.subr.bf16.mxu0 0
    %1310 = vmatpush1.bf16.msra.mxu0 0
    %1311 = vmatprep.subr.bf16.mxu0 0
    %1312 = vmatpush1.bf16.msra.mxu0 0
    %1313 = vmatprep.subr.bf16.mxu0 0
    %1314 = vmatpush1.bf16.msra.mxu0 0
    %1315 = vmatprep.subr.bf16.mxu0 0
    %1316 = vmatpush1.bf16.msra.mxu0 0
    %1317 = vmatprep.subr.bf16.mxu0 0
    %1318 = vmatpush1.bf16.msra.mxu0 0
    %1319 = vmatprep.mubr.bf16.mxu0 0
    %1320 = vmatmul.mubr.bf16.gmra.mrb[0].mxu0 %v1273
    %v1321 = vpop.f32.mrb[0].mxu0
    %v1322 = vadd.f32 0.0, %v1321
    %v1323 = vpop.f32.mrb[0].mxu0
    %v1324 = vadd.f32 0.0, %v1323
    %v1325 = vpop.f32.mrb[0].mxu0
    %v1326 = vpop.f32.mrb[0].mxu0
    %1327 = vdwg.mxu0
    %1328 = vmatprep.subr.bf16.mxu0 %v1285
    %1329 = vmatpush1.bf16.msra.mxu0 %v1282
    %1330 = vmatprep.subr.bf16.mxu0 0
    %1331 = vmatpush1.bf16.msra.mxu0 0
    %1332 = vmatprep.subr.bf16.mxu0 0
    %1333 = vmatpush1.bf16.msra.mxu0 0
    %1334 = vmatprep.subr.bf16.mxu0 0
    %1335 = vmatpush1.bf16.msra.mxu0 0
    %1336 = vmatprep.subr.bf16.mxu0 0
    %1337 = vmatpush1.bf16.msra.mxu0 0
    %1338 = vmatprep.subr.bf16.mxu0 0
    %1339 = vmatpush1.bf16.msra.mxu0 0
    %1340 = vmatprep.subr.bf16.mxu0 0
    %1341 = vmatpush1.bf16.msra.mxu0 0
    %1342 = vmatprep.subr.bf16.mxu0 0
    %1343 = vmatpush1.bf16.msra.mxu0 0
    %1344 = vmatprep.subr.bf16.mxu0 0
    %1345 = vmatpush1.bf16.msra.mxu0 0
    %1346 = vmatprep.subr.bf16.mxu0 0
    %1347 = vmatpush1.bf16.msra.mxu0 0
    %1348 = vmatprep.subr.bf16.mxu0 0
    %1349 = vmatpush1.bf16.msra.mxu0 0
    %1350 = vmatprep.subr.bf16.mxu0 0
    %1351 = vmatpush1.bf16.msra.mxu0 0
    %1352 = vmatprep.subr.bf16.mxu0 0
    %1353 = vmatpush1.bf16.msra.mxu0 0
    %1354 = vmatprep.subr.bf16.mxu0 0
    %1355 = vmatpush1.bf16.msra.mxu0 0
    %1356 = vmatprep.subr.bf16.mxu0 0
    %1357 = vmatpush1.bf16.msra.mxu0 0
    %1358 = vmatprep.subr.bf16.mxu0 0
    %1359 = vmatpush1.bf16.msra.mxu0 0
    %1360 = vmatprep.mubr.bf16.mxu0 0
    %1361 = vmatmul.mubr.bf16.gmra.mrb[0].mxu0 %v1273
    %v1362 = vpop.f32.mrb[0].mxu0
    %v1363 = vadd.f32 0.0, %v1362
    %v1364 = vpop.f32.mrb[0].mxu0
    %v1365 = vadd.f32 0.0, %v1364
    %v1366 = vpop.f32.mrb[0].mxu0
    %v1367 = vpop.f32.mrb[0].mxu0
    %1368 = vdwg.mxu0
    %v1369 = vadd.f32 %v1222, %v1322
    %v1370 = vadd.f32 %v1223, %v1324
    %v1371 = vadd.f32 %v1224, %v1363
    %v1372 = vadd.f32 %v1225, %v1365
    %s1373 = scalar_lea.vmem %s1, 66
    %v1374 = vld [vmem:[%s1373] ss:$8 sm:$0xf]
    %1375 = vrot.lane.b32.xlu0 %v207, 111
    %v1376 = vpop.permute.xlu0 %1375
    %1377 = vrot.lane.b32.xlu0 %v208, 111
    %v1378 = vpop.permute.xlu0 %1377
    %1379 = vrot.lane.b32.xlu0 %v209, 111
    %v1380 = vpop.permute.xlu0 %1379
    %1381 = vrot.lane.b32.xlu0 %v210, 111
    %v1382 = vpop.permute.xlu0 %1381
    %vm1383 = vcmp.lt.s32.totalorder %v226, 111
    %v1384 = vsel %vm1383, %v1380, %v1382
    %v1385 = vsel %vm1383, %v1378, %v1380
    %v1386 = vsel %vm1383, %v1376, %v1378
    %v1387 = vsel %vm1383, %v1382, %v1376
    %v1389 = vlaneseq
    %v1390 = vshrl.u32 %v1389, 7
    %v1391 = vsub.s32 0, %v1390
    %v1392 = vrot.slane %v1374, %v1391
    %v1393 = vlaneseq
    %v1394 = vshrl.u32 %v1393, 7
    %v1395 = vsub.s32 1, %v1394
    %v1396 = vrot.slane %v1374, %v1395
    %v1397 = vlaneseq
    %v1398 = vshrl.u32 %v1397, 7
    %v1399 = vsub.s32 2, %v1398
    %v1400 = vrot.slane %v1374, %v1399
    %v1401 = vlaneseq
    %v1402 = vshrl.u32 %v1401, 7
    %v1403 = vsub.s32 3, %v1402
    %v1404 = vrot.slane %v1374, %v1403
    %v1409 = vmul.f32 %v1386, %v1392
    %v1410 = vmul.f32 %v1385, %v1396
    %v1411 = vmul.f32 %v1384, %v1400
    %v1412 = vmul.f32 %v1387, %v1404
    %v1413 = vpack.c.bf16 %v1409, %v1409
    %v1414 = vpack.c.bf16 %v1410, %v1410
    %v1415 = vpack.c.bf16 %v1411, %v1411
    %v1416 = vpack.c.bf16 %v1412, %v1412
    %s1417 = scalar_lea.vmem %s5, 32
    %v1418 = vld [vmem:[%s1417] sm:$0xf]
    %v1420 = vsel %vm308, %v1418, 0
    %v1423 = vsel %vm312, %v1413, 0
    %v1426 = vsel %vm312, %v1414, 0
    %v1429 = vsel %vm312, %v1415, 0
    %v1432 = vsel %vm312, %v1416, 0
    %1434 = vmatprep.subr.bf16.mxu0 %v1426
    %1435 = vmatpush1.bf16.msra.mxu0 %v1423
    %1436 = vmatprep.subr.bf16.mxu0 0
    %1437 = vmatpush1.bf16.msra.mxu0 0
    %1438 = vmatprep.subr.bf16.mxu0 0
    %1439 = vmatpush1.bf16.msra.mxu0 0
    %1440 = vmatprep.subr.bf16.mxu0 0
    %1441 = vmatpush1.bf16.msra.mxu0 0
    %1442 = vmatprep.subr.bf16.mxu0 0
    %1443 = vmatpush1.bf16.msra.mxu0 0
    %1444 = vmatprep.subr.bf16.mxu0 0
    %1445 = vmatpush1.bf16.msra.mxu0 0
    %1446 = vmatprep.subr.bf16.mxu0 0
    %1447 = vmatpush1.bf16.msra.mxu0 0
    %1448 = vmatprep.subr.bf16.mxu0 0
    %1449 = vmatpush1.bf16.msra.mxu0 0
    %1450 = vmatprep.subr.bf16.mxu0 0
    %1451 = vmatpush1.bf16.msra.mxu0 0
    %1452 = vmatprep.subr.bf16.mxu0 0
    %1453 = vmatpush1.bf16.msra.mxu0 0
    %1454 = vmatprep.subr.bf16.mxu0 0
    %1455 = vmatpush1.bf16.msra.mxu0 0
    %1456 = vmatprep.subr.bf16.mxu0 0
    %1457 = vmatpush1.bf16.msra.mxu0 0
    %1458 = vmatprep.subr.bf16.mxu0 0
    %1459 = vmatpush1.bf16.msra.mxu0 0
    %1460 = vmatprep.subr.bf16.mxu0 0
    %1461 = vmatpush1.bf16.msra.mxu0 0
    %1462 = vmatprep.subr.bf16.mxu0 0
    %1463 = vmatpush1.bf16.msra.mxu0 0
    %1464 = vmatprep.subr.bf16.mxu0 0
    %1465 = vmatpush1.bf16.msra.mxu0 0
    %1466 = vmatprep.mubr.bf16.mxu0 0
    %1467 = vmatmul.mubr.bf16.gmra.mrb[0].mxu0 %v1420
    %v1468 = vpop.f32.mrb[0].mxu0
    %v1469 = vadd.f32 0.0, %v1468
    %v1470 = vpop.f32.mrb[0].mxu0
    %v1471 = vadd.f32 0.0, %v1470
    %v1472 = vpop.f32.mrb[0].mxu0
    %v1473 = vpop.f32.mrb[0].mxu0
    %1474 = vdwg.mxu0
    %1475 = vmatprep.subr.bf16.mxu0 %v1432
    %1476 = vmatpush1.bf16.msra.mxu0 %v1429
    %1477 = vmatprep.subr.bf16.mxu0 0
    %1478 = vmatpush1.bf16.msra.mxu0 0
    %1479 = vmatprep.subr.bf16.mxu0 0
    %1480 = vmatpush1.bf16.msra.mxu0 0
    %1481 = vmatprep.subr.bf16.mxu0 0
    %1482 = vmatpush1.bf16.msra.mxu0 0
    %1483 = vmatprep.subr.bf16.mxu0 0
    %1484 = vmatpush1.bf16.msra.mxu0 0
    %1485 = vmatprep.subr.bf16.mxu0 0
    %1486 = vmatpush1.bf16.msra.mxu0 0
    %1487 = vmatprep.subr.bf16.mxu0 0
    %1488 = vmatpush1.bf16.msra.mxu0 0
    %1489 = vmatprep.subr.bf16.mxu0 0
    %1490 = vmatpush1.bf16.msra.mxu0 0
    %1491 = vmatprep.subr.bf16.mxu0 0
    %1492 = vmatpush1.bf16.msra.mxu0 0
    %1493 = vmatprep.subr.bf16.mxu0 0
    %1494 = vmatpush1.bf16.msra.mxu0 0
    %1495 = vmatprep.subr.bf16.mxu0 0
    %1496 = vmatpush1.bf16.msra.mxu0 0
    %1497 = vmatprep.subr.bf16.mxu0 0
    %1498 = vmatpush1.bf16.msra.mxu0 0
    %1499 = vmatprep.subr.bf16.mxu0 0
    %1500 = vmatpush1.bf16.msra.mxu0 0
    %1501 = vmatprep.subr.bf16.mxu0 0
    %1502 = vmatpush1.bf16.msra.mxu0 0
    %1503 = vmatprep.subr.bf16.mxu0 0
    %1504 = vmatpush1.bf16.msra.mxu0 0
    %1505 = vmatprep.subr.bf16.mxu0 0
    %1506 = vmatpush1.bf16.msra.mxu0 0
    %1507 = vmatprep.mubr.bf16.mxu0 0
    %1508 = vmatmul.mubr.bf16.gmra.mrb[0].mxu0 %v1420
    %v1509 = vpop.f32.mrb[0].mxu0
    %v1510 = vadd.f32 0.0, %v1509
    %v1511 = vpop.f32.mrb[0].mxu0
    %v1512 = vadd.f32 0.0, %v1511
    %v1513 = vpop.f32.mrb[0].mxu0
    %v1514 = vpop.f32.mrb[0].mxu0
    %1515 = vdwg.mxu0
    %v1516 = vadd.f32 %v1369, %v1469
    %v1517 = vadd.f32 %v1370, %v1471
    %v1518 = vadd.f32 %v1371, %v1510
    %v1519 = vadd.f32 %v1372, %v1512
    %v1520 = vld [vmem:[%s6] sm:$0xff]
    %1522 = vset.pattern.permute.xlu0 0
    %1523 = vperm.xlu0 %1522, %v1520
    %v1524 = vpop.permute.xlu0 %1523
    %v1526 = vadd.f32 %v1516, %v1524
    %v1527 = vadd.f32 %v1517, %v1524
    %v1528 = vadd.f32 %v1518, %v1524
    %v1529 = vadd.f32 %v1519, %v1524
    %v1530 = vmax.f32 %v1526, 0.0
    %v1531 = vmax.f32 %v1527, 0.0
    %v1532 = vmax.f32 %v1528, 0.0
    %v1533 = vmax.f32 %v1529, 0.0
    %v1534 = vld [vmem:[%s1] ss:$8 sm:$0xf]
    %1535 = vrot.lane.b32.xlu0 %v211, 34
    %v1536 = vpop.permute.xlu0 %1535
    %1537 = vrot.lane.b32.xlu0 %v212, 34
    %v1538 = vpop.permute.xlu0 %1537
    %1539 = vrot.lane.b32.xlu0 %v213, 34
    %v1540 = vpop.permute.xlu0 %1539
    %1541 = vrot.lane.b32.xlu0 %v214, 34
    %v1542 = vpop.permute.xlu0 %1541
    %vm1543 = vcmp.lt.s32.totalorder %v226, 34
    %v1544 = vsel %vm1543, %v1540, %v1542
    %v1545 = vsel %vm1543, %v1538, %v1540
    %v1546 = vsel %vm1543, %v1536, %v1538
    %v1547 = vsel %vm1543, %v1542, %v1536
    %v1549 = vlaneseq
    %v1550 = vshrl.u32 %v1549, 7
    %v1551 = vsub.s32 0, %v1550
    %v1552 = vrot.slane %v1534, %v1551
    %v1553 = vlaneseq
    %v1554 = vshrl.u32 %v1553, 7
    %v1555 = vsub.s32 1, %v1554
    %v1556 = vrot.slane %v1534, %v1555
    %v1557 = vlaneseq
    %v1558 = vshrl.u32 %v1557, 7
    %v1559 = vsub.s32 2, %v1558
    %v1560 = vrot.slane %v1534, %v1559
    %v1561 = vlaneseq
    %v1562 = vshrl.u32 %v1561, 7
    %v1563 = vsub.s32 3, %v1562
    %v1564 = vrot.slane %v1534, %v1563
    %v1569 = vmul.f32 %v1547, %v1552
    %v1570 = vmul.f32 %v1546, %v1556
    %v1571 = vmul.f32 %v1545, %v1560
    %v1572 = vmul.f32 %v1544, %v1564
    %v1573 = vpack.c.bf16 %v1569, %v1569
    %v1574 = vpack.c.bf16 %v1570, %v1570
    %v1575 = vpack.c.bf16 %v1571, %v1571
    %v1576 = vpack.c.bf16 %v1572, %v1572
    %v1577 = vld [vmem:[%s7] sm:$0xf]
    %s1578 = scalar_lea.vmem %s1, 1
    %v1579 = vld [vmem:[%s1578] ss:$8 sm:$0xf]
    %1580 = vrot.lane.b32.xlu0 %v211, 33
    %v1581 = vpop.permute.xlu0 %1580
    %1582 = vrot.lane.b32.xlu0 %v212, 33
    %v1583 = vpop.permute.xlu0 %1582
    %1584 = vrot.lane.b32.xlu0 %v213, 33
    %v1585 = vpop.permute.xlu0 %1584
    %1586 = vrot.lane.b32.xlu0 %v214, 33
    %v1587 = vpop.permute.xlu0 %1586
    %vm1588 = vcmp.lt.s32.totalorder %v226, 33
    %v1589 = vsel %vm1588, %v1585, %v1587
    %v1590 = vsel %vm1588, %v1583, %v1585
    %v1591 = vsel %vm1588, %v1581, %v1583
    %v1592 = vsel %vm1588, %v1587, %v1581
    %v1594 = vlaneseq
    %v1595 = vshrl.u32 %v1594, 7
    %v1596 = vsub.s32 0, %v1595
    %v1597 = vrot.slane %v1579, %v1596
    %v1598 = vlaneseq
    %v1599 = vshrl.u32 %v1598, 7
    %v1600 = vsub.s32 1, %v1599
    %v1601 = vrot.slane %v1579, %v1600
    %v1602 = vlaneseq
    %v1603 = vshrl.u32 %v1602, 7
    %v1604 = vsub.s32 2, %v1603
    %v1605 = vrot.slane %v1579, %v1604
    %v1606 = vlaneseq
    %v1607 = vshrl.u32 %v1606, 7
    %v1608 = vsub.s32 3, %v1607
    %v1609 = vrot.slane %v1579, %v1608
    %v1614 = vmul.f32 %v1592, %v1597
    %v1615 = vmul.f32 %v1591, %v1601
    %v1616 = vmul.f32 %v1590, %v1605
    %v1617 = vmul.f32 %v1589, %v1609
    %v1618 = vpack.c.bf16 %v1614, %v1614
    %v1619 = vpack.c.bf16 %v1615, %v1615
    %v1620 = vpack.c.bf16 %v1616, %v1616
    %v1621 = vpack.c.bf16 %v1617, %v1617
    %s1622 = scalar_lea.vmem %s7, 4
    %v1623 = vld [vmem:[%s1622] sm:$0xf]
    %v1625 = vsel %vm308, %v1623, 0
    %v1628 = vsel %vm312, %v1618, 0
    %v1631 = vsel %vm312, %v1619, 0
    %v1634 = vsel %vm312, %v1620, 0
    %v1637 = vsel %vm312, %v1621, 0
    %1639 = vmatprep.subr.bf16.mxu0 %v1631
    %1640 = vmatpush1.bf16.msra.mxu0 %v1628
    %1641 = vmatprep.subr.bf16.mxu0 0
    %1642 = vmatpush1.bf16.msra.mxu0 0
    %1643 = vmatprep.subr.bf16.mxu0 0
    %1644 = vmatpush1.bf16.msra.mxu0 0
    %1645 = vmatprep.subr.bf16.mxu0 0
    %1646 = vmatpush1.bf16.msra.mxu0 0
    %1647 = vmatprep.subr.bf16.mxu0 0
    %1648 = vmatpush1.bf16.msra.mxu0 0
    %1649 = vmatprep.subr.bf16.mxu0 0
    %1650 = vmatpush1.bf16.msra.mxu0 0
    %1651 = vmatprep.subr.bf16.mxu0 0
    %1652 = vmatpush1.bf16.msra.mxu0 0
    %1653 = vmatprep.subr.bf16.mxu0 0
    %1654 = vmatpush1.bf16.msra.mxu0 0
    %1655 = vmatprep.subr.bf16.mxu0 0
    %1656 = vmatpush1.bf16.msra.mxu0 0
    %1657 = vmatprep.subr.bf16.mxu0 0
    %1658 = vmatpush1.bf16.msra.mxu0 0
    %1659 = vmatprep.subr.bf16.mxu0 0
    %1660 = vmatpush1.bf16.msra.mxu0 0
    %1661 = vmatprep.subr.bf16.mxu0 0
    %1662 = vmatpush1.bf16.msra.mxu0 0
    %1663 = vmatprep.subr.bf16.mxu0 0
    %1664 = vmatpush1.bf16.msra.mxu0 0
    %1665 = vmatprep.subr.bf16.mxu0 0
    %1666 = vmatpush1.bf16.msra.mxu0 0
    %1667 = vmatprep.subr.bf16.mxu0 0
    %1668 = vmatpush1.bf16.msra.mxu0 0
    %1669 = vmatprep.subr.bf16.mxu0 0
    %1670 = vmatpush1.bf16.msra.mxu0 0
    %1671 = vmatprep.mubr.bf16.mxu0 0
    %1672 = vmatmul.mubr.bf16.gmra.mrb[0].mxu0 %v1625
    %v1673 = vpop.f32.mrb[0].mxu0
    %v1674 = vadd.f32 0.0, %v1673
    %v1675 = vpop.f32.mrb[0].mxu0
    %v1676 = vadd.f32 0.0, %v1675
    %v1677 = vpop.f32.mrb[0].mxu0
    %v1678 = vpop.f32.mrb[0].mxu0
    %1679 = vdwg.mxu0
    %1680 = vmatprep.subr.bf16.mxu0 %v1637
    %1681 = vmatpush1.bf16.msra.mxu0 %v1634
    %1682 = vmatprep.subr.bf16.mxu0 0
    %1683 = vmatpush1.bf16.msra.mxu0 0
    %1684 = vmatprep.subr.bf16.mxu0 0
    %1685 = vmatpush1.bf16.msra.mxu0 0
    %1686 = vmatprep.subr.bf16.mxu0 0
    %1687 = vmatpush1.bf16.msra.mxu0 0
    %1688 = vmatprep.subr.bf16.mxu0 0
    %1689 = vmatpush1.bf16.msra.mxu0 0
    %1690 = vmatprep.subr.bf16.mxu0 0
    %1691 = vmatpush1.bf16.msra.mxu0 0
    %1692 = vmatprep.subr.bf16.mxu0 0
    %1693 = vmatpush1.bf16.msra.mxu0 0
    %1694 = vmatprep.subr.bf16.mxu0 0
    %1695 = vmatpush1.bf16.msra.mxu0 0
    %1696 = vmatprep.subr.bf16.mxu0 0
    %1697 = vmatpush1.bf16.msra.mxu0 0
    %1698 = vmatprep.subr.bf16.mxu0 0
    %1699 = vmatpush1.bf16.msra.mxu0 0
    %1700 = vmatprep.subr.bf16.mxu0 0
    %1701 = vmatpush1.bf16.msra.mxu0 0
    %1702 = vmatprep.subr.bf16.mxu0 0
    %1703 = vmatpush1.bf16.msra.mxu0 0
    %1704 = vmatprep.subr.bf16.mxu0 0
    %1705 = vmatpush1.bf16.msra.mxu0 0
    %1706 = vmatprep.subr.bf16.mxu0 0
    %1707 = vmatpush1.bf16.msra.mxu0 0
    %1708 = vmatprep.subr.bf16.mxu0 0
    %1709 = vmatpush1.bf16.msra.mxu0 0
    %1710 = vmatprep.subr.bf16.mxu0 0
    %1711 = vmatpush1.bf16.msra.mxu0 0
    %1712 = vmatprep.mubr.bf16.mxu0 0
    %1713 = vmatmul.mubr.bf16.gmra.mrb[0].mxu0 %v1625
    %v1714 = vpop.f32.mrb[0].mxu0
    %v1715 = vadd.f32 0.0, %v1714
    %v1716 = vpop.f32.mrb[0].mxu0
    %v1717 = vadd.f32 0.0, %v1716
    %v1718 = vpop.f32.mrb[0].mxu0
    %v1719 = vpop.f32.mrb[0].mxu0
    %1720 = vdwg.mxu0
    %v1722 = vsel %vm308, %v1577, 0
    %v1725 = vsel %vm312, %v1573, 0
    %v1728 = vsel %vm312, %v1574, 0
    %v1731 = vsel %vm312, %v1575, 0
    %v1734 = vsel %vm312, %v1576, 0
    %1736 = vmatprep.subr.bf16.mxu0 %v1728
    %1737 = vmatpush1.bf16.msra.mxu0 %v1725
    %1738 = vmatprep.subr.bf16.mxu0 0
    %1739 = vmatpush1.bf16.msra.mxu0 0
    %1740 = vmatprep.subr.bf16.mxu0 0
    %1741 = vmatpush1.bf16.msra.mxu0 0
    %1742 = vmatprep.subr.bf16.mxu0 0
    %1743 = vmatpush1.bf16.msra.mxu0 0
    %1744 = vmatprep.subr.bf16.mxu0 0
    %1745 = vmatpush1.bf16.msra.mxu0 0
    %1746 = vmatprep.subr.bf16.mxu0 0
    %1747 = vmatpush1.bf16.msra.mxu0 0
    %1748 = vmatprep.subr.bf16.mxu0 0
    %1749 = vmatpush1.bf16.msra.mxu0 0
    %1750 = vmatprep.subr.bf16.mxu0 0
    %1751 = vmatpush1.bf16.msra.mxu0 0
    %1752 = vmatprep.subr.bf16.mxu0 0
    %1753 = vmatpush1.bf16.msra.mxu0 0
    %1754 = vmatprep.subr.bf16.mxu0 0
    %1755 = vmatpush1.bf16.msra.mxu0 0
    %1756 = vmatprep.subr.bf16.mxu0 0
    %1757 = vmatpush1.bf16.msra.mxu0 0
    %1758 = vmatprep.subr.bf16.mxu0 0
    %1759 = vmatpush1.bf16.msra.mxu0 0
    %1760 = vmatprep.subr.bf16.mxu0 0
    %1761 = vmatpush1.bf16.msra.mxu0 0
    %1762 = vmatprep.subr.bf16.mxu0 0
    %1763 = vmatpush1.bf16.msra.mxu0 0
    %1764 = vmatprep.subr.bf16.mxu0 0
    %1765 = vmatpush1.bf16.msra.mxu0 0
    %1766 = vmatprep.subr.bf16.mxu0 0
    %1767 = vmatpush1.bf16.msra.mxu0 0
    %1768 = vmatprep.mubr.bf16.mxu0 0
    %1769 = vmatmul.mubr.bf16.gmra.mrb[0].mxu0 %v1722
    %v1770 = vpop.f32.mrb[0].mxu0
    %v1771 = vadd.f32 %v1674, %v1770
    %v1772 = vpop.f32.mrb[0].mxu0
    %v1773 = vadd.f32 %v1676, %v1772
    %v1774 = vpop.f32.mrb[0].mxu0
    %v1775 = vpop.f32.mrb[0].mxu0
    %1776 = vdwg.mxu0
    %1777 = vmatprep.subr.bf16.mxu0 %v1734
    %1778 = vmatpush1.bf16.msra.mxu0 %v1731
    %1779 = vmatprep.subr.bf16.mxu0 0
    %1780 = vmatpush1.bf16.msra.mxu0 0
    %1781 = vmatprep.subr.bf16.mxu0 0
    %1782 = vmatpush1.bf16.msra.mxu0 0
    %1783 = vmatprep.subr.bf16.mxu0 0
    %1784 = vmatpush1.bf16.msra.mxu0 0
    %1785 = vmatprep.subr.bf16.mxu0 0
    %1786 = vmatpush1.bf16.msra.mxu0 0
    %1787 = vmatprep.subr.bf16.mxu0 0
    %1788 = vmatpush1.bf16.msra.mxu0 0
    %1789 = vmatprep.subr.bf16.mxu0 0
    %1790 = vmatpush1.bf16.msra.mxu0 0
    %1791 = vmatprep.subr.bf16.mxu0 0
    %1792 = vmatpush1.bf16.msra.mxu0 0
    %1793 = vmatprep.subr.bf16.mxu0 0
    %1794 = vmatpush1.bf16.msra.mxu0 0
    %1795 = vmatprep.subr.bf16.mxu0 0
    %1796 = vmatpush1.bf16.msra.mxu0 0
    %1797 = vmatprep.subr.bf16.mxu0 0
    %1798 = vmatpush1.bf16.msra.mxu0 0
    %1799 = vmatprep.subr.bf16.mxu0 0
    %1800 = vmatpush1.bf16.msra.mxu0 0
    %1801 = vmatprep.subr.bf16.mxu0 0
    %1802 = vmatpush1.bf16.msra.mxu0 0
    %1803 = vmatprep.subr.bf16.mxu0 0
    %1804 = vmatpush1.bf16.msra.mxu0 0
    %1805 = vmatprep.subr.bf16.mxu0 0
    %1806 = vmatpush1.bf16.msra.mxu0 0
    %1807 = vmatprep.subr.bf16.mxu0 0
    %1808 = vmatpush1.bf16.msra.mxu0 0
    %1809 = vmatprep.mubr.bf16.mxu0 0
    %1810 = vmatmul.mubr.bf16.gmra.mrb[0].mxu0 %v1722
    %v1811 = vpop.f32.mrb[0].mxu0
    %v1812 = vadd.f32 %v1715, %v1811
    %v1813 = vpop.f32.mrb[0].mxu0
    %v1814 = vadd.f32 %v1717, %v1813
    %v1815 = vpop.f32.mrb[0].mxu0
    %v1816 = vpop.f32.mrb[0].mxu0
    %1817 = vdwg.mxu0
    %s1818 = scalar_lea.vmem %s1, 2
    %v1819 = vld [vmem:[%s1818] ss:$8 sm:$0xf]
    %1820 = vrot.lane.b32.xlu0 %v211, 32
    %v1821 = vpop.permute.xlu0 %1820
    %1822 = vrot.lane.b32.xlu0 %v212, 32
    %v1823 = vpop.permute.xlu0 %1822
    %1824 = vrot.lane.b32.xlu0 %v213, 32
    %v1825 = vpop.permute.xlu0 %1824
    %1826 = vrot.lane.b32.xlu0 %v214, 32
    %v1827 = vpop.permute.xlu0 %1826
    %vm1828 = vcmp.lt.s32.totalorder %v226, 32
    %v1829 = vsel %vm1828, %v1825, %v1827
    %v1830 = vsel %vm1828, %v1823, %v1825
    %v1831 = vsel %vm1828, %v1821, %v1823
    %v1832 = vsel %vm1828, %v1827, %v1821
    %v1834 = vlaneseq
    %v1835 = vshrl.u32 %v1834, 7
    %v1836 = vsub.s32 0, %v1835
    %v1837 = vrot.slane %v1819, %v1836
    %v1838 = vlaneseq
    %v1839 = vshrl.u32 %v1838, 7
    %v1840 = vsub.s32 1, %v1839
    %v1841 = vrot.slane %v1819, %v1840
    %v1842 = vlaneseq
    %v1843 = vshrl.u32 %v1842, 7
    %v1844 = vsub.s32 2, %v1843
    %v1845 = vrot.slane %v1819, %v1844
    %v1846 = vlaneseq
    %v1847 = vshrl.u32 %v1846, 7
    %v1848 = vsub.s32 3, %v1847
    %v1849 = vrot.slane %v1819, %v1848
    %v1854 = vmul.f32 %v1832, %v1837
    %v1855 = vmul.f32 %v1831, %v1841
    %v1856 = vmul.f32 %v1830, %v1845
    %v1857 = vmul.f32 %v1829, %v1849
    %v1858 = vpack.c.bf16 %v1854, %v1854
    %v1859 = vpack.c.bf16 %v1855, %v1855
    %v1860 = vpack.c.bf16 %v1856, %v1856
    %v1861 = vpack.c.bf16 %v1857, %v1857
    %s1862 = scalar_lea.vmem %s7, 8
    %v1863 = vld [vmem:[%s1862] sm:$0xf]
    %v1865 = vsel %vm308, %v1863, 0
    %v1868 = vsel %vm312, %v1858, 0
    %v1871 = vsel %vm312, %v1859, 0
    %v1874 = vsel %vm312, %v1860, 0
    %v1877 = vsel %vm312, %v1861, 0
    %1879 = vmatprep.subr.bf16.mxu0 %v1871
    %1880 = vmatpush1.bf16.msra.mxu0 %v1868
    %1881 = vmatprep.subr.bf16.mxu0 0
    %1882 = vmatpush1.bf16.msra.mxu0 0
    %1883 = vmatprep.subr.bf16.mxu0 0
    %1884 = vmatpush1.bf16.msra.mxu0 0
    %1885 = vmatprep.subr.bf16.mxu0 0
    %1886 = vmatpush1.bf16.msra.mxu0 0
    %1887 = vmatprep.subr.bf16.mxu0 0
    %1888 = vmatpush1.bf16.msra.mxu0 0
    %1889 = vmatprep.subr.bf16.mxu0 0
    %1890 = vmatpush1.bf16.msra.mxu0 0
    %1891 = vmatprep.subr.bf16.mxu0 0
    %1892 = vmatpush1.bf16.msra.mxu0 0
    %1893 = vmatprep.subr.bf16.mxu0 0
    %1894 = vmatpush1.bf16.msra.mxu0 0
    %1895 = vmatprep.subr.bf16.mxu0 0
    %1896 = vmatpush1.bf16.msra.mxu0 0
    %1897 = vmatprep.subr.bf16.mxu0 0
    %1898 = vmatpush1.bf16.msra.mxu0 0
    %1899 = vmatprep.subr.bf16.mxu0 0
    %1900 = vmatpush1.bf16.msra.mxu0 0
    %1901 = vmatprep.subr.bf16.mxu0 0
    %1902 = vmatpush1.bf16.msra.mxu0 0
    %1903 = vmatprep.subr.bf16.mxu0 0
    %1904 = vmatpush1.bf16.msra.mxu0 0
    %1905 = vmatprep.subr.bf16.mxu0 0
    %1906 = vmatpush1.bf16.msra.mxu0 0
    %1907 = vmatprep.subr.bf16.mxu0 0
    %1908 = vmatpush1.bf16.msra.mxu0 0
    %1909 = vmatprep.subr.bf16.mxu0 0
    %1910 = vmatpush1.bf16.msra.mxu0 0
    %1911 = vmatprep.mubr.bf16.mxu0 0
    %1912 = vmatmul.mubr.bf16.gmra.mrb[0].mxu0 %v1865
    %v1913 = vpop.f32.mrb[0].mxu0
    %v1914 = vadd.f32 0.0, %v1913
    %v1915 = vpop.f32.mrb[0].mxu0
    %v1916 = vadd.f32 0.0, %v1915
    %v1917 = vpop.f32.mrb[0].mxu0
    %v1918 = vpop.f32.mrb[0].mxu0
    %1919 = vdwg.mxu0
    %1920 = vmatprep.subr.bf16.mxu0 %v1877
    %1921 = vmatpush1.bf16.msra.mxu0 %v1874
    %1922 = vmatprep.subr.bf16.mxu0 0
    %1923 = vmatpush1.bf16.msra.mxu0 0
    %1924 = vmatprep.subr.bf16.mxu0 0
    %1925 = vmatpush1.bf16.msra.mxu0 0
    %1926 = vmatprep.subr.bf16.mxu0 0
    %1927 = vmatpush1.bf16.msra.mxu0 0
    %1928 = vmatprep.subr.bf16.mxu0 0
    %1929 = vmatpush1.bf16.msra.mxu0 0
    %1930 = vmatprep.subr.bf16.mxu0 0
    %1931 = vmatpush1.bf16.msra.mxu0 0
    %1932 = vmatprep.subr.bf16.mxu0 0
    %1933 = vmatpush1.bf16.msra.mxu0 0
    %1934 = vmatprep.subr.bf16.mxu0 0
    %1935 = vmatpush1.bf16.msra.mxu0 0
    %1936 = vmatprep.subr.bf16.mxu0 0
    %1937 = vmatpush1.bf16.msra.mxu0 0
    %1938 = vmatprep.subr.bf16.mxu0 0
    %1939 = vmatpush1.bf16.msra.mxu0 0
    %1940 = vmatprep.subr.bf16.mxu0 0
    %1941 = vmatpush1.bf16.msra.mxu0 0
    %1942 = vmatprep.subr.bf16.mxu0 0
    %1943 = vmatpush1.bf16.msra.mxu0 0
    %1944 = vmatprep.subr.bf16.mxu0 0
    %1945 = vmatpush1.bf16.msra.mxu0 0
    %1946 = vmatprep.subr.bf16.mxu0 0
    %1947 = vmatpush1.bf16.msra.mxu0 0
    %1948 = vmatprep.subr.bf16.mxu0 0
    %1949 = vmatpush1.bf16.msra.mxu0 0
    %1950 = vmatprep.subr.bf16.mxu0 0
    %1951 = vmatpush1.bf16.msra.mxu0 0
    %1952 = vmatprep.mubr.bf16.mxu0 0
    %1953 = vmatmul.mubr.bf16.gmra.mrb[0].mxu0 %v1865
    %v1954 = vpop.f32.mrb[0].mxu0
    %v1955 = vadd.f32 0.0, %v1954
    %v1956 = vpop.f32.mrb[0].mxu0
    %v1957 = vadd.f32 0.0, %v1956
    %v1958 = vpop.f32.mrb[0].mxu0
    %v1959 = vpop.f32.mrb[0].mxu0
    %1960 = vdwg.mxu0
    %v1961 = vadd.f32 %v1771, %v1914
    %v1962 = vadd.f32 %v1773, %v1916
    %v1963 = vadd.f32 %v1812, %v1955
    %v1964 = vadd.f32 %v1814, %v1957
    %s1965 = scalar_lea.vmem %s1, 3
    %v1966 = vld [vmem:[%s1965] ss:$8 sm:$0xf]
    %1967 = vrot.lane.b32.xlu0 %v211, 31
    %v1968 = vpop.permute.xlu0 %1967
    %1969 = vrot.lane.b32.xlu0 %v212, 31
    %v1970 = vpop.permute.xlu0 %1969
    %1971 = vrot.lane.b32.xlu0 %v213, 31
    %v1972 = vpop.permute.xlu0 %1971
    %1973 = vrot.lane.b32.xlu0 %v214, 31
    %v1974 = vpop.permute.xlu0 %1973
    %vm1975 = vcmp.lt.s32.totalorder %v226, 31
    %v1976 = vsel %vm1975, %v1972, %v1974
    %v1977 = vsel %vm1975, %v1970, %v1972
    %v1978 = vsel %vm1975, %v1968, %v1970
    %v1979 = vsel %vm1975, %v1974, %v1968
    %v1981 = vlaneseq
    %v1982 = vshrl.u32 %v1981, 7
    %v1983 = vsub.s32 0, %v1982
    %v1984 = vrot.slane %v1966, %v1983
    %v1985 = vlaneseq
    %v1986 = vshrl.u32 %v1985, 7
    %v1987 = vsub.s32 1, %v1986
    %v1988 = vrot.slane %v1966, %v1987
    %v1989 = vlaneseq
    %v1990 = vshrl.u32 %v1989, 7
    %v1991 = vsub.s32 2, %v1990
    %v1992 = vrot.slane %v1966, %v1991
    %v1993 = vlaneseq
    %v1994 = vshrl.u32 %v1993, 7
    %v1995 = vsub.s32 3, %v1994
    %v1996 = vrot.slane %v1966, %v1995
    %v2001 = vmul.f32 %v1979, %v1984
    %v2002 = vmul.f32 %v1978, %v1988
    %v2003 = vmul.f32 %v1977, %v1992
    %v2004 = vmul.f32 %v1976, %v1996
    %v2005 = vpack.c.bf16 %v2001, %v2001
    %v2006 = vpack.c.bf16 %v2002, %v2002
    %v2007 = vpack.c.bf16 %v2003, %v2003
    %v2008 = vpack.c.bf16 %v2004, %v2004
    %s2009 = scalar_lea.vmem %s7, 12
    %v2010 = vld [vmem:[%s2009] sm:$0xf]
    %v2012 = vsel %vm308, %v2010, 0
    %v2015 = vsel %vm312, %v2005, 0
    %v2018 = vsel %vm312, %v2006, 0
    %v2021 = vsel %vm312, %v2007, 0
    %v2024 = vsel %vm312, %v2008, 0
    %2026 = vmatprep.subr.bf16.mxu0 %v2018
    %2027 = vmatpush1.bf16.msra.mxu0 %v2015
    %2028 = vmatprep.subr.bf16.mxu0 0
    %2029 = vmatpush1.bf16.msra.mxu0 0
    %2030 = vmatprep.subr.bf16.mxu0 0
    %2031 = vmatpush1.bf16.msra.mxu0 0
    %2032 = vmatprep.subr.bf16.mxu0 0
    %2033 = vmatpush1.bf16.msra.mxu0 0
    %2034 = vmatprep.subr.bf16.mxu0 0
    %2035 = vmatpush1.bf16.msra.mxu0 0
    %2036 = vmatprep.subr.bf16.mxu0 0
    %2037 = vmatpush1.bf16.msra.mxu0 0
    %2038 = vmatprep.subr.bf16.mxu0 0
    %2039 = vmatpush1.bf16.msra.mxu0 0
    %2040 = vmatprep.subr.bf16.mxu0 0
    %2041 = vmatpush1.bf16.msra.mxu0 0
    %2042 = vmatprep.subr.bf16.mxu0 0
    %2043 = vmatpush1.bf16.msra.mxu0 0
    %2044 = vmatprep.subr.bf16.mxu0 0
    %2045 = vmatpush1.bf16.msra.mxu0 0
    %2046 = vmatprep.subr.bf16.mxu0 0
    %2047 = vmatpush1.bf16.msra.mxu0 0
    %2048 = vmatprep.subr.bf16.mxu0 0
    %2049 = vmatpush1.bf16.msra.mxu0 0
    %2050 = vmatprep.subr.bf16.mxu0 0
    %2051 = vmatpush1.bf16.msra.mxu0 0
    %2052 = vmatprep.subr.bf16.mxu0 0
    %2053 = vmatpush1.bf16.msra.mxu0 0
    %2054 = vmatprep.subr.bf16.mxu0 0
    %2055 = vmatpush1.bf16.msra.mxu0 0
    %2056 = vmatprep.subr.bf16.mxu0 0
    %2057 = vmatpush1.bf16.msra.mxu0 0
    %2058 = vmatprep.mubr.bf16.mxu0 0
    %2059 = vmatmul.mubr.bf16.gmra.mrb[0].mxu0 %v2012
    %v2060 = vpop.f32.mrb[0].mxu0
    %v2061 = vadd.f32 0.0, %v2060
    %v2062 = vpop.f32.mrb[0].mxu0
    %v2063 = vadd.f32 0.0, %v2062
    %v2064 = vpop.f32.mrb[0].mxu0
    %v2065 = vpop.f32.mrb[0].mxu0
    %2066 = vdwg.mxu0
    %2067 = vmatprep.subr.bf16.mxu0 %v2024
    %2068 = vmatpush1.bf16.msra.mxu0 %v2021
    %2069 = vmatprep.subr.bf16.mxu0 0
    %2070 = vmatpush1.bf16.msra.mxu0 0
    %2071 = vmatprep.subr.bf16.mxu0 0
    %2072 = vmatpush1.bf16.msra.mxu0 0
    %2073 = vmatprep.subr.bf16.mxu0 0
    %2074 = vmatpush1.bf16.msra.mxu0 0
    %2075 = vmatprep.subr.bf16.mxu0 0
    %2076 = vmatpush1.bf16.msra.mxu0 0
    %2077 = vmatprep.subr.bf16.mxu0 0
    %2078 = vmatpush1.bf16.msra.mxu0 0
    %2079 = vmatprep.subr.bf16.mxu0 0
    %2080 = vmatpush1.bf16.msra.mxu0 0
    %2081 = vmatprep.subr.bf16.mxu0 0
    %2082 = vmatpush1.bf16.msra.mxu0 0
    %2083 = vmatprep.subr.bf16.mxu0 0
    %2084 = vmatpush1.bf16.msra.mxu0 0
    %2085 = vmatprep.subr.bf16.mxu0 0
    %2086 = vmatpush1.bf16.msra.mxu0 0
    %2087 = vmatprep.subr.bf16.mxu0 0
    %2088 = vmatpush1.bf16.msra.mxu0 0
    %2089 = vmatprep.subr.bf16.mxu0 0
    %2090 = vmatpush1.bf16.msra.mxu0 0
    %2091 = vmatprep.subr.bf16.mxu0 0
    %2092 = vmatpush1.bf16.msra.mxu0 0
    %2093 = vmatprep.subr.bf16.mxu0 0
    %2094 = vmatpush1.bf16.msra.mxu0 0
    %2095 = vmatprep.subr.bf16.mxu0 0
    %2096 = vmatpush1.bf16.msra.mxu0 0
    %2097 = vmatprep.subr.bf16.mxu0 0
    %2098 = vmatpush1.bf16.msra.mxu0 0
    %2099 = vmatprep.mubr.bf16.mxu0 0
    %2100 = vmatmul.mubr.bf16.gmra.mrb[0].mxu0 %v2012
    %v2101 = vpop.f32.mrb[0].mxu0
    %v2102 = vadd.f32 0.0, %v2101
    %v2103 = vpop.f32.mrb[0].mxu0
    %v2104 = vadd.f32 0.0, %v2103
    %v2105 = vpop.f32.mrb[0].mxu0
    %v2106 = vpop.f32.mrb[0].mxu0
    %2107 = vdwg.mxu0
    %v2108 = vadd.f32 %v1961, %v2061
    %v2109 = vadd.f32 %v1962, %v2063
    %v2110 = vadd.f32 %v1963, %v2102
    %v2111 = vadd.f32 %v1964, %v2104
    %s2112 = scalar_lea.vmem %s1, 4
    %v2113 = vld [vmem:[%s2112] ss:$8 sm:$0xf]
    %2114 = vrot.lane.b32.xlu0 %v211, 30
    %v2115 = vpop.permute.xlu0 %2114
    %2116 = vrot.lane.b32.xlu0 %v212, 30
    %v2117 = vpop.permute.xlu0 %2116
    %2118 = vrot.lane.b32.xlu0 %v213, 30
    %v2119 = vpop.permute.xlu0 %2118
    %2120 = vrot.lane.b32.xlu0 %v214, 30
    %v2121 = vpop.permute.xlu0 %2120
    %vm2122 = vcmp.lt.s32.totalorder %v226, 30
    %v2123 = vsel %vm2122, %v2119, %v2121
    %v2124 = vsel %vm2122, %v2117, %v2119
    %v2125 = vsel %vm2122, %v2115, %v2117
    %v2126 = vsel %vm2122, %v2121, %v2115
    %v2128 = vlaneseq
    %v2129 = vshrl.u32 %v2128, 7
    %v2130 = vsub.s32 0, %v2129
    %v2131 = vrot.slane %v2113, %v2130
    %v2132 = vlaneseq
    %v2133 = vshrl.u32 %v2132, 7
    %v2134 = vsub.s32 1, %v2133
    %v2135 = vrot.slane %v2113, %v2134
    %v2136 = vlaneseq
    %v2137 = vshrl.u32 %v2136, 7
    %v2138 = vsub.s32 2, %v2137
    %v2139 = vrot.slane %v2113, %v2138
    %v2140 = vlaneseq
    %v2141 = vshrl.u32 %v2140, 7
    %v2142 = vsub.s32 3, %v2141
    %v2143 = vrot.slane %v2113, %v2142
    %v2148 = vmul.f32 %v2126, %v2131
    %v2149 = vmul.f32 %v2125, %v2135
    %v2150 = vmul.f32 %v2124, %v2139
    %v2151 = vmul.f32 %v2123, %v2143
    %v2152 = vpack.c.bf16 %v2148, %v2148
    %v2153 = vpack.c.bf16 %v2149, %v2149
    %v2154 = vpack.c.bf16 %v2150, %v2150
    %v2155 = vpack.c.bf16 %v2151, %v2151
    %s2156 = scalar_lea.vmem %s7, 16
    %v2157 = vld [vmem:[%s2156] sm:$0xf]
    %v2159 = vsel %vm308, %v2157, 0
    %v2162 = vsel %vm312, %v2152, 0
    %v2165 = vsel %vm312, %v2153, 0
    %v2168 = vsel %vm312, %v2154, 0
    %v2171 = vsel %vm312, %v2155, 0
    %2173 = vmatprep.subr.bf16.mxu0 %v2165
    %2174 = vmatpush1.bf16.msra.mxu0 %v2162
    %2175 = vmatprep.subr.bf16.mxu0 0
    %2176 = vmatpush1.bf16.msra.mxu0 0
    %2177 = vmatprep.subr.bf16.mxu0 0
    %2178 = vmatpush1.bf16.msra.mxu0 0
    %2179 = vmatprep.subr.bf16.mxu0 0
    %2180 = vmatpush1.bf16.msra.mxu0 0
    %2181 = vmatprep.subr.bf16.mxu0 0
    %2182 = vmatpush1.bf16.msra.mxu0 0
    %2183 = vmatprep.subr.bf16.mxu0 0
    %2184 = vmatpush1.bf16.msra.mxu0 0
    %2185 = vmatprep.subr.bf16.mxu0 0
    %2186 = vmatpush1.bf16.msra.mxu0 0
    %2187 = vmatprep.subr.bf16.mxu0 0
    %2188 = vmatpush1.bf16.msra.mxu0 0
    %2189 = vmatprep.subr.bf16.mxu0 0
    %2190 = vmatpush1.bf16.msra.mxu0 0
    %2191 = vmatprep.subr.bf16.mxu0 0
    %2192 = vmatpush1.bf16.msra.mxu0 0
    %2193 = vmatprep.subr.bf16.mxu0 0
    %2194 = vmatpush1.bf16.msra.mxu0 0
    %2195 = vmatprep.subr.bf16.mxu0 0
    %2196 = vmatpush1.bf16.msra.mxu0 0
    %2197 = vmatprep.subr.bf16.mxu0 0
    %2198 = vmatpush1.bf16.msra.mxu0 0
    %2199 = vmatprep.subr.bf16.mxu0 0
    %2200 = vmatpush1.bf16.msra.mxu0 0
    %2201 = vmatprep.subr.bf16.mxu0 0
    %2202 = vmatpush1.bf16.msra.mxu0 0
    %2203 = vmatprep.subr.bf16.mxu0 0
    %2204 = vmatpush1.bf16.msra.mxu0 0
    %2205 = vmatprep.mubr.bf16.mxu0 0
    %2206 = vmatmul.mubr.bf16.gmra.mrb[0].mxu0 %v2159
    %v2207 = vpop.f32.mrb[0].mxu0
    %v2208 = vadd.f32 0.0, %v2207
    %v2209 = vpop.f32.mrb[0].mxu0
    %v2210 = vadd.f32 0.0, %v2209
    %v2211 = vpop.f32.mrb[0].mxu0
    %v2212 = vpop.f32.mrb[0].mxu0
    %2213 = vdwg.mxu0
    %2214 = vmatprep.subr.bf16.mxu0 %v2171
    %2215 = vmatpush1.bf16.msra.mxu0 %v2168
    %2216 = vmatprep.subr.bf16.mxu0 0
    %2217 = vmatpush1.bf16.msra.mxu0 0
    %2218 = vmatprep.subr.bf16.mxu0 0
    %2219 = vmatpush1.bf16.msra.mxu0 0
    %2220 = vmatprep.subr.bf16.mxu0 0
    %2221 = vmatpush1.bf16.msra.mxu0 0
    %2222 = vmatprep.subr.bf16.mxu0 0
    %2223 = vmatpush1.bf16.msra.mxu0 0
    %2224 = vmatprep.subr.bf16.mxu0 0
    %2225 = vmatpush1.bf16.msra.mxu0 0
    %2226 = vmatprep.subr.bf16.mxu0 0
    %2227 = vmatpush1.bf16.msra.mxu0 0
    %2228 = vmatprep.subr.bf16.mxu0 0
    %2229 = vmatpush1.bf16.msra.mxu0 0
    %2230 = vmatprep.subr.bf16.mxu0 0
    %2231 = vmatpush1.bf16.msra.mxu0 0
    %2232 = vmatprep.subr.bf16.mxu0 0
    %2233 = vmatpush1.bf16.msra.mxu0 0
    %2234 = vmatprep.subr.bf16.mxu0 0
    %2235 = vmatpush1.bf16.msra.mxu0 0
    %2236 = vmatprep.subr.bf16.mxu0 0
    %2237 = vmatpush1.bf16.msra.mxu0 0
    %2238 = vmatprep.subr.bf16.mxu0 0
    %2239 = vmatpush1.bf16.msra.mxu0 0
    %2240 = vmatprep.subr.bf16.mxu0 0
    %2241 = vmatpush1.bf16.msra.mxu0 0
    %2242 = vmatprep.subr.bf16.mxu0 0
    %2243 = vmatpush1.bf16.msra.mxu0 0
    %2244 = vmatprep.subr.bf16.mxu0 0
    %2245 = vmatpush1.bf16.msra.mxu0 0
    %2246 = vmatprep.mubr.bf16.mxu0 0
    %2247 = vmatmul.mubr.bf16.gmra.mrb[0].mxu0 %v2159
    %v2248 = vpop.f32.mrb[0].mxu0
    %v2249 = vadd.f32 0.0, %v2248
    %v2250 = vpop.f32.mrb[0].mxu0
    %v2251 = vadd.f32 0.0, %v2250
    %v2252 = vpop.f32.mrb[0].mxu0
    %v2253 = vpop.f32.mrb[0].mxu0
    %2254 = vdwg.mxu0
    %v2255 = vadd.f32 %v2108, %v2208
    %v2256 = vadd.f32 %v2109, %v2210
    %v2257 = vadd.f32 %v2110, %v2249
    %v2258 = vadd.f32 %v2111, %v2251
    %s2259 = scalar_lea.vmem %s1, 5
    %v2260 = vld [vmem:[%s2259] ss:$8 sm:$0xf]
    %2261 = vrot.lane.b32.xlu0 %v211, 18
    %v2262 = vpop.permute.xlu0 %2261
    %2263 = vrot.lane.b32.xlu0 %v212, 18
    %v2264 = vpop.permute.xlu0 %2263
    %2265 = vrot.lane.b32.xlu0 %v213, 18
    %v2266 = vpop.permute.xlu0 %2265
    %2267 = vrot.lane.b32.xlu0 %v214, 18
    %v2268 = vpop.permute.xlu0 %2267
    %vm2269 = vcmp.lt.s32.totalorder %v226, 18
    %v2270 = vsel %vm2269, %v2266, %v2268
    %v2271 = vsel %vm2269, %v2264, %v2266
    %v2272 = vsel %vm2269, %v2262, %v2264
    %v2273 = vsel %vm2269, %v2268, %v2262
    %v2275 = vlaneseq
    %v2276 = vshrl.u32 %v2275, 7
    %v2277 = vsub.s32 0, %v2276
    %v2278 = vrot.slane %v2260, %v2277
    %v2279 = vlaneseq
    %v2280 = vshrl.u32 %v2279, 7
    %v2281 = vsub.s32 1, %v2280
    %v2282 = vrot.slane %v2260, %v2281
    %v2283 = vlaneseq
    %v2284 = vshrl.u32 %v2283, 7
    %v2285 = vsub.s32 2, %v2284
    %v2286 = vrot.slane %v2260, %v2285
    %v2287 = vlaneseq
    %v2288 = vshrl.u32 %v2287, 7
    %v2289 = vsub.s32 3, %v2288
    %v2290 = vrot.slane %v2260, %v2289
    %v2295 = vmul.f32 %v2273, %v2278
    %v2296 = vmul.f32 %v2272, %v2282
    %v2297 = vmul.f32 %v2271, %v2286
    %v2298 = vmul.f32 %v2270, %v2290
    %v2299 = vpack.c.bf16 %v2295, %v2295
    %v2300 = vpack.c.bf16 %v2296, %v2296
    %v2301 = vpack.c.bf16 %v2297, %v2297
    %v2302 = vpack.c.bf16 %v2298, %v2298
    %s2303 = scalar_lea.vmem %s7, 20
    %v2304 = vld [vmem:[%s2303] sm:$0xf]
    %v2306 = vsel %vm308, %v2304, 0
    %v2309 = vsel %vm312, %v2299, 0
    %v2312 = vsel %vm312, %v2300, 0
    %v2315 = vsel %vm312, %v2301, 0
    %v2318 = vsel %vm312, %v2302, 0
    %2320 = vmatprep.subr.bf16.mxu0 %v2312
    %2321 = vmatpush1.bf16.msra.mxu0 %v2309
    %2322 = vmatprep.subr.bf16.mxu0 0
    %2323 = vmatpush1.bf16.msra.mxu0 0
    %2324 = vmatprep.subr.bf16.mxu0 0
    %2325 = vmatpush1.bf16.msra.mxu0 0
    %2326 = vmatprep.subr.bf16.mxu0 0
    %2327 = vmatpush1.bf16.msra.mxu0 0
    %2328 = vmatprep.subr.bf16.mxu0 0
    %2329 = vmatpush1.bf16.msra.mxu0 0
    %2330 = vmatprep.subr.bf16.mxu0 0
    %2331 = vmatpush1.bf16.msra.mxu0 0
    %2332 = vmatprep.subr.bf16.mxu0 0
    %2333 = vmatpush1.bf16.msra.mxu0 0
    %2334 = vmatprep.subr.bf16.mxu0 0
    %2335 = vmatpush1.bf16.msra.mxu0 0
    %2336 = vmatprep.subr.bf16.mxu0 0
    %2337 = vmatpush1.bf16.msra.mxu0 0
    %2338 = vmatprep.subr.bf16.mxu0 0
    %2339 = vmatpush1.bf16.msra.mxu0 0
    %2340 = vmatprep.subr.bf16.mxu0 0
    %2341 = vmatpush1.bf16.msra.mxu0 0
    %2342 = vmatprep.subr.bf16.mxu0 0
    %2343 = vmatpush1.bf16.msra.mxu0 0
    %2344 = vmatprep.subr.bf16.mxu0 0
    %2345 = vmatpush1.bf16.msra.mxu0 0
    %2346 = vmatprep.subr.bf16.mxu0 0
    %2347 = vmatpush1.bf16.msra.mxu0 0
    %2348 = vmatprep.subr.bf16.mxu0 0
    %2349 = vmatpush1.bf16.msra.mxu0 0
    %2350 = vmatprep.subr.bf16.mxu0 0
    %2351 = vmatpush1.bf16.msra.mxu0 0
    %2352 = vmatprep.mubr.bf16.mxu0 0
    %2353 = vmatmul.mubr.bf16.gmra.mrb[0].mxu0 %v2306
    %v2354 = vpop.f32.mrb[0].mxu0
    %v2355 = vadd.f32 0.0, %v2354
    %v2356 = vpop.f32.mrb[0].mxu0
    %v2357 = vadd.f32 0.0, %v2356
    %v2358 = vpop.f32.mrb[0].mxu0
    %v2359 = vpop.f32.mrb[0].mxu0
    %2360 = vdwg.mxu0
    %2361 = vmatprep.subr.bf16.mxu0 %v2318
    %2362 = vmatpush1.bf16.msra.mxu0 %v2315
    %2363 = vmatprep.subr.bf16.mxu0 0
    %2364 = vmatpush1.bf16.msra.mxu0 0
    %2365 = vmatprep.subr.bf16.mxu0 0
    %2366 = vmatpush1.bf16.msra.mxu0 0
    %2367 = vmatprep.subr.bf16.mxu0 0
    %2368 = vmatpush1.bf16.msra.mxu0 0
    %2369 = vmatprep.subr.bf16.mxu0 0
    %2370 = vmatpush1.bf16.msra.mxu0 0
    %2371 = vmatprep.subr.bf16.mxu0 0
    %2372 = vmatpush1.bf16.msra.mxu0 0
    %2373 = vmatprep.subr.bf16.mxu0 0
    %2374 = vmatpush1.bf16.msra.mxu0 0
    %2375 = vmatprep.subr.bf16.mxu0 0
    %2376 = vmatpush1.bf16.msra.mxu0 0
    %2377 = vmatprep.subr.bf16.mxu0 0
    %2378 = vmatpush1.bf16.msra.mxu0 0
    %2379 = vmatprep.subr.bf16.mxu0 0
    %2380 = vmatpush1.bf16.msra.mxu0 0
    %2381 = vmatprep.subr.bf16.mxu0 0
    %2382 = vmatpush1.bf16.msra.mxu0 0
    %2383 = vmatprep.subr.bf16.mxu0 0
    %2384 = vmatpush1.bf16.msra.mxu0 0
    %2385 = vmatprep.subr.bf16.mxu0 0
    %2386 = vmatpush1.bf16.msra.mxu0 0
    %2387 = vmatprep.subr.bf16.mxu0 0
    %2388 = vmatpush1.bf16.msra.mxu0 0
    %2389 = vmatprep.subr.bf16.mxu0 0
    %2390 = vmatpush1.bf16.msra.mxu0 0
    %2391 = vmatprep.subr.bf16.mxu0 0
    %2392 = vmatpush1.bf16.msra.mxu0 0
    %2393 = vmatprep.mubr.bf16.mxu0 0
    %2394 = vmatmul.mubr.bf16.gmra.mrb[0].mxu0 %v2306
    %v2395 = vpop.f32.mrb[0].mxu0
    %v2396 = vadd.f32 0.0, %v2395
    %v2397 = vpop.f32.mrb[0].mxu0
    %v2398 = vadd.f32 0.0, %v2397
    %v2399 = vpop.f32.mrb[0].mxu0
    %v2400 = vpop.f32.mrb[0].mxu0
    %2401 = vdwg.mxu0
    %v2402 = vadd.f32 %v2255, %v2355
    %v2403 = vadd.f32 %v2256, %v2357
    %v2404 = vadd.f32 %v2257, %v2396
    %v2405 = vadd.f32 %v2258, %v2398
    %2406 = vrot.lane.b32.xlu0 %v211, 17
    %v2407 = vpop.permute.xlu0 %2406
    %2408 = vrot.lane.b32.xlu0 %v212, 17
    %v2409 = vpop.permute.xlu0 %2408
    %2410 = vrot.lane.b32.xlu0 %v213, 17
    %v2411 = vpop.permute.xlu0 %2410
    %2412 = vrot.lane.b32.xlu0 %v214, 17
    %v2413 = vpop.permute.xlu0 %2412
    %v2414 = vsel %vm227, %v2411, %v2413
    %v2415 = vsel %vm227, %v2409, %v2411
    %v2416 = vsel %vm227, %v2407, %v2409
    %v2417 = vsel %vm227, %v2413, %v2407
    %v2418 = vmul.f32 %v2417, %v236
    %v2419 = vmul.f32 %v2416, %v240
    %v2420 = vmul.f32 %v2415, %v244
    %v2421 = vmul.f32 %v2414, %v248
    %v2422 = vpack.c.bf16 %v2418, %v2418
    %v2423 = vpack.c.bf16 %v2419, %v2419
    %v2424 = vpack.c.bf16 %v2420, %v2420
    %v2425 = vpack.c.bf16 %v2421, %v2421
    %s2426 = scalar_lea.vmem %s7, 24
    %v2427 = vld [vmem:[%s2426] sm:$0xf]
    %v2429 = vsel %vm308, %v2427, 0
    %v2432 = vsel %vm312, %v2422, 0
    %v2435 = vsel %vm312, %v2423, 0
    %v2438 = vsel %vm312, %v2424, 0
    %v2441 = vsel %vm312, %v2425, 0
    %2443 = vmatprep.subr.bf16.mxu0 %v2435
    %2444 = vmatpush1.bf16.msra.mxu0 %v2432
    %2445 = vmatprep.subr.bf16.mxu0 0
    %2446 = vmatpush1.bf16.msra.mxu0 0
    %2447 = vmatprep.subr.bf16.mxu0 0
    %2448 = vmatpush1.bf16.msra.mxu0 0
    %2449 = vmatprep.subr.bf16.mxu0 0
    %2450 = vmatpush1.bf16.msra.mxu0 0
    %2451 = vmatprep.subr.bf16.mxu0 0
    %2452 = vmatpush1.bf16.msra.mxu0 0
    %2453 = vmatprep.subr.bf16.mxu0 0
    %2454 = vmatpush1.bf16.msra.mxu0 0
    %2455 = vmatprep.subr.bf16.mxu0 0
    %2456 = vmatpush1.bf16.msra.mxu0 0
    %2457 = vmatprep.subr.bf16.mxu0 0
    %2458 = vmatpush1.bf16.msra.mxu0 0
    %2459 = vmatprep.subr.bf16.mxu0 0
    %2460 = vmatpush1.bf16.msra.mxu0 0
    %2461 = vmatprep.subr.bf16.mxu0 0
    %2462 = vmatpush1.bf16.msra.mxu0 0
    %2463 = vmatprep.subr.bf16.mxu0 0
    %2464 = vmatpush1.bf16.msra.mxu0 0
    %2465 = vmatprep.subr.bf16.mxu0 0
    %2466 = vmatpush1.bf16.msra.mxu0 0
    %2467 = vmatprep.subr.bf16.mxu0 0
    %2468 = vmatpush1.bf16.msra.mxu0 0
    %2469 = vmatprep.subr.bf16.mxu0 0
    %2470 = vmatpush1.bf16.msra.mxu0 0
    %2471 = vmatprep.subr.bf16.mxu0 0
    %2472 = vmatpush1.bf16.msra.mxu0 0
    %2473 = vmatprep.subr.bf16.mxu0 0
    %2474 = vmatpush1.bf16.msra.mxu0 0
    %2475 = vmatprep.mubr.bf16.mxu0 0
    %2476 = vmatmul.mubr.bf16.gmra.mrb[0].mxu0 %v2429
    %v2477 = vpop.f32.mrb[0].mxu0
    %v2478 = vadd.f32 0.0, %v2477
    %v2479 = vpop.f32.mrb[0].mxu0
    %v2480 = vadd.f32 0.0, %v2479
    %v2481 = vpop.f32.mrb[0].mxu0
    %v2482 = vpop.f32.mrb[0].mxu0
    %2483 = vdwg.mxu0
    %2484 = vmatprep.subr.bf16.mxu0 %v2441
    %2485 = vmatpush1.bf16.msra.mxu0 %v2438
    %2486 = vmatprep.subr.bf16.mxu0 0
    %2487 = vmatpush1.bf16.msra.mxu0 0
    %2488 = vmatprep.subr.bf16.mxu0 0
    %2489 = vmatpush1.bf16.msra.mxu0 0
    %2490 = vmatprep.subr.bf16.mxu0 0
    %2491 = vmatpush1.bf16.msra.mxu0 0
    %2492 = vmatprep.subr.bf16.mxu0 0
    %2493 = vmatpush1.bf16.msra.mxu0 0
    %2494 = vmatprep.subr.bf16.mxu0 0
    %2495 = vmatpush1.bf16.msra.mxu0 0
    %2496 = vmatprep.subr.bf16.mxu0 0
    %2497 = vmatpush1.bf16.msra.mxu0 0
    %2498 = vmatprep.subr.bf16.mxu0 0
    %2499 = vmatpush1.bf16.msra.mxu0 0
    %2500 = vmatprep.subr.bf16.mxu0 0
    %2501 = vmatpush1.bf16.msra.mxu0 0
    %2502 = vmatprep.subr.bf16.mxu0 0
    %2503 = vmatpush1.bf16.msra.mxu0 0
    %2504 = vmatprep.subr.bf16.mxu0 0
    %2505 = vmatpush1.bf16.msra.mxu0 0
    %2506 = vmatprep.subr.bf16.mxu0 0
    %2507 = vmatpush1.bf16.msra.mxu0 0
    %2508 = vmatprep.subr.bf16.mxu0 0
    %2509 = vmatpush1.bf16.msra.mxu0 0
    %2510 = vmatprep.subr.bf16.mxu0 0
    %2511 = vmatpush1.bf16.msra.mxu0 0
    %2512 = vmatprep.subr.bf16.mxu0 0
    %2513 = vmatpush1.bf16.msra.mxu0 0
    %2514 = vmatprep.subr.bf16.mxu0 0
    %2515 = vmatpush1.bf16.msra.mxu0 0
    %2516 = vmatprep.mubr.bf16.mxu0 0
    %2517 = vmatmul.mubr.bf16.gmra.mrb[0].mxu0 %v2429
    %v2518 = vpop.f32.mrb[0].mxu0
    %v2519 = vadd.f32 0.0, %v2518
    %v2520 = vpop.f32.mrb[0].mxu0
    %v2521 = vadd.f32 0.0, %v2520
    %v2522 = vpop.f32.mrb[0].mxu0
    %v2523 = vpop.f32.mrb[0].mxu0
    %2524 = vdwg.mxu0
    %v2525 = vadd.f32 %v2402, %v2478
    %v2526 = vadd.f32 %v2403, %v2480
    %v2527 = vadd.f32 %v2404, %v2519
    %v2528 = vadd.f32 %v2405, %v2521
    %2529 = vrot.lane.b32.xlu0 %v211, 16
    %v2530 = vpop.permute.xlu0 %2529
    %2531 = vrot.lane.b32.xlu0 %v212, 16
    %v2532 = vpop.permute.xlu0 %2531
    %2533 = vrot.lane.b32.xlu0 %v213, 16
    %v2534 = vpop.permute.xlu0 %2533
    %2535 = vrot.lane.b32.xlu0 %v214, 16
    %v2536 = vpop.permute.xlu0 %2535
    %v2537 = vsel %vm272, %v2534, %v2536
    %v2538 = vsel %vm272, %v2532, %v2534
    %v2539 = vsel %vm272, %v2530, %v2532
    %v2540 = vsel %vm272, %v2536, %v2530
    %v2541 = vmul.f32 %v2540, %v281
    %v2542 = vmul.f32 %v2539, %v285
    %v2543 = vmul.f32 %v2538, %v289
    %v2544 = vmul.f32 %v2537, %v293
    %v2545 = vpack.c.bf16 %v2541, %v2541
    %v2546 = vpack.c.bf16 %v2542, %v2542
    %v2547 = vpack.c.bf16 %v2543, %v2543
    %v2548 = vpack.c.bf16 %v2544, %v2544
    %s2549 = scalar_lea.vmem %s7, 28
    %v2550 = vld [vmem:[%s2549] sm:$0xf]
    %v2552 = vsel %vm308, %v2550, 0
    %v2555 = vsel %vm312, %v2545, 0
    %v2558 = vsel %vm312, %v2546, 0
    %v2561 = vsel %vm312, %v2547, 0
    %v2564 = vsel %vm312, %v2548, 0
    %2566 = vmatprep.subr.bf16.mxu0 %v2558
    %2567 = vmatpush1.bf16.msra.mxu0 %v2555
    %2568 = vmatprep.subr.bf16.mxu0 0
    %2569 = vmatpush1.bf16.msra.mxu0 0
    %2570 = vmatprep.subr.bf16.mxu0 0
    %2571 = vmatpush1.bf16.msra.mxu0 0
    %2572 = vmatprep.subr.bf16.mxu0 0
    %2573 = vmatpush1.bf16.msra.mxu0 0
    %2574 = vmatprep.subr.bf16.mxu0 0
    %2575 = vmatpush1.bf16.msra.mxu0 0
    %2576 = vmatprep.subr.bf16.mxu0 0
    %2577 = vmatpush1.bf16.msra.mxu0 0
    %2578 = vmatprep.subr.bf16.mxu0 0
    %2579 = vmatpush1.bf16.msra.mxu0 0
    %2580 = vmatprep.subr.bf16.mxu0 0
    %2581 = vmatpush1.bf16.msra.mxu0 0
    %2582 = vmatprep.subr.bf16.mxu0 0
    %2583 = vmatpush1.bf16.msra.mxu0 0
    %2584 = vmatprep.subr.bf16.mxu0 0
    %2585 = vmatpush1.bf16.msra.mxu0 0
    %2586 = vmatprep.subr.bf16.mxu0 0
    %2587 = vmatpush1.bf16.msra.mxu0 0
    %2588 = vmatprep.subr.bf16.mxu0 0
    %2589 = vmatpush1.bf16.msra.mxu0 0
    %2590 = vmatprep.subr.bf16.mxu0 0
    %2591 = vmatpush1.bf16.msra.mxu0 0
    %2592 = vmatprep.subr.bf16.mxu0 0
    %2593 = vmatpush1.bf16.msra.mxu0 0
    %2594 = vmatprep.subr.bf16.mxu0 0
    %2595 = vmatpush1.bf16.msra.mxu0 0
    %2596 = vmatprep.subr.bf16.mxu0 0
    %2597 = vmatpush1.bf16.msra.mxu0 0
    %2598 = vmatprep.mubr.bf16.mxu0 0
    %2599 = vmatmul.mubr.bf16.gmra.mrb[0].mxu0 %v2552
    %v2600 = vpop.f32.mrb[0].mxu0
    %v2601 = vadd.f32 0.0, %v2600
    %v2602 = vpop.f32.mrb[0].mxu0
    %v2603 = vadd.f32 0.0, %v2602
    %v2604 = vpop.f32.mrb[0].mxu0
    %v2605 = vpop.f32.mrb[0].mxu0
    %2606 = vdwg.mxu0
    %2607 = vmatprep.subr.bf16.mxu0 %v2564
    %2608 = vmatpush1.bf16.msra.mxu0 %v2561
    %2609 = vmatprep.subr.bf16.mxu0 0
    %2610 = vmatpush1.bf16.msra.mxu0 0
    %2611 = vmatprep.subr.bf16.mxu0 0
    %2612 = vmatpush1.bf16.msra.mxu0 0
    %2613 = vmatprep.subr.bf16.mxu0 0
    %2614 = vmatpush1.bf16.msra.mxu0 0
    %2615 = vmatprep.subr.bf16.mxu0 0
    %2616 = vmatpush1.bf16.msra.mxu0 0
    %2617 = vmatprep.subr.bf16.mxu0 0
    %2618 = vmatpush1.bf16.msra.mxu0 0
    %2619 = vmatprep.subr.bf16.mxu0 0
    %2620 = vmatpush1.bf16.msra.mxu0 0
    %2621 = vmatprep.subr.bf16.mxu0 0
    %2622 = vmatpush1.bf16.msra.mxu0 0
    %2623 = vmatprep.subr.bf16.mxu0 0
    %2624 = vmatpush1.bf16.msra.mxu0 0
    %2625 = vmatprep.subr.bf16.mxu0 0
    %2626 = vmatpush1.bf16.msra.mxu0 0
    %2627 = vmatprep.subr.bf16.mxu0 0
    %2628 = vmatpush1.bf16.msra.mxu0 0
    %2629 = vmatprep.subr.bf16.mxu0 0
    %2630 = vmatpush1.bf16.msra.mxu0 0
    %2631 = vmatprep.subr.bf16.mxu0 0
    %2632 = vmatpush1.bf16.msra.mxu0 0
    %2633 = vmatprep.subr.bf16.mxu0 0
    %2634 = vmatpush1.bf16.msra.mxu0 0
    %2635 = vmatprep.subr.bf16.mxu0 0
    %2636 = vmatpush1.bf16.msra.mxu0 0
    %2637 = vmatprep.subr.bf16.mxu0 0
    %2638 = vmatpush1.bf16.msra.mxu0 0
    %2639 = vmatprep.mubr.bf16.mxu0 0
    %2640 = vmatmul.mubr.bf16.gmra.mrb[0].mxu0 %v2552
    %v2641 = vpop.f32.mrb[0].mxu0
    %v2642 = vadd.f32 0.0, %v2641
    %v2643 = vpop.f32.mrb[0].mxu0
    %v2644 = vadd.f32 0.0, %v2643
    %v2645 = vpop.f32.mrb[0].mxu0
    %v2646 = vpop.f32.mrb[0].mxu0
    %2647 = vdwg.mxu0
    %v2648 = vadd.f32 %v2525, %v2601
    %v2649 = vadd.f32 %v2526, %v2603
    %v2650 = vadd.f32 %v2527, %v2642
    %v2651 = vadd.f32 %v2528, %v2644
    %2652 = vrot.lane.b32.xlu0 %v211, 15
    %v2653 = vpop.permute.xlu0 %2652
    %2654 = vrot.lane.b32.xlu0 %v212, 15
    %v2655 = vpop.permute.xlu0 %2654
    %2656 = vrot.lane.b32.xlu0 %v213, 15
    %v2657 = vpop.permute.xlu0 %2656
    %2658 = vrot.lane.b32.xlu0 %v214, 15
    %v2659 = vpop.permute.xlu0 %2658
    %v2660 = vsel %vm514, %v2657, %v2659
    %v2661 = vsel %vm514, %v2655, %v2657
    %v2662 = vsel %vm514, %v2653, %v2655
    %v2663 = vsel %vm514, %v2659, %v2653
    %v2664 = vmul.f32 %v2663, %v523
    %v2665 = vmul.f32 %v2662, %v527
    %v2666 = vmul.f32 %v2661, %v531
    %v2667 = vmul.f32 %v2660, %v535
    %v2668 = vpack.c.bf16 %v2664, %v2664
    %v2669 = vpack.c.bf16 %v2665, %v2665
    %v2670 = vpack.c.bf16 %v2666, %v2666
    %v2671 = vpack.c.bf16 %v2667, %v2667
    %s2672 = scalar_lea.vmem %s7, 32
    %v2673 = vld [vmem:[%s2672] sm:$0xf]
    %v2675 = vsel %vm308, %v2673, 0
    %v2678 = vsel %vm312, %v2668, 0
    %v2681 = vsel %vm312, %v2669, 0
    %v2684 = vsel %vm312, %v2670, 0
    %v2687 = vsel %vm312, %v2671, 0
    %2689 = vmatprep.subr.bf16.mxu0 %v2681
    %2690 = vmatpush1.bf16.msra.mxu0 %v2678
    %2691 = vmatprep.subr.bf16.mxu0 0
    %2692 = vmatpush1.bf16.msra.mxu0 0
    %2693 = vmatprep.subr.bf16.mxu0 0
    %2694 = vmatpush1.bf16.msra.mxu0 0
    %2695 = vmatprep.subr.bf16.mxu0 0
    %2696 = vmatpush1.bf16.msra.mxu0 0
    %2697 = vmatprep.subr.bf16.mxu0 0
    %2698 = vmatpush1.bf16.msra.mxu0 0
    %2699 = vmatprep.subr.bf16.mxu0 0
    %2700 = vmatpush1.bf16.msra.mxu0 0
    %2701 = vmatprep.subr.bf16.mxu0 0
    %2702 = vmatpush1.bf16.msra.mxu0 0
    %2703 = vmatprep.subr.bf16.mxu0 0
    %2704 = vmatpush1.bf16.msra.mxu0 0
    %2705 = vmatprep.subr.bf16.mxu0 0
    %2706 = vmatpush1.bf16.msra.mxu0 0
    %2707 = vmatprep.subr.bf16.mxu0 0
    %2708 = vmatpush1.bf16.msra.mxu0 0
    %2709 = vmatprep.subr.bf16.mxu0 0
    %2710 = vmatpush1.bf16.msra.mxu0 0
    %2711 = vmatprep.subr.bf16.mxu0 0
    %2712 = vmatpush1.bf16.msra.mxu0 0
    %2713 = vmatprep.subr.bf16.mxu0 0
    %2714 = vmatpush1.bf16.msra.mxu0 0
    %2715 = vmatprep.subr.bf16.mxu0 0
    %2716 = vmatpush1.bf16.msra.mxu0 0
    %2717 = vmatprep.subr.bf16.mxu0 0
    %2718 = vmatpush1.bf16.msra.mxu0 0
    %2719 = vmatprep.subr.bf16.mxu0 0
    %2720 = vmatpush1.bf16.msra.mxu0 0
    %2721 = vmatprep.mubr.bf16.mxu0 0
    %2722 = vmatmul.mubr.bf16.gmra.mrb[0].mxu0 %v2675
    %v2723 = vpop.f32.mrb[0].mxu0
    %v2724 = vadd.f32 0.0, %v2723
    %v2725 = vpop.f32.mrb[0].mxu0
    %v2726 = vadd.f32 0.0, %v2725
    %v2727 = vpop.f32.mrb[0].mxu0
    %v2728 = vpop.f32.mrb[0].mxu0
    %2729 = vdwg.mxu0
    %2730 = vmatprep.subr.bf16.mxu0 %v2687
    %2731 = vmatpush1.bf16.msra.mxu0 %v2684
    %2732 = vmatprep.subr.bf16.mxu0 0
    %2733 = vmatpush1.bf16.msra.mxu0 0
    %2734 = vmatprep.subr.bf16.mxu0 0
    %2735 = vmatpush1.bf16.msra.mxu0 0
    %2736 = vmatprep.subr.bf16.mxu0 0
    %2737 = vmatpush1.bf16.msra.mxu0 0
    %2738 = vmatprep.subr.bf16.mxu0 0
    %2739 = vmatpush1.bf16.msra.mxu0 0
    %2740 = vmatprep.subr.bf16.mxu0 0
    %2741 = vmatpush1.bf16.msra.mxu0 0
    %2742 = vmatprep.subr.bf16.mxu0 0
    %2743 = vmatpush1.bf16.msra.mxu0 0
    %2744 = vmatprep.subr.bf16.mxu0 0
    %2745 = vmatpush1.bf16.msra.mxu0 0
    %2746 = vmatprep.subr.bf16.mxu0 0
    %2747 = vmatpush1.bf16.msra.mxu0 0
    %2748 = vmatprep.subr.bf16.mxu0 0
    %2749 = vmatpush1.bf16.msra.mxu0 0
    %2750 = vmatprep.subr.bf16.mxu0 0
    %2751 = vmatpush1.bf16.msra.mxu0 0
    %2752 = vmatprep.subr.bf16.mxu0 0
    %2753 = vmatpush1.bf16.msra.mxu0 0
    %2754 = vmatprep.subr.bf16.mxu0 0
    %2755 = vmatpush1.bf16.msra.mxu0 0
    %2756 = vmatprep.subr.bf16.mxu0 0
    %2757 = vmatpush1.bf16.msra.mxu0 0
    %2758 = vmatprep.subr.bf16.mxu0 0
    %2759 = vmatpush1.bf16.msra.mxu0 0
    %2760 = vmatprep.subr.bf16.mxu0 0
    %2761 = vmatpush1.bf16.msra.mxu0 0
    %2762 = vmatprep.mubr.bf16.mxu0 0
    %2763 = vmatmul.mubr.bf16.gmra.mrb[0].mxu0 %v2675
    %v2764 = vpop.f32.mrb[0].mxu0
    %v2765 = vadd.f32 0.0, %v2764
    %v2766 = vpop.f32.mrb[0].mxu0
    %v2767 = vadd.f32 0.0, %v2766
    %v2768 = vpop.f32.mrb[0].mxu0
    %v2769 = vpop.f32.mrb[0].mxu0
    %2770 = vdwg.mxu0
    %v2771 = vadd.f32 %v2648, %v2724
    %v2772 = vadd.f32 %v2649, %v2726
    %v2773 = vadd.f32 %v2650, %v2765
    %v2774 = vadd.f32 %v2651, %v2767
    %s2775 = scalar_lea.vmem %s1, 33
    %v2776 = vld [vmem:[%s2775] ss:$8 sm:$0xf]
    %2777 = vrot.lane.b32.xlu0 %v211, 14
    %v2778 = vpop.permute.xlu0 %2777
    %2779 = vrot.lane.b32.xlu0 %v212, 14
    %v2780 = vpop.permute.xlu0 %2779
    %2781 = vrot.lane.b32.xlu0 %v213, 14
    %v2782 = vpop.permute.xlu0 %2781
    %2783 = vrot.lane.b32.xlu0 %v214, 14
    %v2784 = vpop.permute.xlu0 %2783
    %vm2785 = vcmp.lt.s32.totalorder %v226, 14
    %v2786 = vsel %vm2785, %v2782, %v2784
    %v2787 = vsel %vm2785, %v2780, %v2782
    %v2788 = vsel %vm2785, %v2778, %v2780
    %v2789 = vsel %vm2785, %v2784, %v2778
    %v2791 = vlaneseq
    %v2792 = vshrl.u32 %v2791, 7
    %v2793 = vsub.s32 0, %v2792
    %v2794 = vrot.slane %v2776, %v2793
    %v2795 = vlaneseq
    %v2796 = vshrl.u32 %v2795, 7
    %v2797 = vsub.s32 1, %v2796
    %v2798 = vrot.slane %v2776, %v2797
    %v2799 = vlaneseq
    %v2800 = vshrl.u32 %v2799, 7
    %v2801 = vsub.s32 2, %v2800
    %v2802 = vrot.slane %v2776, %v2801
    %v2803 = vlaneseq
    %v2804 = vshrl.u32 %v2803, 7
    %v2805 = vsub.s32 3, %v2804
    %v2806 = vrot.slane %v2776, %v2805
    %v2811 = vmul.f32 %v2789, %v2794
    %v2812 = vmul.f32 %v2788, %v2798
    %v2813 = vmul.f32 %v2787, %v2802
    %v2814 = vmul.f32 %v2786, %v2806
    %v2815 = vpack.c.bf16 %v2811, %v2811
    %v2816 = vpack.c.bf16 %v2812, %v2812
    %v2817 = vpack.c.bf16 %v2813, %v2813
    %v2818 = vpack.c.bf16 %v2814, %v2814
    %s2819 = scalar_lea.vmem %s7, 36
    %v2820 = vld [vmem:[%s2819] sm:$0xf]
    %v2822 = vsel %vm308, %v2820, 0
    %v2825 = vsel %vm312, %v2815, 0
    %v2828 = vsel %vm312, %v2816, 0
    %v2831 = vsel %vm312, %v2817, 0
    %v2834 = vsel %vm312, %v2818, 0
    %2836 = vmatprep.subr.bf16.mxu0 %v2828
    %2837 = vmatpush1.bf16.msra.mxu0 %v2825
    %2838 = vmatprep.subr.bf16.mxu0 0
    %2839 = vmatpush1.bf16.msra.mxu0 0
    %2840 = vmatprep.subr.bf16.mxu0 0
    %2841 = vmatpush1.bf16.msra.mxu0 0
    %2842 = vmatprep.subr.bf16.mxu0 0
    %2843 = vmatpush1.bf16.msra.mxu0 0
    %2844 = vmatprep.subr.bf16.mxu0 0
    %2845 = vmatpush1.bf16.msra.mxu0 0
    %2846 = vmatprep.subr.bf16.mxu0 0
    %2847 = vmatpush1.bf16.msra.mxu0 0
    %2848 = vmatprep.subr.bf16.mxu0 0
    %2849 = vmatpush1.bf16.msra.mxu0 0
    %2850 = vmatprep.subr.bf16.mxu0 0
    %2851 = vmatpush1.bf16.msra.mxu0 0
    %2852 = vmatprep.subr.bf16.mxu0 0
    %2853 = vmatpush1.bf16.msra.mxu0 0
    %2854 = vmatprep.subr.bf16.mxu0 0
    %2855 = vmatpush1.bf16.msra.mxu0 0
    %2856 = vmatprep.subr.bf16.mxu0 0
    %2857 = vmatpush1.bf16.msra.mxu0 0
    %2858 = vmatprep.subr.bf16.mxu0 0
    %2859 = vmatpush1.bf16.msra.mxu0 0
    %2860 = vmatprep.subr.bf16.mxu0 0
    %2861 = vmatpush1.bf16.msra.mxu0 0
    %2862 = vmatprep.subr.bf16.mxu0 0
    %2863 = vmatpush1.bf16.msra.mxu0 0
    %2864 = vmatprep.subr.bf16.mxu0 0
    %2865 = vmatpush1.bf16.msra.mxu0 0
    %2866 = vmatprep.subr.bf16.mxu0 0
    %2867 = vmatpush1.bf16.msra.mxu0 0
    %2868 = vmatprep.mubr.bf16.mxu0 0
    %2869 = vmatmul.mubr.bf16.gmra.mrb[0].mxu0 %v2822
    %v2870 = vpop.f32.mrb[0].mxu0
    %v2871 = vadd.f32 0.0, %v2870
    %v2872 = vpop.f32.mrb[0].mxu0
    %v2873 = vadd.f32 0.0, %v2872
    %v2874 = vpop.f32.mrb[0].mxu0
    %v2875 = vpop.f32.mrb[0].mxu0
    %2876 = vdwg.mxu0
    %2877 = vmatprep.subr.bf16.mxu0 %v2834
    %2878 = vmatpush1.bf16.msra.mxu0 %v2831
    %2879 = vmatprep.subr.bf16.mxu0 0
    %2880 = vmatpush1.bf16.msra.mxu0 0
    %2881 = vmatprep.subr.bf16.mxu0 0
    %2882 = vmatpush1.bf16.msra.mxu0 0
    %2883 = vmatprep.subr.bf16.mxu0 0
    %2884 = vmatpush1.bf16.msra.mxu0 0
    %2885 = vmatprep.subr.bf16.mxu0 0
    %2886 = vmatpush1.bf16.msra.mxu0 0
    %2887 = vmatprep.subr.bf16.mxu0 0
    %2888 = vmatpush1.bf16.msra.mxu0 0
    %2889 = vmatprep.subr.bf16.mxu0 0
    %2890 = vmatpush1.bf16.msra.mxu0 0
    %2891 = vmatprep.subr.bf16.mxu0 0
    %2892 = vmatpush1.bf16.msra.mxu0 0
    %2893 = vmatprep.subr.bf16.mxu0 0
    %2894 = vmatpush1.bf16.msra.mxu0 0
    %2895 = vmatprep.subr.bf16.mxu0 0
    %2896 = vmatpush1.bf16.msra.mxu0 0
    %2897 = vmatprep.subr.bf16.mxu0 0
    %2898 = vmatpush1.bf16.msra.mxu0 0
    %2899 = vmatprep.subr.bf16.mxu0 0
    %2900 = vmatpush1.bf16.msra.mxu0 0
    %2901 = vmatprep.subr.bf16.mxu0 0
    %2902 = vmatpush1.bf16.msra.mxu0 0
    %2903 = vmatprep.subr.bf16.mxu0 0
    %2904 = vmatpush1.bf16.msra.mxu0 0
    %2905 = vmatprep.subr.bf16.mxu0 0
    %2906 = vmatpush1.bf16.msra.mxu0 0
    %2907 = vmatprep.subr.bf16.mxu0 0
    %2908 = vmatpush1.bf16.msra.mxu0 0
    %2909 = vmatprep.mubr.bf16.mxu0 0
    %2910 = vmatmul.mubr.bf16.gmra.mrb[0].mxu0 %v2822
    %v2911 = vpop.f32.mrb[0].mxu0
    %v2912 = vadd.f32 0.0, %v2911
    %v2913 = vpop.f32.mrb[0].mxu0
    %v2914 = vadd.f32 0.0, %v2913
    %v2915 = vpop.f32.mrb[0].mxu0
    %v2916 = vpop.f32.mrb[0].mxu0
    %2917 = vdwg.mxu0
    %v2918 = vadd.f32 %v2771, %v2871
    %v2919 = vadd.f32 %v2772, %v2873
    %v2920 = vadd.f32 %v2773, %v2912
    %v2921 = vadd.f32 %v2774, %v2914
    %s2922 = scalar_lea.vmem %s1, 34
    %v2923 = vld [vmem:[%s2922] ss:$8 sm:$0xf]
    %2924 = vrot.lane.b32.xlu0 %v211, 2
    %v2925 = vpop.permute.xlu0 %2924
    %2926 = vrot.lane.b32.xlu0 %v212, 2
    %v2927 = vpop.permute.xlu0 %2926
    %2928 = vrot.lane.b32.xlu0 %v213, 2
    %v2929 = vpop.permute.xlu0 %2928
    %2930 = vrot.lane.b32.xlu0 %v214, 2
    %v2931 = vpop.permute.xlu0 %2930
    %vm2932 = vcmp.lt.s32.totalorder %v226, 2
    %v2933 = vsel %vm2932, %v2929, %v2931
    %v2934 = vsel %vm2932, %v2927, %v2929
    %v2935 = vsel %vm2932, %v2925, %v2927
    %v2936 = vsel %vm2932, %v2931, %v2925
    %v2938 = vlaneseq
    %v2939 = vshrl.u32 %v2938, 7
    %v2940 = vsub.s32 0, %v2939
    %v2941 = vrot.slane %v2923, %v2940
    %v2942 = vlaneseq
    %v2943 = vshrl.u32 %v2942, 7
    %v2944 = vsub.s32 1, %v2943
    %v2945 = vrot.slane %v2923, %v2944
    %v2946 = vlaneseq
    %v2947 = vshrl.u32 %v2946, 7
    %v2948 = vsub.s32 2, %v2947
    %v2949 = vrot.slane %v2923, %v2948
    %v2950 = vlaneseq
    %v2951 = vshrl.u32 %v2950, 7
    %v2952 = vsub.s32 3, %v2951
    %v2953 = vrot.slane %v2923, %v2952
    %v2958 = vmul.f32 %v2936, %v2941
    %v2959 = vmul.f32 %v2935, %v2945
    %v2960 = vmul.f32 %v2934, %v2949
    %v2961 = vmul.f32 %v2933, %v2953
    %v2962 = vpack.c.bf16 %v2958, %v2958
    %v2963 = vpack.c.bf16 %v2959, %v2959
    %v2964 = vpack.c.bf16 %v2960, %v2960
    %v2965 = vpack.c.bf16 %v2961, %v2961
    %s2966 = scalar_lea.vmem %s7, 40
    %v2967 = vld [vmem:[%s2966] sm:$0xf]
    %v2969 = vsel %vm308, %v2967, 0
    %v2972 = vsel %vm312, %v2962, 0
    %v2975 = vsel %vm312, %v2963, 0
    %v2978 = vsel %vm312, %v2964, 0
    %v2981 = vsel %vm312, %v2965, 0
    %2983 = vmatprep.subr.bf16.mxu0 %v2975
    %2984 = vmatpush1.bf16.msra.mxu0 %v2972
    %2985 = vmatprep.subr.bf16.mxu0 0
    %2986 = vmatpush1.bf16.msra.mxu0 0
    %2987 = vmatprep.subr.bf16.mxu0 0
    %2988 = vmatpush1.bf16.msra.mxu0 0
    %2989 = vmatprep.subr.bf16.mxu0 0
    %2990 = vmatpush1.bf16.msra.mxu0 0
    %2991 = vmatprep.subr.bf16.mxu0 0
    %2992 = vmatpush1.bf16.msra.mxu0 0
    %2993 = vmatprep.subr.bf16.mxu0 0
    %2994 = vmatpush1.bf16.msra.mxu0 0
    %2995 = vmatprep.subr.bf16.mxu0 0
    %2996 = vmatpush1.bf16.msra.mxu0 0
    %2997 = vmatprep.subr.bf16.mxu0 0
    %2998 = vmatpush1.bf16.msra.mxu0 0
    %2999 = vmatprep.subr.bf16.mxu0 0
    %3000 = vmatpush1.bf16.msra.mxu0 0
    %3001 = vmatprep.subr.bf16.mxu0 0
    %3002 = vmatpush1.bf16.msra.mxu0 0
    %3003 = vmatprep.subr.bf16.mxu0 0
    %3004 = vmatpush1.bf16.msra.mxu0 0
    %3005 = vmatprep.subr.bf16.mxu0 0
    %3006 = vmatpush1.bf16.msra.mxu0 0
    %3007 = vmatprep.subr.bf16.mxu0 0
    %3008 = vmatpush1.bf16.msra.mxu0 0
    %3009 = vmatprep.subr.bf16.mxu0 0
    %3010 = vmatpush1.bf16.msra.mxu0 0
    %3011 = vmatprep.subr.bf16.mxu0 0
    %3012 = vmatpush1.bf16.msra.mxu0 0
    %3013 = vmatprep.subr.bf16.mxu0 0
    %3014 = vmatpush1.bf16.msra.mxu0 0
    %3015 = vmatprep.mubr.bf16.mxu0 0
    %3016 = vmatmul.mubr.bf16.gmra.mrb[0].mxu0 %v2969
    %v3017 = vpop.f32.mrb[0].mxu0
    %v3018 = vadd.f32 0.0, %v3017
    %v3019 = vpop.f32.mrb[0].mxu0
    %v3020 = vadd.f32 0.0, %v3019
    %v3021 = vpop.f32.mrb[0].mxu0
    %v3022 = vpop.f32.mrb[0].mxu0
    %3023 = vdwg.mxu0
    %3024 = vmatprep.subr.bf16.mxu0 %v2981
    %3025 = vmatpush1.bf16.msra.mxu0 %v2978
    %3026 = vmatprep.subr.bf16.mxu0 0
    %3027 = vmatpush1.bf16.msra.mxu0 0
    %3028 = vmatprep.subr.bf16.mxu0 0
    %3029 = vmatpush1.bf16.msra.mxu0 0
    %3030 = vmatprep.subr.bf16.mxu0 0
    %3031 = vmatpush1.bf16.msra.mxu0 0
    %3032 = vmatprep.subr.bf16.mxu0 0
    %3033 = vmatpush1.bf16.msra.mxu0 0
    %3034 = vmatprep.subr.bf16.mxu0 0
    %3035 = vmatpush1.bf16.msra.mxu0 0
    %3036 = vmatprep.subr.bf16.mxu0 0
    %3037 = vmatpush1.bf16.msra.mxu0 0
    %3038 = vmatprep.subr.bf16.mxu0 0
    %3039 = vmatpush1.bf16.msra.mxu0 0
    %3040 = vmatprep.subr.bf16.mxu0 0
    %3041 = vmatpush1.bf16.msra.mxu0 0
    %3042 = vmatprep.subr.bf16.mxu0 0
    %3043 = vmatpush1.bf16.msra.mxu0 0
    %3044 = vmatprep.subr.bf16.mxu0 0
    %3045 = vmatpush1.bf16.msra.mxu0 0
    %3046 = vmatprep.subr.bf16.mxu0 0
    %3047 = vmatpush1.bf16.msra.mxu0 0
    %3048 = vmatprep.subr.bf16.mxu0 0
    %3049 = vmatpush1.bf16.msra.mxu0 0
    %3050 = vmatprep.subr.bf16.mxu0 0
    %3051 = vmatpush1.bf16.msra.mxu0 0
    %3052 = vmatprep.subr.bf16.mxu0 0
    %3053 = vmatpush1.bf16.msra.mxu0 0
    %3054 = vmatprep.subr.bf16.mxu0 0
    %3055 = vmatpush1.bf16.msra.mxu0 0
    %3056 = vmatprep.mubr.bf16.mxu0 0
    %3057 = vmatmul.mubr.bf16.gmra.mrb[0].mxu0 %v2969
    %v3058 = vpop.f32.mrb[0].mxu0
    %v3059 = vadd.f32 0.0, %v3058
    %v3060 = vpop.f32.mrb[0].mxu0
    %v3061 = vadd.f32 0.0, %v3060
    %v3062 = vpop.f32.mrb[0].mxu0
    %v3063 = vpop.f32.mrb[0].mxu0
    %3064 = vdwg.mxu0
    %v3065 = vadd.f32 %v2918, %v3018
    %v3066 = vadd.f32 %v2919, %v3020
    %v3067 = vadd.f32 %v2920, %v3059
    %v3068 = vadd.f32 %v2921, %v3061
    %3069 = vrot.lane.b32.xlu0 %v211, 1
    %v3070 = vpop.permute.xlu0 %3069
    %3071 = vrot.lane.b32.xlu0 %v212, 1
    %v3072 = vpop.permute.xlu0 %3071
    %3073 = vrot.lane.b32.xlu0 %v213, 1
    %v3074 = vpop.permute.xlu0 %3073
    %3075 = vrot.lane.b32.xlu0 %v214, 1
    %v3076 = vpop.permute.xlu0 %3075
    %v3077 = vsel %vm661, %v3074, %v3076
    %v3078 = vsel %vm661, %v3072, %v3074
    %v3079 = vsel %vm661, %v3070, %v3072
    %v3080 = vsel %vm661, %v3076, %v3070
    %v3081 = vmul.f32 %v3080, %v670
    %v3082 = vmul.f32 %v3079, %v674
    %v3083 = vmul.f32 %v3078, %v678
    %v3084 = vmul.f32 %v3077, %v682
    %v3085 = vpack.c.bf16 %v3081, %v3081
    %v3086 = vpack.c.bf16 %v3082, %v3082
    %v3087 = vpack.c.bf16 %v3083, %v3083
    %v3088 = vpack.c.bf16 %v3084, %v3084
    %s3089 = scalar_lea.vmem %s7, 44
    %v3090 = vld [vmem:[%s3089] sm:$0xf]
    %v3092 = vsel %vm308, %v3090, 0
    %v3095 = vsel %vm312, %v3085, 0
    %v3098 = vsel %vm312, %v3086, 0
    %v3101 = vsel %vm312, %v3087, 0
    %v3104 = vsel %vm312, %v3088, 0
    %3106 = vmatprep.subr.bf16.mxu0 %v3098
    %3107 = vmatpush1.bf16.msra.mxu0 %v3095
    %3108 = vmatprep.subr.bf16.mxu0 0
    %3109 = vmatpush1.bf16.msra.mxu0 0
    %3110 = vmatprep.subr.bf16.mxu0 0
    %3111 = vmatpush1.bf16.msra.mxu0 0
    %3112 = vmatprep.subr.bf16.mxu0 0
    %3113 = vmatpush1.bf16.msra.mxu0 0
    %3114 = vmatprep.subr.bf16.mxu0 0
    %3115 = vmatpush1.bf16.msra.mxu0 0
    %3116 = vmatprep.subr.bf16.mxu0 0
    %3117 = vmatpush1.bf16.msra.mxu0 0
    %3118 = vmatprep.subr.bf16.mxu0 0
    %3119 = vmatpush1.bf16.msra.mxu0 0
    %3120 = vmatprep.subr.bf16.mxu0 0
    %3121 = vmatpush1.bf16.msra.mxu0 0
    %3122 = vmatprep.subr.bf16.mxu0 0
    %3123 = vmatpush1.bf16.msra.mxu0 0
    %3124 = vmatprep.subr.bf16.mxu0 0
    %3125 = vmatpush1.bf16.msra.mxu0 0
    %3126 = vmatprep.subr.bf16.mxu0 0
    %3127 = vmatpush1.bf16.msra.mxu0 0
    %3128 = vmatprep.subr.bf16.mxu0 0
    %3129 = vmatpush1.bf16.msra.mxu0 0
    %3130 = vmatprep.subr.bf16.mxu0 0
    %3131 = vmatpush1.bf16.msra.mxu0 0
    %3132 = vmatprep.subr.bf16.mxu0 0
    %3133 = vmatpush1.bf16.msra.mxu0 0
    %3134 = vmatprep.subr.bf16.mxu0 0
    %3135 = vmatpush1.bf16.msra.mxu0 0
    %3136 = vmatprep.subr.bf16.mxu0 0
    %3137 = vmatpush1.bf16.msra.mxu0 0
    %3138 = vmatprep.mubr.bf16.mxu0 0
    %3139 = vmatmul.mubr.bf16.gmra.mrb[0].mxu0 %v3092
    %v3140 = vpop.f32.mrb[0].mxu0
    %v3141 = vadd.f32 0.0, %v3140
    %v3142 = vpop.f32.mrb[0].mxu0
    %v3143 = vadd.f32 0.0, %v3142
    %v3144 = vpop.f32.mrb[0].mxu0
    %v3145 = vpop.f32.mrb[0].mxu0
    %3146 = vdwg.mxu0
    %3147 = vmatprep.subr.bf16.mxu0 %v3104
    %3148 = vmatpush1.bf16.msra.mxu0 %v3101
    %3149 = vmatprep.subr.bf16.mxu0 0
    %3150 = vmatpush1.bf16.msra.mxu0 0
    %3151 = vmatprep.subr.bf16.mxu0 0
    %3152 = vmatpush1.bf16.msra.mxu0 0
    %3153 = vmatprep.subr.bf16.mxu0 0
    %3154 = vmatpush1.bf16.msra.mxu0 0
    %3155 = vmatprep.subr.bf16.mxu0 0
    %3156 = vmatpush1.bf16.msra.mxu0 0
    %3157 = vmatprep.subr.bf16.mxu0 0
    %3158 = vmatpush1.bf16.msra.mxu0 0
    %3159 = vmatprep.subr.bf16.mxu0 0
    %3160 = vmatpush1.bf16.msra.mxu0 0
    %3161 = vmatprep.subr.bf16.mxu0 0
    %3162 = vmatpush1.bf16.msra.mxu0 0
    %3163 = vmatprep.subr.bf16.mxu0 0
    %3164 = vmatpush1.bf16.msra.mxu0 0
    %3165 = vmatprep.subr.bf16.mxu0 0
    %3166 = vmatpush1.bf16.msra.mxu0 0
    %3167 = vmatprep.subr.bf16.mxu0 0
    %3168 = vmatpush1.bf16.msra.mxu0 0
    %3169 = vmatprep.subr.bf16.mxu0 0
    %3170 = vmatpush1.bf16.msra.mxu0 0
    %3171 = vmatprep.subr.bf16.mxu0 0
    %3172 = vmatpush1.bf16.msra.mxu0 0
    %3173 = vmatprep.subr.bf16.mxu0 0
    %3174 = vmatpush1.bf16.msra.mxu0 0
    %3175 = vmatprep.subr.bf16.mxu0 0
    %3176 = vmatpush1.bf16.msra.mxu0 0
    %3177 = vmatprep.subr.bf16.mxu0 0
    %3178 = vmatpush1.bf16.msra.mxu0 0
    %3179 = vmatprep.mubr.bf16.mxu0 0
    %3180 = vmatmul.mubr.bf16.gmra.mrb[0].mxu0 %v3092
    %v3181 = vpop.f32.mrb[0].mxu0
    %v3182 = vadd.f32 0.0, %v3181
    %v3183 = vpop.f32.mrb[0].mxu0
    %v3184 = vadd.f32 0.0, %v3183
    %v3185 = vpop.f32.mrb[0].mxu0
    %v3186 = vpop.f32.mrb[0].mxu0
    %3187 = vdwg.mxu0
    %v3188 = vadd.f32 %v3065, %v3141
    %v3189 = vadd.f32 %v3066, %v3143
    %v3190 = vadd.f32 %v3067, %v3182
    %v3191 = vadd.f32 %v3068, %v3184
    %v3192 = vmul.f32 %v211, %v804
    %v3193 = vmul.f32 %v212, %v808
    %v3194 = vmul.f32 %v213, %v812
    %v3195 = vmul.f32 %v214, %v816
    %v3196 = vpack.c.bf16 %v3192, %v3192
    %v3197 = vpack.c.bf16 %v3193, %v3193
    %v3198 = vpack.c.bf16 %v3194, %v3194
    %v3199 = vpack.c.bf16 %v3195, %v3195
    %s3200 = scalar_lea.vmem %s7, 48
    %v3201 = vld [vmem:[%s3200] sm:$0xf]
    %v3203 = vsel %vm308, %v3201, 0
    %v3206 = vsel %vm312, %v3196, 0
    %v3209 = vsel %vm312, %v3197, 0
    %v3212 = vsel %vm312, %v3198, 0
    %v3215 = vsel %vm312, %v3199, 0
    %3217 = vmatprep.subr.bf16.mxu0 %v3209
    %3218 = vmatpush1.bf16.msra.mxu0 %v3206
    %3219 = vmatprep.subr.bf16.mxu0 0
    %3220 = vmatpush1.bf16.msra.mxu0 0
    %3221 = vmatprep.subr.bf16.mxu0 0
    %3222 = vmatpush1.bf16.msra.mxu0 0
    %3223 = vmatprep.subr.bf16.mxu0 0
    %3224 = vmatpush1.bf16.msra.mxu0 0
    %3225 = vmatprep.subr.bf16.mxu0 0
    %3226 = vmatpush1.bf16.msra.mxu0 0
    %3227 = vmatprep.subr.bf16.mxu0 0
    %3228 = vmatpush1.bf16.msra.mxu0 0
    %3229 = vmatprep.subr.bf16.mxu0 0
    %3230 = vmatpush1.bf16.msra.mxu0 0
    %3231 = vmatprep.subr.bf16.mxu0 0
    %3232 = vmatpush1.bf16.msra.mxu0 0
    %3233 = vmatprep.subr.bf16.mxu0 0
    %3234 = vmatpush1.bf16.msra.mxu0 0
    %3235 = vmatprep.subr.bf16.mxu0 0
    %3236 = vmatpush1.bf16.msra.mxu0 0
    %3237 = vmatprep.subr.bf16.mxu0 0
    %3238 = vmatpush1.bf16.msra.mxu0 0
    %3239 = vmatprep.subr.bf16.mxu0 0
    %3240 = vmatpush1.bf16.msra.mxu0 0
    %3241 = vmatprep.subr.bf16.mxu0 0
    %3242 = vmatpush1.bf16.msra.mxu0 0
    %3243 = vmatprep.subr.bf16.mxu0 0
    %3244 = vmatpush1.bf16.msra.mxu0 0
    %3245 = vmatprep.subr.bf16.mxu0 0
    %3246 = vmatpush1.bf16.msra.mxu0 0
    %3247 = vmatprep.subr.bf16.mxu0 0
    %3248 = vmatpush1.bf16.msra.mxu0 0
    %3249 = vmatprep.mubr.bf16.mxu0 0
    %3250 = vmatmul.mubr.bf16.gmra.mrb[0].mxu0 %v3203
    %v3251 = vpop.f32.mrb[0].mxu0
    %v3252 = vadd.f32 0.0, %v3251
    %v3253 = vpop.f32.mrb[0].mxu0
    %v3254 = vadd.f32 0.0, %v3253
    %v3255 = vpop.f32.mrb[0].mxu0
    %v3256 = vpop.f32.mrb[0].mxu0
    %3257 = vdwg.mxu0
    %3258 = vmatprep.subr.bf16.mxu0 %v3215
    %3259 = vmatpush1.bf16.msra.mxu0 %v3212
    %3260 = vmatprep.subr.bf16.mxu0 0
    %3261 = vmatpush1.bf16.msra.mxu0 0
    %3262 = vmatprep.subr.bf16.mxu0 0
    %3263 = vmatpush1.bf16.msra.mxu0 0
    %3264 = vmatprep.subr.bf16.mxu0 0
    %3265 = vmatpush1.bf16.msra.mxu0 0
    %3266 = vmatprep.subr.bf16.mxu0 0
    %3267 = vmatpush1.bf16.msra.mxu0 0
    %3268 = vmatprep.subr.bf16.mxu0 0
    %3269 = vmatpush1.bf16.msra.mxu0 0
    %3270 = vmatprep.subr.bf16.mxu0 0
    %3271 = vmatpush1.bf16.msra.mxu0 0
    %3272 = vmatprep.subr.bf16.mxu0 0
    %3273 = vmatpush1.bf16.msra.mxu0 0
    %3274 = vmatprep.subr.bf16.mxu0 0
    %3275 = vmatpush1.bf16.msra.mxu0 0
    %3276 = vmatprep.subr.bf16.mxu0 0
    %3277 = vmatpush1.bf16.msra.mxu0 0
    %3278 = vmatprep.subr.bf16.mxu0 0
    %3279 = vmatpush1.bf16.msra.mxu0 0
    %3280 = vmatprep.subr.bf16.mxu0 0
    %3281 = vmatpush1.bf16.msra.mxu0 0
    %3282 = vmatprep.subr.bf16.mxu0 0
    %3283 = vmatpush1.bf16.msra.mxu0 0
    %3284 = vmatprep.subr.bf16.mxu0 0
    %3285 = vmatpush1.bf16.msra.mxu0 0
    %3286 = vmatprep.subr.bf16.mxu0 0
    %3287 = vmatpush1.bf16.msra.mxu0 0
    %3288 = vmatprep.subr.bf16.mxu0 0
    %3289 = vmatpush1.bf16.msra.mxu0 0
    %3290 = vmatprep.mubr.bf16.mxu0 0
    %3291 = vmatmul.mubr.bf16.gmra.mrb[0].mxu0 %v3203
    %v3292 = vpop.f32.mrb[0].mxu0
    %v3293 = vadd.f32 0.0, %v3292
    %v3294 = vpop.f32.mrb[0].mxu0
    %v3295 = vadd.f32 0.0, %v3294
    %v3296 = vpop.f32.mrb[0].mxu0
    %v3297 = vpop.f32.mrb[0].mxu0
    %3298 = vdwg.mxu0
    %v3299 = vadd.f32 %v3188, %v3252
    %v3300 = vadd.f32 %v3189, %v3254
    %v3301 = vadd.f32 %v3190, %v3293
    %v3302 = vadd.f32 %v3191, %v3295
    %3303 = vrot.lane.b32.xlu0 %v211, 127
    %v3304 = vpop.permute.xlu0 %3303
    %3305 = vrot.lane.b32.xlu0 %v212, 127
    %v3306 = vpop.permute.xlu0 %3305
    %3307 = vrot.lane.b32.xlu0 %v213, 127
    %v3308 = vpop.permute.xlu0 %3307
    %3309 = vrot.lane.b32.xlu0 %v214, 127
    %v3310 = vpop.permute.xlu0 %3309
    %v3311 = vsel %vm942, %v3308, %v3310
    %v3312 = vsel %vm942, %v3306, %v3308
    %v3313 = vsel %vm942, %v3304, %v3306
    %v3314 = vsel %vm942, %v3310, %v3304
    %v3315 = vmul.f32 %v3313, %v951
    %v3316 = vmul.f32 %v3312, %v955
    %v3317 = vmul.f32 %v3311, %v959
    %v3318 = vmul.f32 %v3314, %v963
    %v3319 = vpack.c.bf16 %v3315, %v3315
    %v3320 = vpack.c.bf16 %v3316, %v3316
    %v3321 = vpack.c.bf16 %v3317, %v3317
    %v3322 = vpack.c.bf16 %v3318, %v3318
    %s3323 = scalar_lea.vmem %s7, 52
    %v3324 = vld [vmem:[%s3323] sm:$0xf]
    %v3326 = vsel %vm308, %v3324, 0
    %v3329 = vsel %vm312, %v3319, 0
    %v3332 = vsel %vm312, %v3320, 0
    %v3335 = vsel %vm312, %v3321, 0
    %v3338 = vsel %vm312, %v3322, 0
    %3340 = vmatprep.subr.bf16.mxu0 %v3332
    %3341 = vmatpush1.bf16.msra.mxu0 %v3329
    %3342 = vmatprep.subr.bf16.mxu0 0
    %3343 = vmatpush1.bf16.msra.mxu0 0
    %3344 = vmatprep.subr.bf16.mxu0 0
    %3345 = vmatpush1.bf16.msra.mxu0 0
    %3346 = vmatprep.subr.bf16.mxu0 0
    %3347 = vmatpush1.bf16.msra.mxu0 0
    %3348 = vmatprep.subr.bf16.mxu0 0
    %3349 = vmatpush1.bf16.msra.mxu0 0
    %3350 = vmatprep.subr.bf16.mxu0 0
    %3351 = vmatpush1.bf16.msra.mxu0 0
    %3352 = vmatprep.subr.bf16.mxu0 0
    %3353 = vmatpush1.bf16.msra.mxu0 0
    %3354 = vmatprep.subr.bf16.mxu0 0
    %3355 = vmatpush1.bf16.msra.mxu0 0
    %3356 = vmatprep.subr.bf16.mxu0 0
    %3357 = vmatpush1.bf16.msra.mxu0 0
    %3358 = vmatprep.subr.bf16.mxu0 0
    %3359 = vmatpush1.bf16.msra.mxu0 0
    %3360 = vmatprep.subr.bf16.mxu0 0
    %3361 = vmatpush1.bf16.msra.mxu0 0
    %3362 = vmatprep.subr.bf16.mxu0 0
    %3363 = vmatpush1.bf16.msra.mxu0 0
    %3364 = vmatprep.subr.bf16.mxu0 0
    %3365 = vmatpush1.bf16.msra.mxu0 0
    %3366 = vmatprep.subr.bf16.mxu0 0
    %3367 = vmatpush1.bf16.msra.mxu0 0
    %3368 = vmatprep.subr.bf16.mxu0 0
    %3369 = vmatpush1.bf16.msra.mxu0 0
    %3370 = vmatprep.subr.bf16.mxu0 0
    %3371 = vmatpush1.bf16.msra.mxu0 0
    %3372 = vmatprep.mubr.bf16.mxu0 0
    %3373 = vmatmul.mubr.bf16.gmra.mrb[0].mxu0 %v3326
    %v3374 = vpop.f32.mrb[0].mxu0
    %v3375 = vadd.f32 0.0, %v3374
    %v3376 = vpop.f32.mrb[0].mxu0
    %v3377 = vadd.f32 0.0, %v3376
    %v3378 = vpop.f32.mrb[0].mxu0
    %v3379 = vpop.f32.mrb[0].mxu0
    %3380 = vdwg.mxu0
    %3381 = vmatprep.subr.bf16.mxu0 %v3338
    %3382 = vmatpush1.bf16.msra.mxu0 %v3335
    %3383 = vmatprep.subr.bf16.mxu0 0
    %3384 = vmatpush1.bf16.msra.mxu0 0
    %3385 = vmatprep.subr.bf16.mxu0 0
    %3386 = vmatpush1.bf16.msra.mxu0 0
    %3387 = vmatprep.subr.bf16.mxu0 0
    %3388 = vmatpush1.bf16.msra.mxu0 0
    %3389 = vmatprep.subr.bf16.mxu0 0
    %3390 = vmatpush1.bf16.msra.mxu0 0
    %3391 = vmatprep.subr.bf16.mxu0 0
    %3392 = vmatpush1.bf16.msra.mxu0 0
    %3393 = vmatprep.subr.bf16.mxu0 0
    %3394 = vmatpush1.bf16.msra.mxu0 0
    %3395 = vmatprep.subr.bf16.mxu0 0
    %3396 = vmatpush1.bf16.msra.mxu0 0
    %3397 = vmatprep.subr.bf16.mxu0 0
    %3398 = vmatpush1.bf16.msra.mxu0 0
    %3399 = vmatprep.subr.bf16.mxu0 0
    %3400 = vmatpush1.bf16.msra.mxu0 0
    %3401 = vmatprep.subr.bf16.mxu0 0
    %3402 = vmatpush1.bf16.msra.mxu0 0
    %3403 = vmatprep.subr.bf16.mxu0 0
    %3404 = vmatpush1.bf16.msra.mxu0 0
    %3405 = vmatprep.subr.bf16.mxu0 0
    %3406 = vmatpush1.bf16.msra.mxu0 0
    %3407 = vmatprep.subr.bf16.mxu0 0
    %3408 = vmatpush1.bf16.msra.mxu0 0
    %3409 = vmatprep.subr.bf16.mxu0 0
    %3410 = vmatpush1.bf16.msra.mxu0 0
    %3411 = vmatprep.subr.bf16.mxu0 0
    %3412 = vmatpush1.bf16.msra.mxu0 0
    %3413 = vmatprep.mubr.bf16.mxu0 0
    %3414 = vmatmul.mubr.bf16.gmra.mrb[0].mxu0 %v3326
    %v3415 = vpop.f32.mrb[0].mxu0
    %v3416 = vadd.f32 0.0, %v3415
    %v3417 = vpop.f32.mrb[0].mxu0
    %v3418 = vadd.f32 0.0, %v3417
    %v3419 = vpop.f32.mrb[0].mxu0
    %v3420 = vpop.f32.mrb[0].mxu0
    %3421 = vdwg.mxu0
    %v3422 = vadd.f32 %v3299, %v3375
    %v3423 = vadd.f32 %v3300, %v3377
    %v3424 = vadd.f32 %v3301, %v3416
    %v3425 = vadd.f32 %v3302, %v3418
    %s3426 = scalar_lea.vmem %s1, 38
    %v3427 = vld [vmem:[%s3426] ss:$8 sm:$0xf]
    %3428 = vrot.lane.b32.xlu0 %v211, 126
    %v3429 = vpop.permute.xlu0 %3428
    %3430 = vrot.lane.b32.xlu0 %v212, 126
    %v3431 = vpop.permute.xlu0 %3430
    %3432 = vrot.lane.b32.xlu0 %v213, 126
    %v3433 = vpop.permute.xlu0 %3432
    %3434 = vrot.lane.b32.xlu0 %v214, 126
    %v3435 = vpop.permute.xlu0 %3434
    %vm3436 = vcmp.lt.s32.totalorder %v226, 126
    %v3437 = vsel %vm3436, %v3433, %v3435
    %v3438 = vsel %vm3436, %v3431, %v3433
    %v3439 = vsel %vm3436, %v3429, %v3431
    %v3440 = vsel %vm3436, %v3435, %v3429
    %v3442 = vlaneseq
    %v3443 = vshrl.u32 %v3442, 7
    %v3444 = vsub.s32 0, %v3443
    %v3445 = vrot.slane %v3427, %v3444
    %v3446 = vlaneseq
    %v3447 = vshrl.u32 %v3446, 7
    %v3448 = vsub.s32 1, %v3447
    %v3449 = vrot.slane %v3427, %v3448
    %v3450 = vlaneseq
    %v3451 = vshrl.u32 %v3450, 7
    %v3452 = vsub.s32 2, %v3451
    %v3453 = vrot.slane %v3427, %v3452
    %v3454 = vlaneseq
    %v3455 = vshrl.u32 %v3454, 7
    %v3456 = vsub.s32 3, %v3455
    %v3457 = vrot.slane %v3427, %v3456
    %v3462 = vmul.f32 %v3439, %v3445
    %v3463 = vmul.f32 %v3438, %v3449
    %v3464 = vmul.f32 %v3437, %v3453
    %v3465 = vmul.f32 %v3440, %v3457
    %v3466 = vpack.c.bf16 %v3462, %v3462
    %v3467 = vpack.c.bf16 %v3463, %v3463
    %v3468 = vpack.c.bf16 %v3464, %v3464
    %v3469 = vpack.c.bf16 %v3465, %v3465
    %s3470 = scalar_lea.vmem %s7, 56
    %v3471 = vld [vmem:[%s3470] sm:$0xf]
    %v3473 = vsel %vm308, %v3471, 0
    %v3476 = vsel %vm312, %v3466, 0
    %v3479 = vsel %vm312, %v3467, 0
    %v3482 = vsel %vm312, %v3468, 0
    %v3485 = vsel %vm312, %v3469, 0
    %3487 = vmatprep.subr.bf16.mxu0 %v3479
    %3488 = vmatpush1.bf16.msra.mxu0 %v3476
    %3489 = vmatprep.subr.bf16.mxu0 0
    %3490 = vmatpush1.bf16.msra.mxu0 0
    %3491 = vmatprep.subr.bf16.mxu0 0
    %3492 = vmatpush1.bf16.msra.mxu0 0
    %3493 = vmatprep.subr.bf16.mxu0 0
    %3494 = vmatpush1.bf16.msra.mxu0 0
    %3495 = vmatprep.subr.bf16.mxu0 0
    %3496 = vmatpush1.bf16.msra.mxu0 0
    %3497 = vmatprep.subr.bf16.mxu0 0
    %3498 = vmatpush1.bf16.msra.mxu0 0
    %3499 = vmatprep.subr.bf16.mxu0 0
    %3500 = vmatpush1.bf16.msra.mxu0 0
    %3501 = vmatprep.subr.bf16.mxu0 0
    %3502 = vmatpush1.bf16.msra.mxu0 0
    %3503 = vmatprep.subr.bf16.mxu0 0
    %3504 = vmatpush1.bf16.msra.mxu0 0
    %3505 = vmatprep.subr.bf16.mxu0 0
    %3506 = vmatpush1.bf16.msra.mxu0 0
    %3507 = vmatprep.subr.bf16.mxu0 0
    %3508 = vmatpush1.bf16.msra.mxu0 0
    %3509 = vmatprep.subr.bf16.mxu0 0
    %3510 = vmatpush1.bf16.msra.mxu0 0
    %3511 = vmatprep.subr.bf16.mxu0 0
    %3512 = vmatpush1.bf16.msra.mxu0 0
    %3513 = vmatprep.subr.bf16.mxu0 0
    %3514 = vmatpush1.bf16.msra.mxu0 0
    %3515 = vmatprep.subr.bf16.mxu0 0
    %3516 = vmatpush1.bf16.msra.mxu0 0
    %3517 = vmatprep.subr.bf16.mxu0 0
    %3518 = vmatpush1.bf16.msra.mxu0 0
    %3519 = vmatprep.mubr.bf16.mxu0 0
    %3520 = vmatmul.mubr.bf16.gmra.mrb[0].mxu0 %v3473
    %v3521 = vpop.f32.mrb[0].mxu0
    %v3522 = vadd.f32 0.0, %v3521
    %v3523 = vpop.f32.mrb[0].mxu0
    %v3524 = vadd.f32 0.0, %v3523
    %v3525 = vpop.f32.mrb[0].mxu0
    %v3526 = vpop.f32.mrb[0].mxu0
    %3527 = vdwg.mxu0
    %3528 = vmatprep.subr.bf16.mxu0 %v3485
    %3529 = vmatpush1.bf16.msra.mxu0 %v3482
    %3530 = vmatprep.subr.bf16.mxu0 0
    %3531 = vmatpush1.bf16.msra.mxu0 0
    %3532 = vmatprep.subr.bf16.mxu0 0
    %3533 = vmatpush1.bf16.msra.mxu0 0
    %3534 = vmatprep.subr.bf16.mxu0 0
    %3535 = vmatpush1.bf16.msra.mxu0 0
    %3536 = vmatprep.subr.bf16.mxu0 0
    %3537 = vmatpush1.bf16.msra.mxu0 0
    %3538 = vmatprep.subr.bf16.mxu0 0
    %3539 = vmatpush1.bf16.msra.mxu0 0
    %3540 = vmatprep.subr.bf16.mxu0 0
    %3541 = vmatpush1.bf16.msra.mxu0 0
    %3542 = vmatprep.subr.bf16.mxu0 0
    %3543 = vmatpush1.bf16.msra.mxu0 0
    %3544 = vmatprep.subr.bf16.mxu0 0
    %3545 = vmatpush1.bf16.msra.mxu0 0
    %3546 = vmatprep.subr.bf16.mxu0 0
    %3547 = vmatpush1.bf16.msra.mxu0 0
    %3548 = vmatprep.subr.bf16.mxu0 0
    %3549 = vmatpush1.bf16.msra.mxu0 0
    %3550 = vmatprep.subr.bf16.mxu0 0
    %3551 = vmatpush1.bf16.msra.mxu0 0
    %3552 = vmatprep.subr.bf16.mxu0 0
    %3553 = vmatpush1.bf16.msra.mxu0 0
    %3554 = vmatprep.subr.bf16.mxu0 0
    %3555 = vmatpush1.bf16.msra.mxu0 0
    %3556 = vmatprep.subr.bf16.mxu0 0
    %3557 = vmatpush1.bf16.msra.mxu0 0
    %3558 = vmatprep.subr.bf16.mxu0 0
    %3559 = vmatpush1.bf16.msra.mxu0 0
    %3560 = vmatprep.mubr.bf16.mxu0 0
    %3561 = vmatmul.mubr.bf16.gmra.mrb[0].mxu0 %v3473
    %v3562 = vpop.f32.mrb[0].mxu0
    %v3563 = vadd.f32 0.0, %v3562
    %v3564 = vpop.f32.mrb[0].mxu0
    %v3565 = vadd.f32 0.0, %v3564
    %v3566 = vpop.f32.mrb[0].mxu0
    %v3567 = vpop.f32.mrb[0].mxu0
    %3568 = vdwg.mxu0
    %v3569 = vadd.f32 %v3422, %v3522
    %v3570 = vadd.f32 %v3423, %v3524
    %v3571 = vadd.f32 %v3424, %v3563
    %v3572 = vadd.f32 %v3425, %v3565
    %s3573 = scalar_lea.vmem %s1, 39
    %v3574 = vld [vmem:[%s3573] ss:$8 sm:$0xf]
    %3575 = vrot.lane.b32.xlu0 %v211, 114
    %v3576 = vpop.permute.xlu0 %3575
    %3577 = vrot.lane.b32.xlu0 %v212, 114
    %v3578 = vpop.permute.xlu0 %3577
    %3579 = vrot.lane.b32.xlu0 %v213, 114
    %v3580 = vpop.permute.xlu0 %3579
    %3581 = vrot.lane.b32.xlu0 %v214, 114
    %v3582 = vpop.permute.xlu0 %3581
    %vm3583 = vcmp.lt.s32.totalorder %v226, 114
    %v3584 = vsel %vm3583, %v3580, %v3582
    %v3585 = vsel %vm3583, %v3578, %v3580
    %v3586 = vsel %vm3583, %v3576, %v3578
    %v3587 = vsel %vm3583, %v3582, %v3576
    %v3589 = vlaneseq
    %v3590 = vshrl.u32 %v3589, 7
    %v3591 = vsub.s32 0, %v3590
    %v3592 = vrot.slane %v3574, %v3591
    %v3593 = vlaneseq
    %v3594 = vshrl.u32 %v3593, 7
    %v3595 = vsub.s32 1, %v3594
    %v3596 = vrot.slane %v3574, %v3595
    %v3597 = vlaneseq
    %v3598 = vshrl.u32 %v3597, 7
    %v3599 = vsub.s32 2, %v3598
    %v3600 = vrot.slane %v3574, %v3599
    %v3601 = vlaneseq
    %v3602 = vshrl.u32 %v3601, 7
    %v3603 = vsub.s32 3, %v3602
    %v3604 = vrot.slane %v3574, %v3603
    %v3609 = vmul.f32 %v3586, %v3592
    %v3610 = vmul.f32 %v3585, %v3596
    %v3611 = vmul.f32 %v3584, %v3600
    %v3612 = vmul.f32 %v3587, %v3604
    %v3613 = vpack.c.bf16 %v3609, %v3609
    %v3614 = vpack.c.bf16 %v3610, %v3610
    %v3615 = vpack.c.bf16 %v3611, %v3611
    %v3616 = vpack.c.bf16 %v3612, %v3612
    %s3617 = scalar_lea.vmem %s7, 60
    %v3618 = vld [vmem:[%s3617] sm:$0xf]
    %v3620 = vsel %vm308, %v3618, 0
    %v3623 = vsel %vm312, %v3613, 0
    %v3626 = vsel %vm312, %v3614, 0
    %v3629 = vsel %vm312, %v3615, 0
    %v3632 = vsel %vm312, %v3616, 0
    %3634 = vmatprep.subr.bf16.mxu0 %v3626
    %3635 = vmatpush1.bf16.msra.mxu0 %v3623
    %3636 = vmatprep.subr.bf16.mxu0 0
    %3637 = vmatpush1.bf16.msra.mxu0 0
    %3638 = vmatprep.subr.bf16.mxu0 0
    %3639 = vmatpush1.bf16.msra.mxu0 0
    %3640 = vmatprep.subr.bf16.mxu0 0
    %3641 = vmatpush1.bf16.msra.mxu0 0
    %3642 = vmatprep.subr.bf16.mxu0 0
    %3643 = vmatpush1.bf16.msra.mxu0 0
    %3644 = vmatprep.subr.bf16.mxu0 0
    %3645 = vmatpush1.bf16.msra.mxu0 0
    %3646 = vmatprep.subr.bf16.mxu0 0
    %3647 = vmatpush1.bf16.msra.mxu0 0
    %3648 = vmatprep.subr.bf16.mxu0 0
    %3649 = vmatpush1.bf16.msra.mxu0 0
    %3650 = vmatprep.subr.bf16.mxu0 0
    %3651 = vmatpush1.bf16.msra.mxu0 0
    %3652 = vmatprep.subr.bf16.mxu0 0
    %3653 = vmatpush1.bf16.msra.mxu0 0
    %3654 = vmatprep.subr.bf16.mxu0 0
    %3655 = vmatpush1.bf16.msra.mxu0 0
    %3656 = vmatprep.subr.bf16.mxu0 0
    %3657 = vmatpush1.bf16.msra.mxu0 0
    %3658 = vmatprep.subr.bf16.mxu0 0
    %3659 = vmatpush1.bf16.msra.mxu0 0
    %3660 = vmatprep.subr.bf16.mxu0 0
    %3661 = vmatpush1.bf16.msra.mxu0 0
    %3662 = vmatprep.subr.bf16.mxu0 0
    %3663 = vmatpush1.bf16.msra.mxu0 0
    %3664 = vmatprep.subr.bf16.mxu0 0
    %3665 = vmatpush1.bf16.msra.mxu0 0
    %3666 = vmatprep.mubr.bf16.mxu0 0
    %3667 = vmatmul.mubr.bf16.gmra.mrb[0].mxu0 %v3620
    %v3668 = vpop.f32.mrb[0].mxu0
    %v3669 = vadd.f32 0.0, %v3668
    %v3670 = vpop.f32.mrb[0].mxu0
    %v3671 = vadd.f32 0.0, %v3670
    %v3672 = vpop.f32.mrb[0].mxu0
    %v3673 = vpop.f32.mrb[0].mxu0
    %3674 = vdwg.mxu0
    %3675 = vmatprep.subr.bf16.mxu0 %v3632
    %3676 = vmatpush1.bf16.msra.mxu0 %v3629
    %3677 = vmatprep.subr.bf16.mxu0 0
    %3678 = vmatpush1.bf16.msra.mxu0 0
    %3679 = vmatprep.subr.bf16.mxu0 0
    %3680 = vmatpush1.bf16.msra.mxu0 0
    %3681 = vmatprep.subr.bf16.mxu0 0
    %3682 = vmatpush1.bf16.msra.mxu0 0
    %3683 = vmatprep.subr.bf16.mxu0 0
    %3684 = vmatpush1.bf16.msra.mxu0 0
    %3685 = vmatprep.subr.bf16.mxu0 0
    %3686 = vmatpush1.bf16.msra.mxu0 0
    %3687 = vmatprep.subr.bf16.mxu0 0
    %3688 = vmatpush1.bf16.msra.mxu0 0
    %3689 = vmatprep.subr.bf16.mxu0 0
    %3690 = vmatpush1.bf16.msra.mxu0 0
    %3691 = vmatprep.subr.bf16.mxu0 0
    %3692 = vmatpush1.bf16.msra.mxu0 0
    %3693 = vmatprep.subr.bf16.mxu0 0
    %3694 = vmatpush1.bf16.msra.mxu0 0
    %3695 = vmatprep.subr.bf16.mxu0 0
    %3696 = vmatpush1.bf16.msra.mxu0 0
    %3697 = vmatprep.subr.bf16.mxu0 0
    %3698 = vmatpush1.bf16.msra.mxu0 0
    %3699 = vmatprep.subr.bf16.mxu0 0
    %3700 = vmatpush1.bf16.msra.mxu0 0
    %3701 = vmatprep.subr.bf16.mxu0 0
    %3702 = vmatpush1.bf16.msra.mxu0 0
    %3703 = vmatprep.subr.bf16.mxu0 0
    %3704 = vmatpush1.bf16.msra.mxu0 0
    %3705 = vmatprep.subr.bf16.mxu0 0
    %3706 = vmatpush1.bf16.msra.mxu0 0
    %3707 = vmatprep.mubr.bf16.mxu0 0
    %3708 = vmatmul.mubr.bf16.gmra.mrb[0].mxu0 %v3620
    %v3709 = vpop.f32.mrb[0].mxu0
    %v3710 = vadd.f32 0.0, %v3709
    %v3711 = vpop.f32.mrb[0].mxu0
    %v3712 = vadd.f32 0.0, %v3711
    %v3713 = vpop.f32.mrb[0].mxu0
    %v3714 = vpop.f32.mrb[0].mxu0
    %3715 = vdwg.mxu0
    %v3716 = vadd.f32 %v3569, %v3669
    %v3717 = vadd.f32 %v3570, %v3671
    %v3718 = vadd.f32 %v3571, %v3710
    %v3719 = vadd.f32 %v3572, %v3712
    %3720 = vrot.lane.b32.xlu0 %v211, 113
    %v3721 = vpop.permute.xlu0 %3720
    %3722 = vrot.lane.b32.xlu0 %v212, 113
    %v3723 = vpop.permute.xlu0 %3722
    %3724 = vrot.lane.b32.xlu0 %v213, 113
    %v3725 = vpop.permute.xlu0 %3724
    %3726 = vrot.lane.b32.xlu0 %v214, 113
    %v3727 = vpop.permute.xlu0 %3726
    %v3728 = vsel %vm1089, %v3725, %v3727
    %v3729 = vsel %vm1089, %v3723, %v3725
    %v3730 = vsel %vm1089, %v3721, %v3723
    %v3731 = vsel %vm1089, %v3727, %v3721
    %v3732 = vmul.f32 %v3730, %v1098
    %v3733 = vmul.f32 %v3729, %v1102
    %v3734 = vmul.f32 %v3728, %v1106
    %v3735 = vmul.f32 %v3731, %v1110
    %v3736 = vpack.c.bf16 %v3732, %v3732
    %v3737 = vpack.c.bf16 %v3733, %v3733
    %v3738 = vpack.c.bf16 %v3734, %v3734
    %v3739 = vpack.c.bf16 %v3735, %v3735
    %s3740 = scalar_lea.vmem %s7, 64
    %v3741 = vld [vmem:[%s3740] sm:$0xf]
    %v3743 = vsel %vm308, %v3741, 0
    %v3746 = vsel %vm312, %v3736, 0
    %v3749 = vsel %vm312, %v3737, 0
    %v3752 = vsel %vm312, %v3738, 0
    %v3755 = vsel %vm312, %v3739, 0
    %3757 = vmatprep.subr.bf16.mxu0 %v3749
    %3758 = vmatpush1.bf16.msra.mxu0 %v3746
    %3759 = vmatprep.subr.bf16.mxu0 0
    %3760 = vmatpush1.bf16.msra.mxu0 0
    %3761 = vmatprep.subr.bf16.mxu0 0
    %3762 = vmatpush1.bf16.msra.mxu0 0
    %3763 = vmatprep.subr.bf16.mxu0 0
    %3764 = vmatpush1.bf16.msra.mxu0 0
    %3765 = vmatprep.subr.bf16.mxu0 0
    %3766 = vmatpush1.bf16.msra.mxu0 0
    %3767 = vmatprep.subr.bf16.mxu0 0
    %3768 = vmatpush1.bf16.msra.mxu0 0
    %3769 = vmatprep.subr.bf16.mxu0 0
    %3770 = vmatpush1.bf16.msra.mxu0 0
    %3771 = vmatprep.subr.bf16.mxu0 0
    %3772 = vmatpush1.bf16.msra.mxu0 0
    %3773 = vmatprep.subr.bf16.mxu0 0
    %3774 = vmatpush1.bf16.msra.mxu0 0
    %3775 = vmatprep.subr.bf16.mxu0 0
    %3776 = vmatpush1.bf16.msra.mxu0 0
    %3777 = vmatprep.subr.bf16.mxu0 0
    %3778 = vmatpush1.bf16.msra.mxu0 0
    %3779 = vmatprep.subr.bf16.mxu0 0
    %3780 = vmatpush1.bf16.msra.mxu0 0
    %3781 = vmatprep.subr.bf16.mxu0 0
    %3782 = vmatpush1.bf16.msra.mxu0 0
    %3783 = vmatprep.subr.bf16.mxu0 0
    %3784 = vmatpush1.bf16.msra.mxu0 0
    %3785 = vmatprep.subr.bf16.mxu0 0
    %3786 = vmatpush1.bf16.msra.mxu0 0
    %3787 = vmatprep.subr.bf16.mxu0 0
    %3788 = vmatpush1.bf16.msra.mxu0 0
    %3789 = vmatprep.mubr.bf16.mxu0 0
    %3790 = vmatmul.mubr.bf16.gmra.mrb[0].mxu0 %v3743
    %v3791 = vpop.f32.mrb[0].mxu0
    %v3792 = vadd.f32 0.0, %v3791
    %v3793 = vpop.f32.mrb[0].mxu0
    %v3794 = vadd.f32 0.0, %v3793
    %v3795 = vpop.f32.mrb[0].mxu0
    %v3796 = vpop.f32.mrb[0].mxu0
    %3797 = vdwg.mxu0
    %3798 = vmatprep.subr.bf16.mxu0 %v3755
    %3799 = vmatpush1.bf16.msra.mxu0 %v3752
    %3800 = vmatprep.subr.bf16.mxu0 0
    %3801 = vmatpush1.bf16.msra.mxu0 0
    %3802 = vmatprep.subr.bf16.mxu0 0
    %3803 = vmatpush1.bf16.msra.mxu0 0
    %3804 = vmatprep.subr.bf16.mxu0 0
    %3805 = vmatpush1.bf16.msra.mxu0 0
    %3806 = vmatprep.subr.bf16.mxu0 0
    %3807 = vmatpush1.bf16.msra.mxu0 0
    %3808 = vmatprep.subr.bf16.mxu0 0
    %3809 = vmatpush1.bf16.msra.mxu0 0
    %3810 = vmatprep.subr.bf16.mxu0 0
    %3811 = vmatpush1.bf16.msra.mxu0 0
    %3812 = vmatprep.subr.bf16.mxu0 0
    %3813 = vmatpush1.bf16.msra.mxu0 0
    %3814 = vmatprep.subr.bf16.mxu0 0
    %3815 = vmatpush1.bf16.msra.mxu0 0
    %3816 = vmatprep.subr.bf16.mxu0 0
    %3817 = vmatpush1.bf16.msra.mxu0 0
    %3818 = vmatprep.subr.bf16.mxu0 0
    %3819 = vmatpush1.bf16.msra.mxu0 0
    %3820 = vmatprep.subr.bf16.mxu0 0
    %3821 = vmatpush1.bf16.msra.mxu0 0
    %3822 = vmatprep.subr.bf16.mxu0 0
    %3823 = vmatpush1.bf16.msra.mxu0 0
    %3824 = vmatprep.subr.bf16.mxu0 0
    %3825 = vmatpush1.bf16.msra.mxu0 0
    %3826 = vmatprep.subr.bf16.mxu0 0
    %3827 = vmatpush1.bf16.msra.mxu0 0
    %3828 = vmatprep.subr.bf16.mxu0 0
    %3829 = vmatpush1.bf16.msra.mxu0 0
    %3830 = vmatprep.mubr.bf16.mxu0 0
    %3831 = vmatmul.mubr.bf16.gmra.mrb[0].mxu0 %v3743
    %v3832 = vpop.f32.mrb[0].mxu0
    %v3833 = vadd.f32 0.0, %v3832
    %v3834 = vpop.f32.mrb[0].mxu0
    %v3835 = vadd.f32 0.0, %v3834
    %v3836 = vpop.f32.mrb[0].mxu0
    %v3837 = vpop.f32.mrb[0].mxu0
    %3838 = vdwg.mxu0
    %v3839 = vadd.f32 %v3716, %v3792
    %v3840 = vadd.f32 %v3717, %v3794
    %v3841 = vadd.f32 %v3718, %v3833
    %v3842 = vadd.f32 %v3719, %v3835
    %3843 = vrot.lane.b32.xlu0 %v211, 112
    %v3844 = vpop.permute.xlu0 %3843
    %3845 = vrot.lane.b32.xlu0 %v212, 112
    %v3846 = vpop.permute.xlu0 %3845
    %3847 = vrot.lane.b32.xlu0 %v213, 112
    %v3848 = vpop.permute.xlu0 %3847
    %3849 = vrot.lane.b32.xlu0 %v214, 112
    %v3850 = vpop.permute.xlu0 %3849
    %v3851 = vsel %vm1236, %v3848, %v3850
    %v3852 = vsel %vm1236, %v3846, %v3848
    %v3853 = vsel %vm1236, %v3844, %v3846
    %v3854 = vsel %vm1236, %v3850, %v3844
    %v3855 = vmul.f32 %v3853, %v1245
    %v3856 = vmul.f32 %v3852, %v1249
    %v3857 = vmul.f32 %v3851, %v1253
    %v3858 = vmul.f32 %v3854, %v1257
    %v3859 = vpack.c.bf16 %v3855, %v3855
    %v3860 = vpack.c.bf16 %v3856, %v3856
    %v3861 = vpack.c.bf16 %v3857, %v3857
    %v3862 = vpack.c.bf16 %v3858, %v3858
    %s3863 = scalar_lea.vmem %s7, 68
    %v3864 = vld [vmem:[%s3863] sm:$0xf]
    %v3866 = vsel %vm308, %v3864, 0
    %v3869 = vsel %vm312, %v3859, 0
    %v3872 = vsel %vm312, %v3860, 0
    %v3875 = vsel %vm312, %v3861, 0
    %v3878 = vsel %vm312, %v3862, 0
    %3880 = vmatprep.subr.bf16.mxu0 %v3872
    %3881 = vmatpush1.bf16.msra.mxu0 %v3869
    %3882 = vmatprep.subr.bf16.mxu0 0
    %3883 = vmatpush1.bf16.msra.mxu0 0
    %3884 = vmatprep.subr.bf16.mxu0 0
    %3885 = vmatpush1.bf16.msra.mxu0 0
    %3886 = vmatprep.subr.bf16.mxu0 0
    %3887 = vmatpush1.bf16.msra.mxu0 0
    %3888 = vmatprep.subr.bf16.mxu0 0
    %3889 = vmatpush1.bf16.msra.mxu0 0
    %3890 = vmatprep.subr.bf16.mxu0 0
    %3891 = vmatpush1.bf16.msra.mxu0 0
    %3892 = vmatprep.subr.bf16.mxu0 0
    %3893 = vmatpush1.bf16.msra.mxu0 0
    %3894 = vmatprep.subr.bf16.mxu0 0
    %3895 = vmatpush1.bf16.msra.mxu0 0
    %3896 = vmatprep.subr.bf16.mxu0 0
    %3897 = vmatpush1.bf16.msra.mxu0 0
    %3898 = vmatprep.subr.bf16.mxu0 0
    %3899 = vmatpush1.bf16.msra.mxu0 0
    %3900 = vmatprep.subr.bf16.mxu0 0
    %3901 = vmatpush1.bf16.msra.mxu0 0
    %3902 = vmatprep.subr.bf16.mxu0 0
    %3903 = vmatpush1.bf16.msra.mxu0 0
    %3904 = vmatprep.subr.bf16.mxu0 0
    %3905 = vmatpush1.bf16.msra.mxu0 0
    %3906 = vmatprep.subr.bf16.mxu0 0
    %3907 = vmatpush1.bf16.msra.mxu0 0
    %3908 = vmatprep.subr.bf16.mxu0 0
    %3909 = vmatpush1.bf16.msra.mxu0 0
    %3910 = vmatprep.subr.bf16.mxu0 0
    %3911 = vmatpush1.bf16.msra.mxu0 0
    %3912 = vmatprep.mubr.bf16.mxu0 0
    %3913 = vmatmul.mubr.bf16.gmra.mrb[0].mxu0 %v3866
    %v3914 = vpop.f32.mrb[0].mxu0
    %v3915 = vadd.f32 0.0, %v3914
    %v3916 = vpop.f32.mrb[0].mxu0
    %v3917 = vadd.f32 0.0, %v3916
    %v3918 = vpop.f32.mrb[0].mxu0
    %v3919 = vpop.f32.mrb[0].mxu0
    %3920 = vdwg.mxu0
    %3921 = vmatprep.subr.bf16.mxu0 %v3878
    %3922 = vmatpush1.bf16.msra.mxu0 %v3875
    %3923 = vmatprep.subr.bf16.mxu0 0
    %3924 = vmatpush1.bf16.msra.mxu0 0
    %3925 = vmatprep.subr.bf16.mxu0 0
    %3926 = vmatpush1.bf16.msra.mxu0 0
    %3927 = vmatprep.subr.bf16.mxu0 0
    %3928 = vmatpush1.bf16.msra.mxu0 0
    %3929 = vmatprep.subr.bf16.mxu0 0
    %3930 = vmatpush1.bf16.msra.mxu0 0
    %3931 = vmatprep.subr.bf16.mxu0 0
    %3932 = vmatpush1.bf16.msra.mxu0 0
    %3933 = vmatprep.subr.bf16.mxu0 0
    %3934 = vmatpush1.bf16.msra.mxu0 0
    %3935 = vmatprep.subr.bf16.mxu0 0
    %3936 = vmatpush1.bf16.msra.mxu0 0
    %3937 = vmatprep.subr.bf16.mxu0 0
    %3938 = vmatpush1.bf16.msra.mxu0 0
    %3939 = vmatprep.subr.bf16.mxu0 0
    %3940 = vmatpush1.bf16.msra.mxu0 0
    %3941 = vmatprep.subr.bf16.mxu0 0
    %3942 = vmatpush1.bf16.msra.mxu0 0
    %3943 = vmatprep.subr.bf16.mxu0 0
    %3944 = vmatpush1.bf16.msra.mxu0 0
    %3945 = vmatprep.subr.bf16.mxu0 0
    %3946 = vmatpush1.bf16.msra.mxu0 0
    %3947 = vmatprep.subr.bf16.mxu0 0
    %3948 = vmatpush1.bf16.msra.mxu0 0
    %3949 = vmatprep.subr.bf16.mxu0 0
    %3950 = vmatpush1.bf16.msra.mxu0 0
    %3951 = vmatprep.subr.bf16.mxu0 0
    %3952 = vmatpush1.bf16.msra.mxu0 0
    %3953 = vmatprep.mubr.bf16.mxu0 0
    %3954 = vmatmul.mubr.bf16.gmra.mrb[0].mxu0 %v3866
    %v3955 = vpop.f32.mrb[0].mxu0
    %v3956 = vadd.f32 0.0, %v3955
    %v3957 = vpop.f32.mrb[0].mxu0
    %v3958 = vadd.f32 0.0, %v3957
    %v3959 = vpop.f32.mrb[0].mxu0
    %v3960 = vpop.f32.mrb[0].mxu0
    %3961 = vdwg.mxu0
    %v3962 = vadd.f32 %v3839, %v3915
    %v3963 = vadd.f32 %v3840, %v3917
    %v3964 = vadd.f32 %v3841, %v3956
    %v3965 = vadd.f32 %v3842, %v3958
    %3966 = vrot.lane.b32.xlu0 %v211, 111
    %v3967 = vpop.permute.xlu0 %3966
    %3968 = vrot.lane.b32.xlu0 %v212, 111
    %v3969 = vpop.permute.xlu0 %3968
    %3970 = vrot.lane.b32.xlu0 %v213, 111
    %v3971 = vpop.permute.xlu0 %3970
    %3972 = vrot.lane.b32.xlu0 %v214, 111
    %v3973 = vpop.permute.xlu0 %3972
    %v3974 = vsel %vm1383, %v3971, %v3973
    %v3975 = vsel %vm1383, %v3969, %v3971
    %v3976 = vsel %vm1383, %v3967, %v3969
    %v3977 = vsel %vm1383, %v3973, %v3967
    %v3978 = vmul.f32 %v3976, %v1392
    %v3979 = vmul.f32 %v3975, %v1396
    %v3980 = vmul.f32 %v3974, %v1400
    %v3981 = vmul.f32 %v3977, %v1404
    %v3982 = vpack.c.bf16 %v3978, %v3978
    %v3983 = vpack.c.bf16 %v3979, %v3979
    %v3984 = vpack.c.bf16 %v3980, %v3980
    %v3985 = vpack.c.bf16 %v3981, %v3981
    %s3986 = scalar_lea.vmem %s7, 72
    %v3987 = vld [vmem:[%s3986] sm:$0xf]
    %v3989 = vsel %vm308, %v3987, 0
    %v3992 = vsel %vm312, %v3982, 0
    %v3995 = vsel %vm312, %v3983, 0
    %v3998 = vsel %vm312, %v3984, 0
    %v4001 = vsel %vm312, %v3985, 0
    %4003 = vmatprep.subr.bf16.mxu0 %v3995
    %4004 = vmatpush1.bf16.msra.mxu0 %v3992
    %4005 = vmatprep.subr.bf16.mxu0 0
    %4006 = vmatpush1.bf16.msra.mxu0 0
    %4007 = vmatprep.subr.bf16.mxu0 0
    %4008 = vmatpush1.bf16.msra.mxu0 0
    %4009 = vmatprep.subr.bf16.mxu0 0
    %4010 = vmatpush1.bf16.msra.mxu0 0
    %4011 = vmatprep.subr.bf16.mxu0 0
    %4012 = vmatpush1.bf16.msra.mxu0 0
    %4013 = vmatprep.subr.bf16.mxu0 0
    %4014 = vmatpush1.bf16.msra.mxu0 0
    %4015 = vmatprep.subr.bf16.mxu0 0
    %4016 = vmatpush1.bf16.msra.mxu0 0
    %4017 = vmatprep.subr.bf16.mxu0 0
    %4018 = vmatpush1.bf16.msra.mxu0 0
    %4019 = vmatprep.subr.bf16.mxu0 0
    %4020 = vmatpush1.bf16.msra.mxu0 0
    %4021 = vmatprep.subr.bf16.mxu0 0
    %4022 = vmatpush1.bf16.msra.mxu0 0
    %4023 = vmatprep.subr.bf16.mxu0 0
    %4024 = vmatpush1.bf16.msra.mxu0 0
    %4025 = vmatprep.subr.bf16.mxu0 0
    %4026 = vmatpush1.bf16.msra.mxu0 0
    %4027 = vmatprep.subr.bf16.mxu0 0
    %4028 = vmatpush1.bf16.msra.mxu0 0
    %4029 = vmatprep.subr.bf16.mxu0 0
    %4030 = vmatpush1.bf16.msra.mxu0 0
    %4031 = vmatprep.subr.bf16.mxu0 0
    %4032 = vmatpush1.bf16.msra.mxu0 0
    %4033 = vmatprep.subr.bf16.mxu0 0
    %4034 = vmatpush1.bf16.msra.mxu0 0
    %4035 = vmatprep.mubr.bf16.mxu0 0
    %4036 = vmatmul.mubr.bf16.gmra.mrb[0].mxu0 %v3989
    %v4037 = vpop.f32.mrb[0].mxu0
    %v4038 = vadd.f32 0.0, %v4037
    %v4039 = vpop.f32.mrb[0].mxu0
    %v4040 = vadd.f32 0.0, %v4039
    %v4041 = vpop.f32.mrb[0].mxu0
    %v4042 = vpop.f32.mrb[0].mxu0
    %4043 = vdwg.mxu0
    %4044 = vmatprep.subr.bf16.mxu0 %v4001
    %4045 = vmatpush1.bf16.msra.mxu0 %v3998
    %4046 = vmatprep.subr.bf16.mxu0 0
    %4047 = vmatpush1.bf16.msra.mxu0 0
    %4048 = vmatprep.subr.bf16.mxu0 0
    %4049 = vmatpush1.bf16.msra.mxu0 0
    %4050 = vmatprep.subr.bf16.mxu0 0
    %4051 = vmatpush1.bf16.msra.mxu0 0
    %4052 = vmatprep.subr.bf16.mxu0 0
    %4053 = vmatpush1.bf16.msra.mxu0 0
    %4054 = vmatprep.subr.bf16.mxu0 0
    %4055 = vmatpush1.bf16.msra.mxu0 0
    %4056 = vmatprep.subr.bf16.mxu0 0
    %4057 = vmatpush1.bf16.msra.mxu0 0
    %4058 = vmatprep.subr.bf16.mxu0 0
    %4059 = vmatpush1.bf16.msra.mxu0 0
    %4060 = vmatprep.subr.bf16.mxu0 0
    %4061 = vmatpush1.bf16.msra.mxu0 0
    %4062 = vmatprep.subr.bf16.mxu0 0
    %4063 = vmatpush1.bf16.msra.mxu0 0
    %4064 = vmatprep.subr.bf16.mxu0 0
    %4065 = vmatpush1.bf16.msra.mxu0 0
    %4066 = vmatprep.subr.bf16.mxu0 0
    %4067 = vmatpush1.bf16.msra.mxu0 0
    %4068 = vmatprep.subr.bf16.mxu0 0
    %4069 = vmatpush1.bf16.msra.mxu0 0
    %4070 = vmatprep.subr.bf16.mxu0 0
    %4071 = vmatpush1.bf16.msra.mxu0 0
    %4072 = vmatprep.subr.bf16.mxu0 0
    %4073 = vmatpush1.bf16.msra.mxu0 0
    %4074 = vmatprep.subr.bf16.mxu0 0
    %4075 = vmatpush1.bf16.msra.mxu0 0
    %4076 = vmatprep.mubr.bf16.mxu0 0
    %4077 = vmatmul.mubr.bf16.gmra.mrb[0].mxu0 %v3989
    %v4078 = vpop.f32.mrb[0].mxu0
    %v4079 = vadd.f32 0.0, %v4078
    %v4080 = vpop.f32.mrb[0].mxu0
    %v4081 = vadd.f32 0.0, %v4080
    %v4082 = vpop.f32.mrb[0].mxu0
    %v4083 = vpop.f32.mrb[0].mxu0
    %4084 = vdwg.mxu0
    %v4085 = vadd.f32 %v3962, %v4038
    %v4086 = vadd.f32 %v3963, %v4040
    %v4087 = vadd.f32 %v3964, %v4079
    %v4088 = vadd.f32 %v3965, %v4081
    %s4089 = scalar_lea.vmem %s1, 67
    %v4090 = vld [vmem:[%s4089] ss:$8 sm:$0xf]
    %4091 = vrot.lane.b32.xlu0 %v211, 110
    %v4092 = vpop.permute.xlu0 %4091
    %4093 = vrot.lane.b32.xlu0 %v212, 110
    %v4094 = vpop.permute.xlu0 %4093
    %4095 = vrot.lane.b32.xlu0 %v213, 110
    %v4096 = vpop.permute.xlu0 %4095
    %4097 = vrot.lane.b32.xlu0 %v214, 110
    %v4098 = vpop.permute.xlu0 %4097
    %vm4099 = vcmp.lt.s32.totalorder %v226, 110
    %v4100 = vsel %vm4099, %v4096, %v4098
    %v4101 = vsel %vm4099, %v4094, %v4096
    %v4102 = vsel %vm4099, %v4092, %v4094
    %v4103 = vsel %vm4099, %v4098, %v4092
    %v4105 = vlaneseq
    %v4106 = vshrl.u32 %v4105, 7
    %v4107 = vsub.s32 0, %v4106
    %v4108 = vrot.slane %v4090, %v4107
    %v4109 = vlaneseq
    %v4110 = vshrl.u32 %v4109, 7
    %v4111 = vsub.s32 1, %v4110
    %v4112 = vrot.slane %v4090, %v4111
    %v4113 = vlaneseq
    %v4114 = vshrl.u32 %v4113, 7
    %v4115 = vsub.s32 2, %v4114
    %v4116 = vrot.slane %v4090, %v4115
    %v4117 = vlaneseq
    %v4118 = vshrl.u32 %v4117, 7
    %v4119 = vsub.s32 3, %v4118
    %v4120 = vrot.slane %v4090, %v4119
    %v4125 = vmul.f32 %v4102, %v4108
    %v4126 = vmul.f32 %v4101, %v4112
    %v4127 = vmul.f32 %v4100, %v4116
    %v4128 = vmul.f32 %v4103, %v4120
    %v4129 = vpack.c.bf16 %v4125, %v4125
    %v4130 = vpack.c.bf16 %v4126, %v4126
    %v4131 = vpack.c.bf16 %v4127, %v4127
    %v4132 = vpack.c.bf16 %v4128, %v4128
    %s4133 = scalar_lea.vmem %s7, 76
    %v4134 = vld [vmem:[%s4133] sm:$0xf]
    %v4136 = vsel %vm308, %v4134, 0
    %v4139 = vsel %vm312, %v4129, 0
    %v4142 = vsel %vm312, %v4130, 0
    %v4145 = vsel %vm312, %v4131, 0
    %v4148 = vsel %vm312, %v4132, 0
    %4150 = vmatprep.subr.bf16.mxu0 %v4142
    %4151 = vmatpush1.bf16.msra.mxu0 %v4139
    %4152 = vmatprep.subr.bf16.mxu0 0
    %4153 = vmatpush1.bf16.msra.mxu0 0
    %4154 = vmatprep.subr.bf16.mxu0 0
    %4155 = vmatpush1.bf16.msra.mxu0 0
    %4156 = vmatprep.subr.bf16.mxu0 0
    %4157 = vmatpush1.bf16.msra.mxu0 0
    %4158 = vmatprep.subr.bf16.mxu0 0
    %4159 = vmatpush1.bf16.msra.mxu0 0
    %4160 = vmatprep.subr.bf16.mxu0 0
    %4161 = vmatpush1.bf16.msra.mxu0 0
    %4162 = vmatprep.subr.bf16.mxu0 0
    %4163 = vmatpush1.bf16.msra.mxu0 0
    %4164 = vmatprep.subr.bf16.mxu0 0
    %4165 = vmatpush1.bf16.msra.mxu0 0
    %4166 = vmatprep.subr.bf16.mxu0 0
    %4167 = vmatpush1.bf16.msra.mxu0 0
    %4168 = vmatprep.subr.bf16.mxu0 0
    %4169 = vmatpush1.bf16.msra.mxu0 0
    %4170 = vmatprep.subr.bf16.mxu0 0
    %4171 = vmatpush1.bf16.msra.mxu0 0
    %4172 = vmatprep.subr.bf16.mxu0 0
    %4173 = vmatpush1.bf16.msra.mxu0 0
    %4174 = vmatprep.subr.bf16.mxu0 0
    %4175 = vmatpush1.bf16.msra.mxu0 0
    %4176 = vmatprep.subr.bf16.mxu0 0
    %4177 = vmatpush1.bf16.msra.mxu0 0
    %4178 = vmatprep.subr.bf16.mxu0 0
    %4179 = vmatpush1.bf16.msra.mxu0 0
    %4180 = vmatprep.subr.bf16.mxu0 0
    %4181 = vmatpush1.bf16.msra.mxu0 0
    %4182 = vmatprep.mubr.bf16.mxu0 0
    %4183 = vmatmul.mubr.bf16.gmra.mrb[0].mxu0 %v4136
    %v4184 = vpop.f32.mrb[0].mxu0
    %v4185 = vadd.f32 0.0, %v4184
    %v4186 = vpop.f32.mrb[0].mxu0
    %v4187 = vadd.f32 0.0, %v4186
    %v4188 = vpop.f32.mrb[0].mxu0
    %v4189 = vpop.f32.mrb[0].mxu0
    %4190 = vdwg.mxu0
    %4191 = vmatprep.subr.bf16.mxu0 %v4148
    %4192 = vmatpush1.bf16.msra.mxu0 %v4145
    %4193 = vmatprep.subr.bf16.mxu0 0
    %4194 = vmatpush1.bf16.msra.mxu0 0
    %4195 = vmatprep.subr.bf16.mxu0 0
    %4196 = vmatpush1.bf16.msra.mxu0 0
    %4197 = vmatprep.subr.bf16.mxu0 0
    %4198 = vmatpush1.bf16.msra.mxu0 0
    %4199 = vmatprep.subr.bf16.mxu0 0
    %4200 = vmatpush1.bf16.msra.mxu0 0
    %4201 = vmatprep.subr.bf16.mxu0 0
    %4202 = vmatpush1.bf16.msra.mxu0 0
    %4203 = vmatprep.subr.bf16.mxu0 0
    %4204 = vmatpush1.bf16.msra.mxu0 0
    %4205 = vmatprep.subr.bf16.mxu0 0
    %4206 = vmatpush1.bf16.msra.mxu0 0
    %4207 = vmatprep.subr.bf16.mxu0 0
    %4208 = vmatpush1.bf16.msra.mxu0 0
    %4209 = vmatprep.subr.bf16.mxu0 0
    %4210 = vmatpush1.bf16.msra.mxu0 0
    %4211 = vmatprep.subr.bf16.mxu0 0
    %4212 = vmatpush1.bf16.msra.mxu0 0
    %4213 = vmatprep.subr.bf16.mxu0 0
    %4214 = vmatpush1.bf16.msra.mxu0 0
    %4215 = vmatprep.subr.bf16.mxu0 0
    %4216 = vmatpush1.bf16.msra.mxu0 0
    %4217 = vmatprep.subr.bf16.mxu0 0
    %4218 = vmatpush1.bf16.msra.mxu0 0
    %4219 = vmatprep.subr.bf16.mxu0 0
    %4220 = vmatpush1.bf16.msra.mxu0 0
    %4221 = vmatprep.subr.bf16.mxu0 0
    %4222 = vmatpush1.bf16.msra.mxu0 0
    %4223 = vmatprep.mubr.bf16.mxu0 0
    %4224 = vmatmul.mubr.bf16.gmra.mrb[0].mxu0 %v4136
    %v4225 = vpop.f32.mrb[0].mxu0
    %v4226 = vadd.f32 0.0, %v4225
    %v4227 = vpop.f32.mrb[0].mxu0
    %v4228 = vadd.f32 0.0, %v4227
    %v4229 = vpop.f32.mrb[0].mxu0
    %v4230 = vpop.f32.mrb[0].mxu0
    %4231 = vdwg.mxu0
    %v4232 = vadd.f32 %v4085, %v4185
    %v4233 = vadd.f32 %v4086, %v4187
    %v4234 = vadd.f32 %v4087, %v4226
    %v4235 = vadd.f32 %v4088, %v4228
    %s4236 = scalar_lea.vmem %s1, 68
    %v4237 = vld [vmem:[%s4236] ss:$8 sm:$0xf]
    %4238 = vrot.lane.b32.xlu0 %v211, 98
    %v4239 = vpop.permute.xlu0 %4238
    %4240 = vrot.lane.b32.xlu0 %v212, 98
    %v4241 = vpop.permute.xlu0 %4240
    %4242 = vrot.lane.b32.xlu0 %v213, 98
    %v4243 = vpop.permute.xlu0 %4242
    %4244 = vrot.lane.b32.xlu0 %v214, 98
    %v4245 = vpop.permute.xlu0 %4244
    %vm4246 = vcmp.lt.s32.totalorder %v226, 98
    %v4247 = vsel %vm4246, %v4243, %v4245
    %v4248 = vsel %vm4246, %v4241, %v4243
    %v4249 = vsel %vm4246, %v4239, %v4241
    %v4250 = vsel %vm4246, %v4245, %v4239
    %v4252 = vlaneseq
    %v4253 = vshrl.u32 %v4252, 7
    %v4254 = vsub.s32 0, %v4253
    %v4255 = vrot.slane %v4237, %v4254
    %v4256 = vlaneseq
    %v4257 = vshrl.u32 %v4256, 7
    %v4258 = vsub.s32 1, %v4257
    %v4259 = vrot.slane %v4237, %v4258
    %v4260 = vlaneseq
    %v4261 = vshrl.u32 %v4260, 7
    %v4262 = vsub.s32 2, %v4261
    %v4263 = vrot.slane %v4237, %v4262
    %v4264 = vlaneseq
    %v4265 = vshrl.u32 %v4264, 7
    %v4266 = vsub.s32 3, %v4265
    %v4267 = vrot.slane %v4237, %v4266
    %v4272 = vmul.f32 %v4249, %v4255
    %v4273 = vmul.f32 %v4248, %v4259
    %v4274 = vmul.f32 %v4247, %v4263
    %v4275 = vmul.f32 %v4250, %v4267
    %v4276 = vpack.c.bf16 %v4272, %v4272
    %v4277 = vpack.c.bf16 %v4273, %v4273
    %v4278 = vpack.c.bf16 %v4274, %v4274
    %v4279 = vpack.c.bf16 %v4275, %v4275
    %s4280 = scalar_lea.vmem %s7, 80
    %v4281 = vld [vmem:[%s4280] sm:$0xf]
    %v4283 = vsel %vm308, %v4281, 0
    %v4286 = vsel %vm312, %v4276, 0
    %v4289 = vsel %vm312, %v4277, 0
    %v4292 = vsel %vm312, %v4278, 0
    %v4295 = vsel %vm312, %v4279, 0
    %4297 = vmatprep.subr.bf16.mxu0 %v4289
    %4298 = vmatpush1.bf16.msra.mxu0 %v4286
    %4299 = vmatprep.subr.bf16.mxu0 0
    %4300 = vmatpush1.bf16.msra.mxu0 0
    %4301 = vmatprep.subr.bf16.mxu0 0
    %4302 = vmatpush1.bf16.msra.mxu0 0
    %4303 = vmatprep.subr.bf16.mxu0 0
    %4304 = vmatpush1.bf16.msra.mxu0 0
    %4305 = vmatprep.subr.bf16.mxu0 0
    %4306 = vmatpush1.bf16.msra.mxu0 0
    %4307 = vmatprep.subr.bf16.mxu0 0
    %4308 = vmatpush1.bf16.msra.mxu0 0
    %4309 = vmatprep.subr.bf16.mxu0 0
    %4310 = vmatpush1.bf16.msra.mxu0 0
    %4311 = vmatprep.subr.bf16.mxu0 0
    %4312 = vmatpush1.bf16.msra.mxu0 0
    %4313 = vmatprep.subr.bf16.mxu0 0
    %4314 = vmatpush1.bf16.msra.mxu0 0
    %4315 = vmatprep.subr.bf16.mxu0 0
    %4316 = vmatpush1.bf16.msra.mxu0 0
    %4317 = vmatprep.subr.bf16.mxu0 0
    %4318 = vmatpush1.bf16.msra.mxu0 0
    %4319 = vmatprep.subr.bf16.mxu0 0
    %4320 = vmatpush1.bf16.msra.mxu0 0
    %4321 = vmatprep.subr.bf16.mxu0 0
    %4322 = vmatpush1.bf16.msra.mxu0 0
    %4323 = vmatprep.subr.bf16.mxu0 0
    %4324 = vmatpush1.bf16.msra.mxu0 0
    %4325 = vmatprep.subr.bf16.mxu0 0
    %4326 = vmatpush1.bf16.msra.mxu0 0
    %4327 = vmatprep.subr.bf16.mxu0 0
    %4328 = vmatpush1.bf16.msra.mxu0 0
    %4329 = vmatprep.mubr.bf16.mxu0 0
    %4330 = vmatmul.mubr.bf16.gmra.mrb[0].mxu0 %v4283
    %v4331 = vpop.f32.mrb[0].mxu0
    %v4332 = vadd.f32 0.0, %v4331
    %v4333 = vpop.f32.mrb[0].mxu0
    %v4334 = vadd.f32 0.0, %v4333
    %v4335 = vpop.f32.mrb[0].mxu0
    %v4336 = vpop.f32.mrb[0].mxu0
    %4337 = vdwg.mxu0
    %4338 = vmatprep.subr.bf16.mxu0 %v4295
    %4339 = vmatpush1.bf16.msra.mxu0 %v4292
    %4340 = vmatprep.subr.bf16.mxu0 0
    %4341 = vmatpush1.bf16.msra.mxu0 0
    %4342 = vmatprep.subr.bf16.mxu0 0
    %4343 = vmatpush1.bf16.msra.mxu0 0
    %4344 = vmatprep.subr.bf16.mxu0 0
    %4345 = vmatpush1.bf16.msra.mxu0 0
    %4346 = vmatprep.subr.bf16.mxu0 0
    %4347 = vmatpush1.bf16.msra.mxu0 0
    %4348 = vmatprep.subr.bf16.mxu0 0
    %4349 = vmatpush1.bf16.msra.mxu0 0
    %4350 = vmatprep.subr.bf16.mxu0 0
    %4351 = vmatpush1.bf16.msra.mxu0 0
    %4352 = vmatprep.subr.bf16.mxu0 0
    %4353 = vmatpush1.bf16.msra.mxu0 0
    %4354 = vmatprep.subr.bf16.mxu0 0
    %4355 = vmatpush1.bf16.msra.mxu0 0
    %4356 = vmatprep.subr.bf16.mxu0 0
    %4357 = vmatpush1.bf16.msra.mxu0 0
    %4358 = vmatprep.subr.bf16.mxu0 0
    %4359 = vmatpush1.bf16.msra.mxu0 0
    %4360 = vmatprep.subr.bf16.mxu0 0
    %4361 = vmatpush1.bf16.msra.mxu0 0
    %4362 = vmatprep.subr.bf16.mxu0 0
    %4363 = vmatpush1.bf16.msra.mxu0 0
    %4364 = vmatprep.subr.bf16.mxu0 0
    %4365 = vmatpush1.bf16.msra.mxu0 0
    %4366 = vmatprep.subr.bf16.mxu0 0
    %4367 = vmatpush1.bf16.msra.mxu0 0
    %4368 = vmatprep.subr.bf16.mxu0 0
    %4369 = vmatpush1.bf16.msra.mxu0 0
    %4370 = vmatprep.mubr.bf16.mxu0 0
    %4371 = vmatmul.mubr.bf16.gmra.mrb[0].mxu0 %v4283
    %v4372 = vpop.f32.mrb[0].mxu0
    %v4373 = vadd.f32 0.0, %v4372
    %v4374 = vpop.f32.mrb[0].mxu0
    %v4375 = vadd.f32 0.0, %v4374
    %v4376 = vpop.f32.mrb[0].mxu0
    %v4377 = vpop.f32.mrb[0].mxu0
    %4378 = vdwg.mxu0
    %v4379 = vadd.f32 %v4232, %v4332
    %v4380 = vadd.f32 %v4233, %v4334
    %v4381 = vadd.f32 %v4234, %v4373
    %v4382 = vadd.f32 %v4235, %v4375
    %s4383 = scalar_lea.vmem %s1, 69
    %v4384 = vld [vmem:[%s4383] ss:$8 sm:$0xf]
    %4385 = vrot.lane.b32.xlu0 %v211, 97
    %v4386 = vpop.permute.xlu0 %4385
    %4387 = vrot.lane.b32.xlu0 %v212, 97
    %v4388 = vpop.permute.xlu0 %4387
    %4389 = vrot.lane.b32.xlu0 %v213, 97
    %v4390 = vpop.permute.xlu0 %4389
    %4391 = vrot.lane.b32.xlu0 %v214, 97
    %v4392 = vpop.permute.xlu0 %4391
    %vm4393 = vcmp.lt.s32.totalorder %v226, 97
    %v4394 = vsel %vm4393, %v4390, %v4392
    %v4395 = vsel %vm4393, %v4388, %v4390
    %v4396 = vsel %vm4393, %v4386, %v4388
    %v4397 = vsel %vm4393, %v4392, %v4386
    %v4399 = vlaneseq
    %v4400 = vshrl.u32 %v4399, 7
    %v4401 = vsub.s32 0, %v4400
    %v4402 = vrot.slane %v4384, %v4401
    %v4403 = vlaneseq
    %v4404 = vshrl.u32 %v4403, 7
    %v4405 = vsub.s32 1, %v4404
    %v4406 = vrot.slane %v4384, %v4405
    %v4407 = vlaneseq
    %v4408 = vshrl.u32 %v4407, 7
    %v4409 = vsub.s32 2, %v4408
    %v4410 = vrot.slane %v4384, %v4409
    %v4411 = vlaneseq
    %v4412 = vshrl.u32 %v4411, 7
    %v4413 = vsub.s32 3, %v4412
    %v4414 = vrot.slane %v4384, %v4413
    %v4419 = vmul.f32 %v4396, %v4402
    %v4420 = vmul.f32 %v4395, %v4406
    %v4421 = vmul.f32 %v4394, %v4410
    %v4422 = vmul.f32 %v4397, %v4414
    %v4423 = vpack.c.bf16 %v4419, %v4419
    %v4424 = vpack.c.bf16 %v4420, %v4420
    %v4425 = vpack.c.bf16 %v4421, %v4421
    %v4426 = vpack.c.bf16 %v4422, %v4422
    %s4427 = scalar_lea.vmem %s7, 84
    %v4428 = vld [vmem:[%s4427] sm:$0xf]
    %v4430 = vsel %vm308, %v4428, 0
    %v4433 = vsel %vm312, %v4423, 0
    %v4436 = vsel %vm312, %v4424, 0
    %v4439 = vsel %vm312, %v4425, 0
    %v4442 = vsel %vm312, %v4426, 0
    %4444 = vmatprep.subr.bf16.mxu0 %v4436
    %4445 = vmatpush1.bf16.msra.mxu0 %v4433
    %4446 = vmatprep.subr.bf16.mxu0 0
    %4447 = vmatpush1.bf16.msra.mxu0 0
    %4448 = vmatprep.subr.bf16.mxu0 0
    %4449 = vmatpush1.bf16.msra.mxu0 0
    %4450 = vmatprep.subr.bf16.mxu0 0
    %4451 = vmatpush1.bf16.msra.mxu0 0
    %4452 = vmatprep.subr.bf16.mxu0 0
    %4453 = vmatpush1.bf16.msra.mxu0 0
    %4454 = vmatprep.subr.bf16.mxu0 0
    %4455 = vmatpush1.bf16.msra.mxu0 0
    %4456 = vmatprep.subr.bf16.mxu0 0
    %4457 = vmatpush1.bf16.msra.mxu0 0
    %4458 = vmatprep.subr.bf16.mxu0 0
    %4459 = vmatpush1.bf16.msra.mxu0 0
    %4460 = vmatprep.subr.bf16.mxu0 0
    %4461 = vmatpush1.bf16.msra.mxu0 0
    %4462 = vmatprep.subr.bf16.mxu0 0
    %4463 = vmatpush1.bf16.msra.mxu0 0
    %4464 = vmatprep.subr.bf16.mxu0 0
    %4465 = vmatpush1.bf16.msra.mxu0 0
    %4466 = vmatprep.subr.bf16.mxu0 0
    %4467 = vmatpush1.bf16.msra.mxu0 0
    %4468 = vmatprep.subr.bf16.mxu0 0
    %4469 = vmatpush1.bf16.msra.mxu0 0
    %4470 = vmatprep.subr.bf16.mxu0 0
    %4471 = vmatpush1.bf16.msra.mxu0 0
    %4472 = vmatprep.subr.bf16.mxu0 0
    %4473 = vmatpush1.bf16.msra.mxu0 0
    %4474 = vmatprep.subr.bf16.mxu0 0
    %4475 = vmatpush1.bf16.msra.mxu0 0
    %4476 = vmatprep.mubr.bf16.mxu0 0
    %4477 = vmatmul.mubr.bf16.gmra.mrb[0].mxu0 %v4430
    %v4478 = vpop.f32.mrb[0].mxu0
    %v4479 = vadd.f32 0.0, %v4478
    %v4480 = vpop.f32.mrb[0].mxu0
    %v4481 = vadd.f32 0.0, %v4480
    %v4482 = vpop.f32.mrb[0].mxu0
    %v4483 = vpop.f32.mrb[0].mxu0
    %4484 = vdwg.mxu0
    %4485 = vmatprep.subr.bf16.mxu0 %v4442
    %4486 = vmatpush1.bf16.msra.mxu0 %v4439
    %4487 = vmatprep.subr.bf16.mxu0 0
    %4488 = vmatpush1.bf16.msra.mxu0 0
    %4489 = vmatprep.subr.bf16.mxu0 0
    %4490 = vmatpush1.bf16.msra.mxu0 0
    %4491 = vmatprep.subr.bf16.mxu0 0
    %4492 = vmatpush1.bf16.msra.mxu0 0
    %4493 = vmatprep.subr.bf16.mxu0 0
    %4494 = vmatpush1.bf16.msra.mxu0 0
    %4495 = vmatprep.subr.bf16.mxu0 0
    %4496 = vmatpush1.bf16.msra.mxu0 0
    %4497 = vmatprep.subr.bf16.mxu0 0
    %4498 = vmatpush1.bf16.msra.mxu0 0
    %4499 = vmatprep.subr.bf16.mxu0 0
    %4500 = vmatpush1.bf16.msra.mxu0 0
    %4501 = vmatprep.subr.bf16.mxu0 0
    %4502 = vmatpush1.bf16.msra.mxu0 0
    %4503 = vmatprep.subr.bf16.mxu0 0
    %4504 = vmatpush1.bf16.msra.mxu0 0
    %4505 = vmatprep.subr.bf16.mxu0 0
    %4506 = vmatpush1.bf16.msra.mxu0 0
    %4507 = vmatprep.subr.bf16.mxu0 0
    %4508 = vmatpush1.bf16.msra.mxu0 0
    %4509 = vmatprep.subr.bf16.mxu0 0
    %4510 = vmatpush1.bf16.msra.mxu0 0
    %4511 = vmatprep.subr.bf16.mxu0 0
    %4512 = vmatpush1.bf16.msra.mxu0 0
    %4513 = vmatprep.subr.bf16.mxu0 0
    %4514 = vmatpush1.bf16.msra.mxu0 0
    %4515 = vmatprep.subr.bf16.mxu0 0
    %4516 = vmatpush1.bf16.msra.mxu0 0
    %4517 = vmatprep.mubr.bf16.mxu0 0
    %4518 = vmatmul.mubr.bf16.gmra.mrb[0].mxu0 %v4430
    %v4519 = vpop.f32.mrb[0].mxu0
    %v4520 = vadd.f32 0.0, %v4519
    %v4521 = vpop.f32.mrb[0].mxu0
    %v4522 = vadd.f32 0.0, %v4521
    %v4523 = vpop.f32.mrb[0].mxu0
    %v4524 = vpop.f32.mrb[0].mxu0
    %4525 = vdwg.mxu0
    %v4526 = vadd.f32 %v4379, %v4479
    %v4527 = vadd.f32 %v4380, %v4481
    %v4528 = vadd.f32 %v4381, %v4520
    %v4529 = vadd.f32 %v4382, %v4522
    %s4530 = scalar_lea.vmem %s1, 70
    %v4531 = vld [vmem:[%s4530] ss:$8 sm:$0xf]
    %4532 = vrot.lane.b32.xlu0 %v211, 96
    %v4533 = vpop.permute.xlu0 %4532
    %4534 = vrot.lane.b32.xlu0 %v212, 96
    %v4535 = vpop.permute.xlu0 %4534
    %4536 = vrot.lane.b32.xlu0 %v213, 96
    %v4537 = vpop.permute.xlu0 %4536
    %4538 = vrot.lane.b32.xlu0 %v214, 96
    %v4539 = vpop.permute.xlu0 %4538
    %vm4540 = vcmp.lt.s32.totalorder %v226, 96
    %v4541 = vsel %vm4540, %v4537, %v4539
    %v4542 = vsel %vm4540, %v4535, %v4537
    %v4543 = vsel %vm4540, %v4533, %v4535
    %v4544 = vsel %vm4540, %v4539, %v4533
    %v4546 = vlaneseq
    %v4547 = vshrl.u32 %v4546, 7
    %v4548 = vsub.s32 0, %v4547
    %v4549 = vrot.slane %v4531, %v4548
    %v4550 = vlaneseq
    %v4551 = vshrl.u32 %v4550, 7
    %v4552 = vsub.s32 1, %v4551
    %v4553 = vrot.slane %v4531, %v4552
    %v4554 = vlaneseq
    %v4555 = vshrl.u32 %v4554, 7
    %v4556 = vsub.s32 2, %v4555
    %v4557 = vrot.slane %v4531, %v4556
    %v4558 = vlaneseq
    %v4559 = vshrl.u32 %v4558, 7
    %v4560 = vsub.s32 3, %v4559
    %v4561 = vrot.slane %v4531, %v4560
    %v4566 = vmul.f32 %v4543, %v4549
    %v4567 = vmul.f32 %v4542, %v4553
    %v4568 = vmul.f32 %v4541, %v4557
    %v4569 = vmul.f32 %v4544, %v4561
    %v4570 = vpack.c.bf16 %v4566, %v4566
    %v4571 = vpack.c.bf16 %v4567, %v4567
    %v4572 = vpack.c.bf16 %v4568, %v4568
    %v4573 = vpack.c.bf16 %v4569, %v4569
    %s4574 = scalar_lea.vmem %s7, 88
    %v4575 = vld [vmem:[%s4574] sm:$0xf]
    %v4577 = vsel %vm308, %v4575, 0
    %v4580 = vsel %vm312, %v4570, 0
    %v4583 = vsel %vm312, %v4571, 0
    %v4586 = vsel %vm312, %v4572, 0
    %v4589 = vsel %vm312, %v4573, 0
    %4591 = vmatprep.subr.bf16.mxu0 %v4583
    %4592 = vmatpush1.bf16.msra.mxu0 %v4580
    %4593 = vmatprep.subr.bf16.mxu0 0
    %4594 = vmatpush1.bf16.msra.mxu0 0
    %4595 = vmatprep.subr.bf16.mxu0 0
    %4596 = vmatpush1.bf16.msra.mxu0 0
    %4597 = vmatprep.subr.bf16.mxu0 0
    %4598 = vmatpush1.bf16.msra.mxu0 0
    %4599 = vmatprep.subr.bf16.mxu0 0
    %4600 = vmatpush1.bf16.msra.mxu0 0
    %4601 = vmatprep.subr.bf16.mxu0 0
    %4602 = vmatpush1.bf16.msra.mxu0 0
    %4603 = vmatprep.subr.bf16.mxu0 0
    %4604 = vmatpush1.bf16.msra.mxu0 0
    %4605 = vmatprep.subr.bf16.mxu0 0
    %4606 = vmatpush1.bf16.msra.mxu0 0
    %4607 = vmatprep.subr.bf16.mxu0 0
    %4608 = vmatpush1.bf16.msra.mxu0 0
    %4609 = vmatprep.subr.bf16.mxu0 0
    %4610 = vmatpush1.bf16.msra.mxu0 0
    %4611 = vmatprep.subr.bf16.mxu0 0
    %4612 = vmatpush1.bf16.msra.mxu0 0
    %4613 = vmatprep.subr.bf16.mxu0 0
    %4614 = vmatpush1.bf16.msra.mxu0 0
    %4615 = vmatprep.subr.bf16.mxu0 0
    %4616 = vmatpush1.bf16.msra.mxu0 0
    %4617 = vmatprep.subr.bf16.mxu0 0
    %4618 = vmatpush1.bf16.msra.mxu0 0
    %4619 = vmatprep.subr.bf16.mxu0 0
    %4620 = vmatpush1.bf16.msra.mxu0 0
    %4621 = vmatprep.subr.bf16.mxu0 0
    %4622 = vmatpush1.bf16.msra.mxu0 0
    %4623 = vmatprep.mubr.bf16.mxu0 0
    %4624 = vmatmul.mubr.bf16.gmra.mrb[0].mxu0 %v4577
    %v4625 = vpop.f32.mrb[0].mxu0
    %v4626 = vadd.f32 0.0, %v4625
    %v4627 = vpop.f32.mrb[0].mxu0
    %v4628 = vadd.f32 0.0, %v4627
    %v4629 = vpop.f32.mrb[0].mxu0
    %v4630 = vpop.f32.mrb[0].mxu0
    %4631 = vdwg.mxu0
    %4632 = vmatprep.subr.bf16.mxu0 %v4589
    %4633 = vmatpush1.bf16.msra.mxu0 %v4586
    %4634 = vmatprep.subr.bf16.mxu0 0
    %4635 = vmatpush1.bf16.msra.mxu0 0
    %4636 = vmatprep.subr.bf16.mxu0 0
    %4637 = vmatpush1.bf16.msra.mxu0 0
    %4638 = vmatprep.subr.bf16.mxu0 0
    %4639 = vmatpush1.bf16.msra.mxu0 0
    %4640 = vmatprep.subr.bf16.mxu0 0
    %4641 = vmatpush1.bf16.msra.mxu0 0
    %4642 = vmatprep.subr.bf16.mxu0 0
    %4643 = vmatpush1.bf16.msra.mxu0 0
    %4644 = vmatprep.subr.bf16.mxu0 0
    %4645 = vmatpush1.bf16.msra.mxu0 0
    %4646 = vmatprep.subr.bf16.mxu0 0
    %4647 = vmatpush1.bf16.msra.mxu0 0
    %4648 = vmatprep.subr.bf16.mxu0 0
    %4649 = vmatpush1.bf16.msra.mxu0 0
    %4650 = vmatprep.subr.bf16.mxu0 0
    %4651 = vmatpush1.bf16.msra.mxu0 0
    %4652 = vmatprep.subr.bf16.mxu0 0
    %4653 = vmatpush1.bf16.msra.mxu0 0
    %4654 = vmatprep.subr.bf16.mxu0 0
    %4655 = vmatpush1.bf16.msra.mxu0 0
    %4656 = vmatprep.subr.bf16.mxu0 0
    %4657 = vmatpush1.bf16.msra.mxu0 0
    %4658 = vmatprep.subr.bf16.mxu0 0
    %4659 = vmatpush1.bf16.msra.mxu0 0
    %4660 = vmatprep.subr.bf16.mxu0 0
    %4661 = vmatpush1.bf16.msra.mxu0 0
    %4662 = vmatprep.subr.bf16.mxu0 0
    %4663 = vmatpush1.bf16.msra.mxu0 0
    %4664 = vmatprep.mubr.bf16.mxu0 0
    %4665 = vmatmul.mubr.bf16.gmra.mrb[0].mxu0 %v4577
    %v4666 = vpop.f32.mrb[0].mxu0
    %v4667 = vadd.f32 0.0, %v4666
    %v4668 = vpop.f32.mrb[0].mxu0
    %v4669 = vadd.f32 0.0, %v4668
    %v4670 = vpop.f32.mrb[0].mxu0
    %v4671 = vpop.f32.mrb[0].mxu0
    %4672 = vdwg.mxu0
    %v4673 = vadd.f32 %v4526, %v4626
    %v4674 = vadd.f32 %v4527, %v4628
    %v4675 = vadd.f32 %v4528, %v4667
    %v4676 = vadd.f32 %v4529, %v4669
    %s4677 = scalar_lea.vmem %s1, 71
    %v4678 = vld [vmem:[%s4677] ss:$8 sm:$0xf]
    %4679 = vrot.lane.b32.xlu0 %v211, 95
    %v4680 = vpop.permute.xlu0 %4679
    %4681 = vrot.lane.b32.xlu0 %v212, 95
    %v4682 = vpop.permute.xlu0 %4681
    %4683 = vrot.lane.b32.xlu0 %v213, 95
    %v4684 = vpop.permute.xlu0 %4683
    %4685 = vrot.lane.b32.xlu0 %v214, 95
    %v4686 = vpop.permute.xlu0 %4685
    %vm4687 = vcmp.lt.s32.totalorder %v226, 95
    %v4688 = vsel %vm4687, %v4684, %v4686
    %v4689 = vsel %vm4687, %v4682, %v4684
    %v4690 = vsel %vm4687, %v4680, %v4682
    %v4691 = vsel %vm4687, %v4686, %v4680
    %v4693 = vlaneseq
    %v4694 = vshrl.u32 %v4693, 7
    %v4695 = vsub.s32 0, %v4694
    %v4696 = vrot.slane %v4678, %v4695
    %v4697 = vlaneseq
    %v4698 = vshrl.u32 %v4697, 7
    %v4699 = vsub.s32 1, %v4698
    %v4700 = vrot.slane %v4678, %v4699
    %v4701 = vlaneseq
    %v4702 = vshrl.u32 %v4701, 7
    %v4703 = vsub.s32 2, %v4702
    %v4704 = vrot.slane %v4678, %v4703
    %v4705 = vlaneseq
    %v4706 = vshrl.u32 %v4705, 7
    %v4707 = vsub.s32 3, %v4706
    %v4708 = vrot.slane %v4678, %v4707
    %v4713 = vmul.f32 %v4690, %v4696
    %v4714 = vmul.f32 %v4689, %v4700
    %v4715 = vmul.f32 %v4688, %v4704
    %v4716 = vmul.f32 %v4691, %v4708
    %v4717 = vpack.c.bf16 %v4713, %v4713
    %v4718 = vpack.c.bf16 %v4714, %v4714
    %v4719 = vpack.c.bf16 %v4715, %v4715
    %v4720 = vpack.c.bf16 %v4716, %v4716
    %s4721 = scalar_lea.vmem %s7, 92
    %v4722 = vld [vmem:[%s4721] sm:$0xf]
    %v4724 = vsel %vm308, %v4722, 0
    %v4727 = vsel %vm312, %v4717, 0
    %v4730 = vsel %vm312, %v4718, 0
    %v4733 = vsel %vm312, %v4719, 0
    %v4736 = vsel %vm312, %v4720, 0
    %4738 = vmatprep.subr.bf16.mxu0 %v4730
    %4739 = vmatpush1.bf16.msra.mxu0 %v4727
    %4740 = vmatprep.subr.bf16.mxu0 0
    %4741 = vmatpush1.bf16.msra.mxu0 0
    %4742 = vmatprep.subr.bf16.mxu0 0
    %4743 = vmatpush1.bf16.msra.mxu0 0
    %4744 = vmatprep.subr.bf16.mxu0 0
    %4745 = vmatpush1.bf16.msra.mxu0 0
    %4746 = vmatprep.subr.bf16.mxu0 0
    %4747 = vmatpush1.bf16.msra.mxu0 0
    %4748 = vmatprep.subr.bf16.mxu0 0
    %4749 = vmatpush1.bf16.msra.mxu0 0
    %4750 = vmatprep.subr.bf16.mxu0 0
    %4751 = vmatpush1.bf16.msra.mxu0 0
    %4752 = vmatprep.subr.bf16.mxu0 0
    %4753 = vmatpush1.bf16.msra.mxu0 0
    %4754 = vmatprep.subr.bf16.mxu0 0
    %4755 = vmatpush1.bf16.msra.mxu0 0
    %4756 = vmatprep.subr.bf16.mxu0 0
    %4757 = vmatpush1.bf16.msra.mxu0 0
    %4758 = vmatprep.subr.bf16.mxu0 0
    %4759 = vmatpush1.bf16.msra.mxu0 0
    %4760 = vmatprep.subr.bf16.mxu0 0
    %4761 = vmatpush1.bf16.msra.mxu0 0
    %4762 = vmatprep.subr.bf16.mxu0 0
    %4763 = vmatpush1.bf16.msra.mxu0 0
    %4764 = vmatprep.subr.bf16.mxu0 0
    %4765 = vmatpush1.bf16.msra.mxu0 0
    %4766 = vmatprep.subr.bf16.mxu0 0
    %4767 = vmatpush1.bf16.msra.mxu0 0
    %4768 = vmatprep.subr.bf16.mxu0 0
    %4769 = vmatpush1.bf16.msra.mxu0 0
    %4770 = vmatprep.mubr.bf16.mxu0 0
    %4771 = vmatmul.mubr.bf16.gmra.mrb[0].mxu0 %v4724
    %v4772 = vpop.f32.mrb[0].mxu0
    %v4773 = vadd.f32 0.0, %v4772
    %v4774 = vpop.f32.mrb[0].mxu0
    %v4775 = vadd.f32 0.0, %v4774
    %v4776 = vpop.f32.mrb[0].mxu0
    %v4777 = vpop.f32.mrb[0].mxu0
    %4778 = vdwg.mxu0
    %4779 = vmatprep.subr.bf16.mxu0 %v4736
    %4780 = vmatpush1.bf16.msra.mxu0 %v4733
    %4781 = vmatprep.subr.bf16.mxu0 0
    %4782 = vmatpush1.bf16.msra.mxu0 0
    %4783 = vmatprep.subr.bf16.mxu0 0
    %4784 = vmatpush1.bf16.msra.mxu0 0
    %4785 = vmatprep.subr.bf16.mxu0 0
    %4786 = vmatpush1.bf16.msra.mxu0 0
    %4787 = vmatprep.subr.bf16.mxu0 0
    %4788 = vmatpush1.bf16.msra.mxu0 0
    %4789 = vmatprep.subr.bf16.mxu0 0
    %4790 = vmatpush1.bf16.msra.mxu0 0
    %4791 = vmatprep.subr.bf16.mxu0 0
    %4792 = vmatpush1.bf16.msra.mxu0 0
    %4793 = vmatprep.subr.bf16.mxu0 0
    %4794 = vmatpush1.bf16.msra.mxu0 0
    %4795 = vmatprep.subr.bf16.mxu0 0
    %4796 = vmatpush1.bf16.msra.mxu0 0
    %4797 = vmatprep.subr.bf16.mxu0 0
    %4798 = vmatpush1.bf16.msra.mxu0 0
    %4799 = vmatprep.subr.bf16.mxu0 0
    %4800 = vmatpush1.bf16.msra.mxu0 0
    %4801 = vmatprep.subr.bf16.mxu0 0
    %4802 = vmatpush1.bf16.msra.mxu0 0
    %4803 = vmatprep.subr.bf16.mxu0 0
    %4804 = vmatpush1.bf16.msra.mxu0 0
    %4805 = vmatprep.subr.bf16.mxu0 0
    %4806 = vmatpush1.bf16.msra.mxu0 0
    %4807 = vmatprep.subr.bf16.mxu0 0
    %4808 = vmatpush1.bf16.msra.mxu0 0
    %4809 = vmatprep.subr.bf16.mxu0 0
    %4810 = vmatpush1.bf16.msra.mxu0 0
    %4811 = vmatprep.mubr.bf16.mxu0 0
    %4812 = vmatmul.mubr.bf16.gmra.mrb[0].mxu0 %v4724
    %v4813 = vpop.f32.mrb[0].mxu0
    %v4814 = vadd.f32 0.0, %v4813
    %v4815 = vpop.f32.mrb[0].mxu0
    %v4816 = vadd.f32 0.0, %v4815
    %v4817 = vpop.f32.mrb[0].mxu0
    %v4818 = vpop.f32.mrb[0].mxu0
    %4819 = vdwg.mxu0
    %v4820 = vadd.f32 %v4673, %v4773
    %v4821 = vadd.f32 %v4674, %v4775
    %v4822 = vadd.f32 %v4675, %v4814
    %v4823 = vadd.f32 %v4676, %v4816
    %s4824 = scalar_lea.vmem %s1, 96
    %v4825 = vld [vmem:[%s4824] ss:$8 sm:$0xf]
    %4826 = vrot.lane.b32.xlu0 %v211, 94
    %v4827 = vpop.permute.xlu0 %4826
    %4828 = vrot.lane.b32.xlu0 %v212, 94
    %v4829 = vpop.permute.xlu0 %4828
    %4830 = vrot.lane.b32.xlu0 %v213, 94
    %v4831 = vpop.permute.xlu0 %4830
    %4832 = vrot.lane.b32.xlu0 %v214, 94
    %v4833 = vpop.permute.xlu0 %4832
    %vm4834 = vcmp.lt.s32.totalorder %v226, 94
    %v4835 = vsel %vm4834, %v4831, %v4833
    %v4836 = vsel %vm4834, %v4829, %v4831
    %v4837 = vsel %vm4834, %v4827, %v4829
    %v4838 = vsel %vm4834, %v4833, %v4827
    %v4840 = vlaneseq
    %v4841 = vshrl.u32 %v4840, 7
    %v4842 = vsub.s32 0, %v4841
    %v4843 = vrot.slane %v4825, %v4842
    %v4844 = vlaneseq
    %v4845 = vshrl.u32 %v4844, 7
    %v4846 = vsub.s32 1, %v4845
    %v4847 = vrot.slane %v4825, %v4846
    %v4848 = vlaneseq
    %v4849 = vshrl.u32 %v4848, 7
    %v4850 = vsub.s32 2, %v4849
    %v4851 = vrot.slane %v4825, %v4850
    %v4852 = vlaneseq
    %v4853 = vshrl.u32 %v4852, 7
    %v4854 = vsub.s32 3, %v4853
    %v4855 = vrot.slane %v4825, %v4854
    %v4860 = vmul.f32 %v4837, %v4843
    %v4861 = vmul.f32 %v4836, %v4847
    %v4862 = vmul.f32 %v4835, %v4851
    %v4863 = vmul.f32 %v4838, %v4855
    %v4864 = vpack.c.bf16 %v4860, %v4860
    %v4865 = vpack.c.bf16 %v4861, %v4861
    %v4866 = vpack.c.bf16 %v4862, %v4862
    %v4867 = vpack.c.bf16 %v4863, %v4863
    %s4868 = scalar_lea.vmem %s7, 96
    %v4869 = vld [vmem:[%s4868] sm:$0xf]
    %v4871 = vsel %vm308, %v4869, 0
    %v4874 = vsel %vm312, %v4864, 0
    %v4877 = vsel %vm312, %v4865, 0
    %v4880 = vsel %vm312, %v4866, 0
    %v4883 = vsel %vm312, %v4867, 0
    %4885 = vmatprep.subr.bf16.mxu0 %v4877
    %4886 = vmatpush1.bf16.msra.mxu0 %v4874
    %4887 = vmatprep.subr.bf16.mxu0 0
    %4888 = vmatpush1.bf16.msra.mxu0 0
    %4889 = vmatprep.subr.bf16.mxu0 0
    %4890 = vmatpush1.bf16.msra.mxu0 0
    %4891 = vmatprep.subr.bf16.mxu0 0
    %4892 = vmatpush1.bf16.msra.mxu0 0
    %4893 = vmatprep.subr.bf16.mxu0 0
    %4894 = vmatpush1.bf16.msra.mxu0 0
    %4895 = vmatprep.subr.bf16.mxu0 0
    %4896 = vmatpush1.bf16.msra.mxu0 0
    %4897 = vmatprep.subr.bf16.mxu0 0
    %4898 = vmatpush1.bf16.msra.mxu0 0
    %4899 = vmatprep.subr.bf16.mxu0 0
    %4900 = vmatpush1.bf16.msra.mxu0 0
    %4901 = vmatprep.subr.bf16.mxu0 0
    %4902 = vmatpush1.bf16.msra.mxu0 0
    %4903 = vmatprep.subr.bf16.mxu0 0
    %4904 = vmatpush1.bf16.msra.mxu0 0
    %4905 = vmatprep.subr.bf16.mxu0 0
    %4906 = vmatpush1.bf16.msra.mxu0 0
    %4907 = vmatprep.subr.bf16.mxu0 0
    %4908 = vmatpush1.bf16.msra.mxu0 0
    %4909 = vmatprep.subr.bf16.mxu0 0
    %4910 = vmatpush1.bf16.msra.mxu0 0
    %4911 = vmatprep.subr.bf16.mxu0 0
    %4912 = vmatpush1.bf16.msra.mxu0 0
    %4913 = vmatprep.subr.bf16.mxu0 0
    %4914 = vmatpush1.bf16.msra.mxu0 0
    %4915 = vmatprep.subr.bf16.mxu0 0
    %4916 = vmatpush1.bf16.msra.mxu0 0
    %4917 = vmatprep.mubr.bf16.mxu0 0
    %4918 = vmatmul.mubr.bf16.gmra.mrb[0].mxu0 %v4871
    %v4919 = vpop.f32.mrb[0].mxu0
    %v4920 = vadd.f32 0.0, %v4919
    %v4921 = vpop.f32.mrb[0].mxu0
    %v4922 = vadd.f32 0.0, %v4921
    %v4923 = vpop.f32.mrb[0].mxu0
    %v4924 = vpop.f32.mrb[0].mxu0
    %4925 = vdwg.mxu0
    %4926 = vmatprep.subr.bf16.mxu0 %v4883
    %4927 = vmatpush1.bf16.msra.mxu0 %v4880
    %4928 = vmatprep.subr.bf16.mxu0 0
    %4929 = vmatpush1.bf16.msra.mxu0 0
    %4930 = vmatprep.subr.bf16.mxu0 0
    %4931 = vmatpush1.bf16.msra.mxu0 0
    %4932 = vmatprep.subr.bf16.mxu0 0
    %4933 = vmatpush1.bf16.msra.mxu0 0
    %4934 = vmatprep.subr.bf16.mxu0 0
    %4935 = vmatpush1.bf16.msra.mxu0 0
    %4936 = vmatprep.subr.bf16.mxu0 0
    %4937 = vmatpush1.bf16.msra.mxu0 0
    %4938 = vmatprep.subr.bf16.mxu0 0
    %4939 = vmatpush1.bf16.msra.mxu0 0
    %4940 = vmatprep.subr.bf16.mxu0 0
    %4941 = vmatpush1.bf16.msra.mxu0 0
    %4942 = vmatprep.subr.bf16.mxu0 0
    %4943 = vmatpush1.bf16.msra.mxu0 0
    %4944 = vmatprep.subr.bf16.mxu0 0
    %4945 = vmatpush1.bf16.msra.mxu0 0
    %4946 = vmatprep.subr.bf16.mxu0 0
    %4947 = vmatpush1.bf16.msra.mxu0 0
    %4948 = vmatprep.subr.bf16.mxu0 0
    %4949 = vmatpush1.bf16.msra.mxu0 0
    %4950 = vmatprep.subr.bf16.mxu0 0
    %4951 = vmatpush1.bf16.msra.mxu0 0
    %4952 = vmatprep.subr.bf16.mxu0 0
    %4953 = vmatpush1.bf16.msra.mxu0 0
    %4954 = vmatprep.subr.bf16.mxu0 0
    %4955 = vmatpush1.bf16.msra.mxu0 0
    %4956 = vmatprep.subr.bf16.mxu0 0
    %4957 = vmatpush1.bf16.msra.mxu0 0
    %4958 = vmatprep.mubr.bf16.mxu0 0
    %4959 = vmatmul.mubr.bf16.gmra.mrb[0].mxu0 %v4871
    %v4960 = vpop.f32.mrb[0].mxu0
    %v4961 = vadd.f32 0.0, %v4960
    %v4962 = vpop.f32.mrb[0].mxu0
    %v4963 = vadd.f32 0.0, %v4962
    %v4964 = vpop.f32.mrb[0].mxu0
    %v4965 = vpop.f32.mrb[0].mxu0
    %4966 = vdwg.mxu0
    %v4967 = vadd.f32 %v4820, %v4920
    %v4968 = vadd.f32 %v4821, %v4922
    %v4969 = vadd.f32 %v4822, %v4961
    %v4970 = vadd.f32 %v4823, %v4963
    %v4971 = vld [vmem:[%s8] sm:$0xff]
    %4973 = vset.pattern.permute.xlu0 0
    %4974 = vperm.xlu0 %4973, %v4971
    %v4975 = vpop.permute.xlu0 %4974
    %v4977 = vadd.f32 %v4967, %v4975
    %v4978 = vadd.f32 %v4968, %v4975
    %v4979 = vadd.f32 %v4969, %v4975
    %v4980 = vadd.f32 %v4970, %v4975
    %v4981 = vmax.f32 %v4977, 0.0
    %v4982 = vmax.f32 %v4978, 0.0
    %v4983 = vmax.f32 %v4979, 0.0
    %v4984 = vmax.f32 %v4980, 0.0
    %v4985 = vld [vmem:[%s2] sm:$0xff]
    %v4986 = vld [vmem:[%s2 + $0x8] sm:$0xff]
    %4987 = vrot.lane.b32.xlu0 %v40, 1
    %v4988 = vpop.permute.xlu0 %4987
    %4989 = vrot.lane.b32.xlu0 %v44, 1
    %v4990 = vpop.permute.xlu0 %4989
    %4991 = vrot.lane.b32.xlu0 %v41, 1
    %v4992 = vpop.permute.xlu0 %4991
    %4993 = vrot.lane.b32.xlu0 %v45, 1
    %v4994 = vpop.permute.xlu0 %4993
    %v4995 = vsel %vm661, %v4992, %v4994
    %v4996 = vsel %vm661, %v4990, %v4992
    %v4997 = vsel %vm661, %v4988, %v4990
    %v4998 = vsel %vm661, %v4994, %v4988
    %v5001 = vlaneseq
    %v5002 = vshrl.u32 %v5001, 7
    %v5003 = vsub.s32 0, %v5002
    %v5004 = vrot.slane %v4985, %v5003
    %v5005 = vlaneseq
    %v5006 = vshrl.u32 %v5005, 7
    %v5007 = vsub.s32 4, %v5006
    %v5008 = vrot.slane %v4985, %v5007
    %v5009 = vlaneseq
    %v5010 = vshrl.u32 %v5009, 7
    %v5011 = vsub.s32 0, %v5010
    %v5012 = vrot.slane %v4986, %v5011
    %v5013 = vlaneseq
    %v5014 = vshrl.u32 %v5013, 7
    %v5015 = vsub.s32 4, %v5014
    %v5016 = vrot.slane %v4986, %v5015
    %v5021 = vlaneseq
    %v5022 = vshrl.u32 %v5021, 7
    %v5023 = vsub.s32 0, %v5022
    %v5024 = vrot.slane %v5004, %v5023
    %v5025 = vlaneseq
    %v5026 = vshrl.u32 %v5025, 7
    %v5027 = vsub.s32 0, %v5026
    %v5028 = vrot.slane %v5008, %v5027
    %v5029 = vlaneseq
    %v5030 = vshrl.u32 %v5029, 7
    %v5031 = vsub.s32 0, %v5030
    %v5032 = vrot.slane %v5012, %v5031
    %v5033 = vlaneseq
    %v5034 = vshrl.u32 %v5033, 7
    %v5035 = vsub.s32 0, %v5034
    %v5036 = vrot.slane %v5016, %v5035
    %v5037 = vadd.f32 %v4998, %v5024
    %v5038 = vadd.f32 %v4997, %v5028
    %v5039 = vadd.f32 %v4996, %v5032
    %v5040 = vadd.f32 %v4995, %v5036
    %v5045 = vcombine.low %v5037, %v5038
    %v5046 = vcombine.low %v5039, %v5040
    %v5049 = vmax.f32 %v40, %v5045
    %v5050 = vmax.f32 %v41, %v5046
    %5051 = vrot.lane.b32.xlu0 %v40, 127
    %v5052 = vpop.permute.xlu0 %5051
    %5053 = vrot.lane.b32.xlu0 %v44, 127
    %v5054 = vpop.permute.xlu0 %5053
    %5055 = vrot.lane.b32.xlu0 %v41, 127
    %v5056 = vpop.permute.xlu0 %5055
    %5057 = vrot.lane.b32.xlu0 %v45, 127
    %v5058 = vpop.permute.xlu0 %5057
    %v5059 = vsel %vm942, %v5056, %v5058
    %v5060 = vsel %vm942, %v5054, %v5056
    %v5061 = vsel %vm942, %v5052, %v5054
    %v5062 = vsel %vm942, %v5058, %v5052
    %v5063 = vlaneseq
    %v5064 = vshrl.u32 %v5063, 7
    %v5065 = vsub.s32 1, %v5064
    %v5066 = vrot.slane %v4985, %v5065
    %v5067 = vlaneseq
    %v5068 = vshrl.u32 %v5067, 7
    %v5069 = vsub.s32 5, %v5068
    %v5070 = vrot.slane %v4985, %v5069
    %v5071 = vlaneseq
    %v5072 = vshrl.u32 %v5071, 7
    %v5073 = vsub.s32 1, %v5072
    %v5074 = vrot.slane %v4986, %v5073
    %v5075 = vlaneseq
    %v5076 = vshrl.u32 %v5075, 7
    %v5077 = vsub.s32 5, %v5076
    %v5078 = vrot.slane %v4986, %v5077
    %v5083 = vlaneseq
    %v5084 = vshrl.u32 %v5083, 7
    %v5085 = vsub.s32 1, %v5084
    %v5086 = vrot.slane %v5066, %v5085
    %v5087 = vlaneseq
    %v5088 = vshrl.u32 %v5087, 7
    %v5089 = vsub.s32 1, %v5088
    %v5090 = vrot.slane %v5070, %v5089
    %v5091 = vlaneseq
    %v5092 = vshrl.u32 %v5091, 7
    %v5093 = vsub.s32 1, %v5092
    %v5094 = vrot.slane %v5074, %v5093
    %v5095 = vlaneseq
    %v5096 = vshrl.u32 %v5095, 7
    %v5097 = vsub.s32 1, %v5096
    %v5098 = vrot.slane %v5078, %v5097
    %v5099 = vadd.f32 %v5061, %v5086
    %v5100 = vadd.f32 %v5060, %v5090
    %v5101 = vadd.f32 %v5059, %v5094
    %v5102 = vadd.f32 %v5062, %v5098
    %v5107 = vcombine.low %v5099, %v5100
    %v5108 = vcombine.low %v5101, %v5102
    %v5111 = vmax.f32 %v5049, %v5107
    %v5112 = vmax.f32 %v5050, %v5108
    %v5115 = vcombine.high %v5111, %v5111
    %v5116 = vcombine.high %v5112, %v5112
    %5119 = vrot.lane.b32.xlu0 %v5111, 16
    %v5120 = vpop.permute.xlu0 %5119
    %5121 = vrot.lane.b32.xlu0 %v5115, 16
    %v5122 = vpop.permute.xlu0 %5121
    %5123 = vrot.lane.b32.xlu0 %v5112, 16
    %v5124 = vpop.permute.xlu0 %5123
    %5125 = vrot.lane.b32.xlu0 %v5116, 16
    %v5126 = vpop.permute.xlu0 %5125
    %v5127 = vsel %vm272, %v5124, %v5126
    %v5128 = vsel %vm272, %v5122, %v5124
    %v5129 = vsel %vm272, %v5120, %v5122
    %v5130 = vsel %vm272, %v5126, %v5120
    %v5131 = vlaneseq
    %v5132 = vshrl.u32 %v5131, 7
    %v5133 = vsub.s32 2, %v5132
    %v5134 = vrot.slane %v4985, %v5133
    %v5135 = vlaneseq
    %v5136 = vshrl.u32 %v5135, 7
    %v5137 = vsub.s32 6, %v5136
    %v5138 = vrot.slane %v4985, %v5137
    %v5139 = vlaneseq
    %v5140 = vshrl.u32 %v5139, 7
    %v5141 = vsub.s32 2, %v5140
    %v5142 = vrot.slane %v4986, %v5141
    %v5143 = vlaneseq
    %v5144 = vshrl.u32 %v5143, 7
    %v5145 = vsub.s32 6, %v5144
    %v5146 = vrot.slane %v4986, %v5145
    %v5151 = vlaneseq
    %v5152 = vshrl.u32 %v5151, 7
    %v5153 = vsub.s32 2, %v5152
    %v5154 = vrot.slane %v5134, %v5153
    %v5155 = vlaneseq
    %v5156 = vshrl.u32 %v5155, 7
    %v5157 = vsub.s32 2, %v5156
    %v5158 = vrot.slane %v5138, %v5157
    %v5159 = vlaneseq
    %v5160 = vshrl.u32 %v5159, 7
    %v5161 = vsub.s32 2, %v5160
    %v5162 = vrot.slane %v5142, %v5161
    %v5163 = vlaneseq
    %v5164 = vshrl.u32 %v5163, 7
    %v5165 = vsub.s32 2, %v5164
    %v5166 = vrot.slane %v5146, %v5165
    %v5167 = vadd.f32 %v5130, %v5154
    %v5168 = vadd.f32 %v5129, %v5158
    %v5169 = vadd.f32 %v5128, %v5162
    %v5170 = vadd.f32 %v5127, %v5166
    %v5175 = vcombine.low %v5167, %v5168
    %v5176 = vcombine.low %v5169, %v5170
    %v5179 = vmax.f32 %v5111, %v5175
    %v5180 = vmax.f32 %v5112, %v5176
    %5181 = vrot.lane.b32.xlu0 %v5111, 112
    %v5182 = vpop.permute.xlu0 %5181
    %5183 = vrot.lane.b32.xlu0 %v5115, 112
    %v5184 = vpop.permute.xlu0 %5183
    %5185 = vrot.lane.b32.xlu0 %v5112, 112
    %v5186 = vpop.permute.xlu0 %5185
    %5187 = vrot.lane.b32.xlu0 %v5116, 112
    %v5188 = vpop.permute.xlu0 %5187
    %v5189 = vsel %vm1236, %v5186, %v5188
    %v5190 = vsel %vm1236, %v5184, %v5186
    %v5191 = vsel %vm1236, %v5182, %v5184
    %v5192 = vsel %vm1236, %v5188, %v5182
    %v5193 = vlaneseq
    %v5194 = vshrl.u32 %v5193, 7
    %v5195 = vsub.s32 3, %v5194
    %v5196 = vrot.slane %v4985, %v5195
    %v5197 = vlaneseq
    %v5198 = vshrl.u32 %v5197, 7
    %v5199 = vsub.s32 7, %v5198
    %v5200 = vrot.slane %v4985, %v5199
    %v5201 = vlaneseq
    %v5202 = vshrl.u32 %v5201, 7
    %v5203 = vsub.s32 3, %v5202
    %v5204 = vrot.slane %v4986, %v5203
    %v5205 = vlaneseq
    %v5206 = vshrl.u32 %v5205, 7
    %v5207 = vsub.s32 7, %v5206
    %v5208 = vrot.slane %v4986, %v5207
    %v5213 = vlaneseq
    %v5214 = vshrl.u32 %v5213, 7
    %v5215 = vsub.s32 3, %v5214
    %v5216 = vrot.slane %v5196, %v5215
    %v5217 = vlaneseq
    %v5218 = vshrl.u32 %v5217, 7
    %v5219 = vsub.s32 3, %v5218
    %v5220 = vrot.slane %v5200, %v5219
    %v5221 = vlaneseq
    %v5222 = vshrl.u32 %v5221, 7
    %v5223 = vsub.s32 3, %v5222
    %v5224 = vrot.slane %v5204, %v5223
    %v5225 = vlaneseq
    %v5226 = vshrl.u32 %v5225, 7
    %v5227 = vsub.s32 3, %v5226
    %v5228 = vrot.slane %v5208, %v5227
    %v5229 = vadd.f32 %v5191, %v5216
    %v5230 = vadd.f32 %v5190, %v5220
    %v5231 = vadd.f32 %v5189, %v5224
    %v5232 = vadd.f32 %v5192, %v5228
    %v5237 = vcombine.low %v5229, %v5230
    %v5238 = vcombine.low %v5231, %v5232
    %v5241 = vmax.f32 %v5179, %v5237
    %v5242 = vmax.f32 %v5180, %v5238
    %v5243 = vld [vmem:[%s9] sm:$0xf]
    %v5246 = vcombine.high %v5241, %v5241
    %v5247 = vcombine.high %v5242, %v5242
    %v5250 = vpack.c.bf16 %v5241, %v5241
    %v5251 = vpack.c.bf16 %v5246, %v5246
    %v5252 = vpack.c.bf16 %v5242, %v5242
    %v5253 = vpack.c.bf16 %v5247, %v5247
    %v5254 = vld [vmem:[%s10] sm:$0xff]
    %5256 = vset.pattern.permute.xlu0 0
    %5257 = vperm.xlu0 %5256, %v5254
    %v5258 = vpop.permute.xlu0 %5257
    %v5261 = vsel %vm81, %v5243, 0
    %v5264 = vsel %vm88, %v5250, 0
    %v5267 = vsel %vm88, %v5251, 0
    %v5270 = vsel %vm88, %v5252, 0
    %v5273 = vsel %vm88, %v5253, 0
    %5275 = vmatprep.subr.bf16.mxu0 %v5267
    %5276 = vmatpush1.bf16.msra.mxu0 %v5264
    %5277 = vmatprep.subr.bf16.mxu0 0
    %5278 = vmatpush1.bf16.msra.mxu0 0
    %5279 = vmatprep.subr.bf16.mxu0 0
    %5280 = vmatpush1.bf16.msra.mxu0 0
    %5281 = vmatprep.subr.bf16.mxu0 0
    %5282 = vmatpush1.bf16.msra.mxu0 0
    %5283 = vmatprep.subr.bf16.mxu0 0
    %5284 = vmatpush1.bf16.msra.mxu0 0
    %5285 = vmatprep.subr.bf16.mxu0 0
    %5286 = vmatpush1.bf16.msra.mxu0 0
    %5287 = vmatprep.subr.bf16.mxu0 0
    %5288 = vmatpush1.bf16.msra.mxu0 0
    %5289 = vmatprep.subr.bf16.mxu0 0
    %5290 = vmatpush1.bf16.msra.mxu0 0
    %5291 = vmatprep.subr.bf16.mxu0 0
    %5292 = vmatpush1.bf16.msra.mxu0 0
    %5293 = vmatprep.subr.bf16.mxu0 0
    %5294 = vmatpush1.bf16.msra.mxu0 0
    %5295 = vmatprep.subr.bf16.mxu0 0
    %5296 = vmatpush1.bf16.msra.mxu0 0
    %5297 = vmatprep.subr.bf16.mxu0 0
    %5298 = vmatpush1.bf16.msra.mxu0 0
    %5299 = vmatprep.subr.bf16.mxu0 0
    %5300 = vmatpush1.bf16.msra.mxu0 0
    %5301 = vmatprep.subr.bf16.mxu0 0
    %5302 = vmatpush1.bf16.msra.mxu0 0
    %5303 = vmatprep.subr.bf16.mxu0 0
    %5304 = vmatpush1.bf16.msra.mxu0 0
    %5305 = vmatprep.subr.bf16.mxu0 0
    %5306 = vmatpush1.bf16.msra.mxu0 0
    %5307 = vmatprep.mubr.bf16.mxu0 0
    %5308 = vmatmul.mubr.bf16.gmra.mrb[0].mxu0 %v5261
    %v5309 = vpop.f32.mrb[0].mxu0
    %v5310 = vadd.f32 %v5258, %v5309
    %v5311 = vpop.f32.mrb[0].mxu0
    %v5312 = vadd.f32 %v5258, %v5311
    %v5313 = vpop.f32.mrb[0].mxu0
    %v5314 = vpop.f32.mrb[0].mxu0
    %5315 = vdwg.mxu0
    %5316 = vmatprep.subr.bf16.mxu0 %v5273
    %5317 = vmatpush1.bf16.msra.mxu0 %v5270
    %5318 = vmatprep.subr.bf16.mxu0 0
    %5319 = vmatpush1.bf16.msra.mxu0 0
    %5320 = vmatprep.subr.bf16.mxu0 0
    %5321 = vmatpush1.bf16.msra.mxu0 0
    %5322 = vmatprep.subr.bf16.mxu0 0
    %5323 = vmatpush1.bf16.msra.mxu0 0
    %5324 = vmatprep.subr.bf16.mxu0 0
    %5325 = vmatpush1.bf16.msra.mxu0 0
    %5326 = vmatprep.subr.bf16.mxu0 0
    %5327 = vmatpush1.bf16.msra.mxu0 0
    %5328 = vmatprep.subr.bf16.mxu0 0
    %5329 = vmatpush1.bf16.msra.mxu0 0
    %5330 = vmatprep.subr.bf16.mxu0 0
    %5331 = vmatpush1.bf16.msra.mxu0 0
    %5332 = vmatprep.subr.bf16.mxu0 0
    %5333 = vmatpush1.bf16.msra.mxu0 0
    %5334 = vmatprep.subr.bf16.mxu0 0
    %5335 = vmatpush1.bf16.msra.mxu0 0
    %5336 = vmatprep.subr.bf16.mxu0 0
    %5337 = vmatpush1.bf16.msra.mxu0 0
    %5338 = vmatprep.subr.bf16.mxu0 0
    %5339 = vmatpush1.bf16.msra.mxu0 0
    %5340 = vmatprep.subr.bf16.mxu0 0
    %5341 = vmatpush1.bf16.msra.mxu0 0
    %5342 = vmatprep.subr.bf16.mxu0 0
    %5343 = vmatpush1.bf16.msra.mxu0 0
    %5344 = vmatprep.subr.bf16.mxu0 0
    %5345 = vmatpush1.bf16.msra.mxu0 0
    %5346 = vmatprep.subr.bf16.mxu0 0
    %5347 = vmatpush1.bf16.msra.mxu0 0
    %5348 = vmatprep.mubr.bf16.mxu0 0
    %5349 = vmatmul.mubr.bf16.gmra.mrb[0].mxu0 %v5261
    %v5350 = vpop.f32.mrb[0].mxu0
    %v5351 = vadd.f32 %v5258, %v5350
    %v5352 = vpop.f32.mrb[0].mxu0
    %v5353 = vadd.f32 %v5258, %v5352
    %v5354 = vpop.f32.mrb[0].mxu0
    %v5355 = vpop.f32.mrb[0].mxu0
    %5356 = vdwg.mxu0
    %v5357 = vmax.f32 %v5310, 0.0
    %v5358 = vmax.f32 %v5312, 0.0
    %v5359 = vmax.f32 %v5351, 0.0
    %v5360 = vmax.f32 %v5353, 0.0
    %5361 = vst [vmem:[#allocation2] sm:$0xff] %v203
    %5362 = vst [vmem:[#allocation2 + $0x8] sm:$0xff] %v204
    %5363 = vst [vmem:[#allocation2 + $0x10] sm:$0xff] %v205
    %5364 = vst [vmem:[#allocation2 + $0x18] sm:$0xff] %v206
    %5365 = vst [vmem:[#allocation2 + $0x20] sm:$0xff] %v1530
    %5366 = vst [vmem:[#allocation2 + $0x28] sm:$0xff] %v1531
    %5367 = vst [vmem:[#allocation2 + $0x30] sm:$0xff] %v1532
    %5368 = vst [vmem:[#allocation2 + $0x38] sm:$0xff] %v1533
    %5369 = vst [vmem:[#allocation2 + $0x40] sm:$0xff] %v4981
    %5370 = vst [vmem:[#allocation2 + $0x48] sm:$0xff] %v4982
    %5371 = vst [vmem:[#allocation2 + $0x50] sm:$0xff] %v4983
    %5372 = vst [vmem:[#allocation2 + $0x58] sm:$0xff] %v4984
    %5373 = vst [vmem:[#allocation2 + $0x60] sm:$0xff] %v5357
    %5374 = vst [vmem:[#allocation2 + $0x68] sm:$0xff] %v5358
    %5375 = vst [vmem:[#allocation2 + $0x70] sm:$0xff] %v5359
    %5376 = vst [vmem:[#allocation2 + $0x78] sm:$0xff] %v5360
    // Predicated region
    $region46: #{tpu_custom_call.1} parent=1 // pred_check
      _
    $region47: #{tpu_custom_call.1} parent=1 // pred_check_branch
      %5378 = sbr.rel (0) target = $region49
    $region48: #{tpu_custom_call.1} parent=1 // pred_region
      %s5380 = ssub.s32 2048, 2048
      %5381 = vsyncadd [#allocation3], %s5380
      %s5382 = sshll.u32 [#allocation2], 4
      %s5383 = int_to_ptr.vmem [resolvable:$true] %s5382
      %5388 = dma.vmem_to_hbm [thread:$0]  %s5383, 2048, %s11, [#allocation3], 512, 512, 32
    $region49: #{tpu_custom_call.1} parent=1 // pred_fallthru
      _
    // Predicated region
    $region50: #{tpu_custom_call.1} parent=1 // pred_check
      _
    $region51: #{tpu_custom_call.1} parent=1 // pred_check_branch
      %5390 = sbr.rel (0) target = $region53
    $region52: #{tpu_custom_call.1} parent=1 // pred_region
      %5391 = dma.done [#allocation3], 2048
    $region53: #{tpu_custom_call.1} parent=1 // pred_fallthru
      _
    %5392 = vsyncpa [#allocation3], 1

</llo_original>
